<compile_context>
chip_gen: v7x
topology: tpu7x:2x2x1
jax: 0.10.0
libtpu: 0.0.40
codegen_flags: <defaults>
</compile_context>

<pallas_src>
import functools

import jax
import jax.numpy as jnp
from jax import lax
from jax.experimental import pallas as pl
from jax.experimental.pallas import tpu as pltpu

_LANE = 128                     # lane width / MXU granularity
_TM_PAR_MAX = 1024              # M-tile rows for the "parallel" (no-BN) kernels
_TM_BN_MAX = 512                # M-tile rows for the fused BN kernels (sequential)
_NEG_SLOPE = 0.2                # nn.LeakyReLU(0.2) in the reference module
_BN_EPS = 1e-5
_VMEM_LIMIT = 32 * 1024 * 1024  # explicit, portable across v5e/v6e/v7x


# ------------------------------ Pallas kernels ------------------------------ #
def _conv_bias_act_kernel(p_ref, w_ref, b_ref, o_ref, *, use_lrelu):
    """One M-tile of: patches @ W + bias (+ LeakyReLU). bf16 operands, f32 math."""
    y = jnp.dot(p_ref[...], w_ref[...], preferred_element_type=jnp.float32)
    y = y + b_ref[...]                                   # (1, Cp) broadcast, f32
    if use_lrelu:
        y = jnp.where(y >= 0, y, _NEG_SLOPE * y)
    o_ref[...] = y.astype(o_ref.dtype)


def _conv_bn_lrelu_kernel(p_ref, w_ref, g_ref, b_ref, o_ref,
                          y_scr, sum_scr, sq_scr, *, inv_m):
    """Fused Conv2d(bias=False) + BatchNorm2d(batch stats) + LeakyReLU.

    The M axis is an "arbitrary" grid axis: per-tile matmul results are written
    into a resident f32 VMEM scratch, per-channel sum / sum-of-squares are
    accumulated in VMEM scratch, and the last tile applies scale/shift +
    LeakyReLU to the whole resident activation and writes the (resident) output
    block once.  Zero-padded M rows contribute exactly 0 (bias=False).
    """
    i = pl.program_id(0)
    tm = p_ref.shape[0]

    @pl.when(i == 0)
    def _():
        sum_scr[...] = jnp.zeros_like(sum_scr)
        sq_scr[...] = jnp.zeros_like(sq_scr)

    y = jnp.dot(p_ref[...], w_ref[...], preferred_element_type=jnp.float32)
    row = pl.multiple_of(i * tm, 8)
    y_scr[pl.ds(row, tm), :] = y
    sum_scr[...] += jnp.sum(y, axis=0, keepdims=True)
    sq_scr[...] += jnp.sum(y * y, axis=0, keepdims=True)

    @pl.when(i == pl.num_programs(0) - 1)
    def _():
        mean = sum_scr[...] * inv_m                       # (1, Cp)
        var = jnp.maximum(sq_scr[...] * inv_m - mean * mean, 0.0)
        scale = g_ref[...] * lax.rsqrt(var + _BN_EPS)
        shift = b_ref[...] - mean * scale
        yn = y_scr[...] * scale + shift
        o_ref[...] = jnp.where(yn >= 0, yn, _NEG_SLOPE * yn).astype(o_ref.dtype)


# ------------------------------- JAX glue ----------------------------------- #
def _round_up(x, m):
    return (x + m - 1) // m * m


def _im2col_nhwc(x, k, stride, pad):
    """x: NHWC -> patches (N*Ho*Wo, k*k*C); feature order (kh, kw, c)."""
    N, H, W, C = x.shape
    xp = jnp.pad(x, ((0, 0), (pad, pad), (pad, pad), (0, 0)))
    Ho = (H + 2 * pad - k) // stride + 1
    Wo = (W + 2 * pad - k) // stride + 1
    cols = []
    for i in range(k):
        for j in range(k):
            cols.append(xp[:, i:i + stride * Ho:stride, j:j + stride * Wo:stride, :])
    cols = jnp.stack(cols, axis=3)                 # (N, Ho, Wo, k*k, C)
    patches = cols.reshape(N * Ho * Wo, k * k * C)
    return patches, Ho, Wo


def conv_layer(x_nhwc, weight, bias, gamma, beta, *,
               stride, pad, use_bn, use_lrelu, out_dtype=jnp.bfloat16):
    """One Conv2d (+BatchNorm2d) (+LeakyReLU) layer. x is NHWC bf16, weight (Cout,Cin,k,k)."""
    Cout, Cin, k, _ = weight.shape
    N = x_nhwc.shape[0]
    patches, Ho, Wo = _im2col_nhwc(x_nhwc, k, stride, pad)    # bf16 (M, K)
    M, K = patches.shape
    Cp = _round_up(Cout, _LANE)

    # Weight -> (K, Cp) bf16, (kh, kw, cin) feature order matching im2col; K unpadded.
    w_mat = weight.transpose(2, 3, 1, 0).reshape(K, Cout)
    w_pad = jnp.pad(w_mat, ((0, 0), (0, Cp - Cout))).astype(jnp.bfloat16)

    if use_bn:
        TM = min(_TM_BN_MAX, _round_up(M, 8))
    else:
        # Aim for >= 2 tiles so the "parallel" axis can use both v7x TensorCores.
        TM = min(_TM_PAR_MAX, max(8, _round_up(-(-M // 2), 8)))
    Mp = _round_up(M, TM)
    ntiles = Mp // TM
    if Mp != M:
        # Zero rows: harmless for biasless BN stats, sliced off afterwards anyway.
        patches = jnp.pad(patches, ((0, Mp - M), (0, 0)))

    if use_bn:
        g_row = jnp.pad(gamma.reshape(1, Cout).astype(jnp.float32),
                        ((0, 0), (0, Cp - Cout)))
        b_row = jnp.pad(beta.reshape(1, Cout).astype(jnp.float32),
                        ((0, 0), (0, Cp - Cout)))
        y = pl.pallas_call(
            functools.partial(_conv_bn_lrelu_kernel, inv_m=1.0 / float(M)),
            out_shape=jax.ShapeDtypeStruct((Mp, Cp), out_dtype),
            grid=(ntiles,),
            in_specs=[
                pl.BlockSpec((TM, K), lambda i: (i, 0)),
                pl.BlockSpec((K, Cp), lambda i: (0, 0)),
                pl.BlockSpec((1, Cp), lambda i: (0, 0)),
                pl.BlockSpec((1, Cp), lambda i: (0, 0)),
            ],
            # Resident output block: written back to HBM once, after the last tile.
            out_specs=pl.BlockSpec((Mp, Cp), lambda i: (0, 0)),
            scratch_shapes=[
                pltpu.VMEM((Mp, Cp), jnp.float32),   # full f32 activation (resident)
                pltpu.VMEM((1, Cp), jnp.float32),    # per-channel sum
                pltpu.VMEM((1, Cp), jnp.float32),    # per-channel sum of squares
            ],
            compiler_params=pltpu.CompilerParams(
                dimension_semantics=("arbitrary",),
                vmem_limit_bytes=_VMEM_LIMIT),
        )(patches, w_pad, g_row, b_row)
    else:
        b_row = jnp.pad(bias.reshape(1, Cout).astype(jnp.float32),
                        ((0, 0), (0, Cp - Cout)))
        y = pl.pallas_call(
            functools.partial(_conv_bias_act_kernel, use_lrelu=use_lrelu),
            out_shape=jax.ShapeDtypeStruct((Mp, Cp), out_dtype),
            grid=(ntiles,),
            in_specs=[
                pl.BlockSpec((TM, K), lambda i: (i, 0)),
                pl.BlockSpec((K, Cp), lambda i: (0, 0)),
                pl.BlockSpec((1, Cp), lambda i: (0, 0)),
            ],
            out_specs=pl.BlockSpec((TM, Cp), lambda i: (i, 0)),
            compiler_params=pltpu.CompilerParams(
                dimension_semantics=("parallel",),
                vmem_limit_bytes=_VMEM_LIMIT),
        )(patches, w_pad, b_row)

    # Slice off lane/sublane padding; stay NHWC for the next layer.
    return y[:M, :Cout].reshape(N, Ho, Wo, Cout)


# ------------------------- ConvDiscriminator setup --------------------------- #
def init_conv_discriminator(key, input_channels=3, dim=16, n_downsamplings=3):
    """Deterministic parameter init mirroring the PyTorch module's __init__ structure."""
    specs = []
    d = dim
    # first conv: bias=True, no norm, LeakyReLU(0.2)
    specs.append(dict(cin=input_channels, cout=d, stride=2, pad=1,
                      bias=True, bn=False, lrelu=True))
    for i in range(n_downsamplings - 1):
        d_last = d
        d = min(dim * 2 ** (i + 1), dim * 8)
        # conv(bias=False) + BatchNorm2d + LeakyReLU(0.2)
        specs.append(dict(cin=d_last, cout=d, stride=2, pad=1,
                          bias=False, bn=True, lrelu=True))
    # final conv: k=4, stride=1, pad=0, bias=True, no norm, no activation
    specs.append(dict(cin=d, cout=1, stride=1, pad=0,
                      bias=True, bn=False, lrelu=False))

    params = []
    k = 4
    for s in specs:
        key, wk, bk = jax.random.split(key, 3)
        fan_in = s['cin'] * k * k
        bound = 1.0 / (fan_in ** 0.5)
        w = jax.random.uniform(wk, (s['cout'], s['cin'], k, k), jnp.float32, -bound, bound)
        if s['bias']:
            b = jax.random.uniform(bk, (s['cout'],), jnp.float32, -bound, bound)
        else:
            b = jnp.zeros((s['cout'],), jnp.float32)
        gamma = jnp.ones((s['cout'],), jnp.float32)    # BN affine weight init
        beta = jnp.zeros((s['cout'],), jnp.float32)    # BN affine bias init
        params.append((w, b, gamma, beta, s))
    return params


def conv_discriminator_forward(x_nchw, params):
    # NCHW -> NHWC + bf16 once at the boundary; activations stay bf16 NHWC between layers.
    y = jnp.transpose(x_nchw, (0, 2, 3, 1)).astype(jnp.bfloat16)
    n_layers = len(params)
    for li, (w, b, g, be, s) in enumerate(params):
        last = li == n_layers - 1
        y = conv_layer(y, w, b, g, be, stride=s['stride'], pad=s['pad'],
                       use_bn=s['bn'], use_lrelu=s['lrelu'],
                       out_dtype=jnp.float32 if last else jnp.bfloat16)
    return jnp.transpose(y, (0, 3, 1, 2))          # back to NCHW at the output


# ----------------------------------- main ------------------------------------ #
if __name__ == "__main__":
    # dim=16, n_downsamplings=3, input 3x64x64:
    # 16x32x32 -> 32x16x16 (BN) -> 64x8x8 (BN) -> final 4x4 valid conv -> (N,1,5,5)
    key = jax.random.PRNGKey(0)
    x = jax.random.normal(key, (2, 3, 64, 64), dtype=jnp.float32)   # NCHW (PyTorch layout)

    params = init_conv_discriminator(jax.random.PRNGKey(42),
                                     input_channels=3, dim=16, n_downsamplings=3)

    fwd = jax.jit(lambda inp: conv_discriminator_forward(inp, params))
    y = jax.block_until_ready(fwd(x))

    assert y.shape == (2, 1, 5, 5), y.shape
    assert y.dtype == jnp.float32
    assert bool(jnp.all(jnp.isfinite(y)))
    print("KERNEL_OK")
</pallas_src>

<mosaic_0001>
module attributes {stable_mosaic.version = 11 : i64} {
  func.func @_conv_bias_act_kernel(%arg0: i32, %arg1: memref<1024x48xbf16, #tpu.memory_space<vmem>>, %arg2: memref<48x128xbf16, #tpu.memory_space<vmem>>, %arg3: memref<1x128xf32, #tpu.memory_space<vmem>>, %arg4: memref<1024x128xbf16, #tpu.memory_space<vmem>>) attributes {dimension_semantics = [#tpu.dimension_semantics<parallel>], iteration_bounds = array<i64: 2>, scalar_prefetch = 0 : i64, scratch_operands = 0 : i64, tpu.core_type = #tpu.core_type<tc>, window_params = [{transform_indices = @transform_0, window_bounds = array<i64: 1024, 48>}, {pipeline_mode = #tpu.pipeline_mode<synchronous>, transform_indices = @transform_1, window_bounds = array<i64: 48, 128>}, {pipeline_mode = #tpu.pipeline_mode<synchronous>, transform_indices = @transform_2, window_bounds = array<i64: 1, 128>}, {transform_indices = @transform_3, window_bounds = array<i64: 1024, 128>}]} {
    %c0 = arith.constant 0 : index
    %c0_0 = arith.constant 0 : index
    %0 = vector.load %arg1[%c0, %c0_0] : memref<1024x48xbf16, #tpu.memory_space<vmem>>, vector<1024x48xbf16>
    %c0_1 = arith.constant 0 : index
    %c0_2 = arith.constant 0 : index
    %1 = vector.load %arg2[%c0_1, %c0_2] : memref<48x128xbf16, #tpu.memory_space<vmem>>, vector<48x128xbf16>
    %cst = arith.constant dense<0.000000e+00> : vector<1024x128xf32>
    %2 = tpu.matmul %0, %1, %cst {dimension_numbers = #tpu.dot_dimension_numbers<[1], [0], [0], [1], [0, 0, 1, 1], [], []>} : vector<1024x48xbf16>, vector<48x128xbf16>, vector<1024x128xf32> -> vector<1024x128xf32>
    %c0_3 = arith.constant 0 : index
    %c0_4 = arith.constant 0 : index
    %3 = vector.load %arg3[%c0_3, %c0_4] : memref<1x128xf32, #tpu.memory_space<vmem>>, vector<1x128xf32>
    %4 = vector.broadcast %3 : vector<1x128xf32> to vector<1024x128xf32>
    %5 = arith.addf %2, %4 : vector<1024x128xf32>
    %cst_5 = arith.constant 0.000000e+00 : f32
    %6 = vector.broadcast %cst_5 : f32 to vector<1024x128xf32>
    %7 = arith.cmpf oge, %5, %6 : vector<1024x128xf32>
    %cst_6 = arith.constant 2.000000e-01 : f32
    %8 = vector.broadcast %cst_6 : f32 to vector<1024x128xf32>
    %9 = arith.mulf %8, %5 : vector<1024x128xf32>
    %10 = arith.select %7, %5, %9 : vector<1024x128xi1>, vector<1024x128xf32>
    %11 = arith.truncf %10 : vector<1024x128xf32> to vector<1024x128xbf16>
    %c0_7 = arith.constant 0 : index
    %c0_8 = arith.constant 0 : index
    %12 = vector.load %arg4[%c0_7, %c0_8] : memref<1024x128xbf16, #tpu.memory_space<vmem>>, vector<1024x128xbf16>
    tpu.vector_store %arg4[%c0_7, %c0_8], %11 {strides = array<i32>} : memref<1024x128xbf16, #tpu.memory_space<vmem>>, vector<1024x128xbf16>,
    return
  }
  func.func @transform_0(%arg0: i32) -> (i32, i32) {
    %c0_i32 = arith.constant 0 : i32
    %c0_i32_0 = arith.constant 0 : i32
    return %arg0, %c0_i32 : i32, i32
  }
  func.func @transform_1(%arg0: i32) -> (i32, i32) {
    %c0_i32 = arith.constant 0 : i32
    %c0_i32_0 = arith.constant 0 : i32
    %c0_i32_1 = arith.constant 0 : i32
    return %c0_i32, %c0_i32_0 : i32, i32
  }
  func.func @transform_2(%arg0: i32) -> (i32, i32) {
    %c0_i32 = arith.constant 0 : i32
    %c0_i32_0 = arith.constant 0 : i32
    %c0_i32_1 = arith.constant 0 : i32
    return %c0_i32, %c0_i32_0 : i32, i32
  }
  func.func @transform_3(%arg0: i32) -> (i32, i32) {
    %c0_i32 = arith.constant 0 : i32
    %c0_i32_0 = arith.constant 0 : i32
    return %arg0, %c0_i32 : i32, i32
  }
}

module attributes {stable_mosaic.version = 11 : i64} {
  func.func @_conv_bn_lrelu_kernel(%arg0: i32, %arg1: memref<512x256xbf16, #tpu.memory_space<vmem>>, %arg2: memref<256x128xbf16, #tpu.memory_space<vmem>>, %arg3: memref<1x128xf32, #tpu.memory_space<vmem>>, %arg4: memref<1x128xf32, #tpu.memory_space<vmem>>, %arg5: memref<512x128xbf16, #tpu.memory_space<vmem>>, %arg6: memref<512x128xf32, #tpu.memory_space<vmem>>, %arg7: memref<1x128xf32, #tpu.memory_space<vmem>>, %arg8: memref<1x128xf32, #tpu.memory_space<vmem>>) attributes {dimension_semantics = [#tpu.dimension_semantics<arbitrary>], iteration_bounds = array<i64: 1>, scalar_prefetch = 0 : i64, scratch_operands = 3 : i64, tpu.core_type = #tpu.core_type<tc>, window_params = [{transform_indices = @transform_0, window_bounds = array<i64: 512, 256>}, {pipeline_mode = #tpu.pipeline_mode<synchronous>, transform_indices = @transform_1, window_bounds = array<i64: 256, 128>}, {pipeline_mode = #tpu.pipeline_mode<synchronous>, transform_indices = @transform_2, window_bounds = array<i64: 1, 128>}, {pipeline_mode = #tpu.pipeline_mode<synchronous>, transform_indices = @transform_3, window_bounds = array<i64: 1, 128>}, {pipeline_mode = #tpu.pipeline_mode<synchronous>, transform_indices = @transform_4, window_bounds = array<i64: 512, 128>}]} {
    %c0_i32 = arith.constant 0 : i32
    %0 = arith.cmpi eq, %arg0, %c0_i32 : i32
    %1 = arith.extui %0 : i1 to i32
    %c0_i32_0 = arith.constant 0 : i32
    %2 = arith.cmpi ne, %1, %c0_i32_0 : i32
    scf.if %2 {
      %cst_17 = arith.constant 0.000000e+00 : f32
      %24 = vector.broadcast %cst_17 : f32 to vector<1x128xf32>
      %c0_18 = arith.constant 0 : index
      %c0_19 = arith.constant 0 : index
      %25 = vector.load %arg7[%c0_18, %c0_19] : memref<1x128xf32, #tpu.memory_space<vmem>>, vector<1x128xf32>
      tpu.vector_store %arg7[%c0_18, %c0_19], %24 {strides = array<i32>} : memref<1x128xf32, #tpu.memory_space<vmem>>, vector<1x128xf32>,
      %cst_20 = arith.constant 0.000000e+00 : f32
      %26 = vector.broadcast %cst_20 : f32 to vector<1x128xf32>
      %c0_21 = arith.constant 0 : index
      %c0_22 = arith.constant 0 : index
      %27 = vector.load %arg8[%c0_21, %c0_22] : memref<1x128xf32, #tpu.memory_space<vmem>>, vector<1x128xf32>
      tpu.vector_store %arg8[%c0_21, %c0_22], %26 {strides = array<i32>} : memref<1x128xf32, #tpu.memory_space<vmem>>, vector<1x128xf32>,
    } else {
    }
    %c0 = arith.constant 0 : index
    %c0_1 = arith.constant 0 : index
    %3 = vector.load %arg1[%c0, %c0_1] : memref<512x256xbf16, #tpu.memory_space<vmem>>, vector<512x256xbf16>
    %c0_2 = arith.constant 0 : index
    %c0_3 = arith.constant 0 : index
    %4 = vector.load %arg2[%c0_2, %c0_3] : memref<256x128xbf16, #tpu.memory_space<vmem>>, vector<256x128xbf16>
    %cst = arith.constant dense<0.000000e+00> : vector<512x128xf32>
    %5 = tpu.matmul %3, %4, %cst {dimension_numbers = #tpu.dot_dimension_numbers<[1], [0], [0], [1], [0, 0, 1, 1], [], []>} : vector<512x256xbf16>, vector<256x128xbf16>, vector<512x128xf32> -> vector<512x128xf32>
    %c512_i32 = arith.constant 512 : i32
    %6 = arith.muli %arg0, %c512_i32 : i32
    %7 = tpu.assume_multiple %6, 8 : i32
    %8 = arith.index_cast %7 : i32 to index
    %c0_4 = arith.constant 0 : index
    %9 = vector.load %arg6[%8, %c0_4] : memref<512x128xf32, #tpu.memory_space<vmem>>, vector<512x128xf32>
    tpu.vector_store %arg6[%8, %c0_4], %5 {strides = array<i32>} : memref<512x128xf32, #tpu.memory_space<vmem>>, vector<512x128xf32>,
    %c0_5 = arith.constant 0 : index
    %c0_6 = arith.constant 0 : index
    %10 = vector.load %arg7[%c0_5, %c0_6] : memref<1x128xf32, #tpu.memory_space<vmem>>, vector<1x128xf32>
    %cst_7 = arith.constant dense<0.000000e+00> : vector<128xf32>
    %11 = vector.multi_reduction <add>, %5, %cst_7 [0] : vector<512x128xf32> to vector<128xf32>
    %12 = vector.shape_cast %11 : vector<128xf32> to vector<1x128xf32>
    %13 = arith.addf %10, %12 : vector<1x128xf32>
    %c0_8 = arith.constant 0 : index
    %c0_9 = arith.constant 0 : index
    %14 = vector.load %arg7[%c0_8, %c0_9] : memref<1x128xf32, #tpu.memory_space<vmem>>, vector<1x128xf32>
    tpu.vector_store %arg7[%c0_8, %c0_9], %13 {strides = array<i32>} : memref<1x128xf32, #tpu.memory_space<vmem>>, vector<1x128xf32>,
    %c0_10 = arith.constant 0 : index
    %c0_11 = arith.constant 0 : index
    %15 = vector.load %arg8[%c0_10, %c0_11] : memref<1x128xf32, #tpu.memory_space<vmem>>, vector<1x128xf32>
    %16 = arith.mulf %5, %5 : vector<512x128xf32>
    %cst_12 = arith.constant dense<0.000000e+00> : vector<128xf32>
    %17 = vector.multi_reduction <add>, %16, %cst_12 [0] : vector<512x128xf32> to vector<128xf32>
    %18 = vector.shape_cast %17 : vector<128xf32> to vector<1x128xf32>
    %19 = arith.addf %15, %18 : vector<1x128xf32>
    %c0_13 = arith.constant 0 : index
    %c0_14 = arith.constant 0 : index
    %20 = vector.load %arg8[%c0_13, %c0_14] : memref<1x128xf32, #tpu.memory_space<vmem>>, vector<1x128xf32>
    tpu.vector_store %arg8[%c0_13, %c0_14], %19 {strides = array<i32>} : memref<1x128xf32, #tpu.memory_space<vmem>>, vector<1x128xf32>,
    %c0_i32_15 = arith.constant 0 : i32
    %21 = arith.cmpi eq, %arg0, %c0_i32_15 : i32
    %22 = arith.extui %21 : i1 to i32
    %c0_i32_16 = arith.constant 0 : i32
    %23 = arith.cmpi ne, %22, %c0_i32_16 : i32
    scf.if %23 {
      %c0_17 = arith.constant 0 : index
      %c0_18 = arith.constant 0 : index
      %24 = vector.load %arg7[%c0_17, %c0_18] : memref<1x128xf32, #tpu.memory_space<vmem>>, vector<1x128xf32>
      %cst_19 = arith.constant 0.001953125 : f32
      %25 = vector.broadcast %cst_19 : f32 to vector<1x128xf32>
      %26 = arith.mulf %24, %25 : vector<1x128xf32>
      %c0_20 = arith.constant 0 : index
      %c0_21 = arith.constant 0 : index
      %27 = vector.load %arg8[%c0_20, %c0_21] : memref<1x128xf32, #tpu.memory_space<vmem>>, vector<1x128xf32>
      %cst_22 = arith.constant 0.001953125 : f32
      %28 = vector.broadcast %cst_22 : f32 to vector<1x128xf32>
      %29 = arith.mulf %27, %28 : vector<1x128xf32>
      %30 = arith.mulf %26, %26 : vector<1x128xf32>
      %31 = arith.subf %29, %30 : vector<1x128xf32>
      %cst_23 = arith.constant 0.000000e+00 : f32
      %32 = vector.broadcast %cst_23 : f32 to vector<1x128xf32>
      %33 = arith.maximumf %31, %32 : vector<1x128xf32>
      %c0_24 = arith.constant 0 : index
      %c0_25 = arith.constant 0 : index
      %34 = vector.load %arg3[%c0_24, %c0_25] : memref<1x128xf32, #tpu.memory_space<vmem>>, vector<1x128xf32>
      %cst_26 = arith.constant 9.99999974E-6 : f32
      %35 = vector.broadcast %cst_26 : f32 to vector<1x128xf32>
      %36 = arith.addf %33, %35 : vector<1x128xf32>
      %37 = math.rsqrt %36 : vector<1x128xf32>
      %38 = arith.mulf %34, %37 : vector<1x128xf32>
      %c0_27 = arith.constant 0 : index
      %c0_28 = arith.constant 0 : index
      %39 = vector.load %arg4[%c0_27, %c0_28] : memref<1x128xf32, #tpu.memory_space<vmem>>, vector<1x128xf32>
      %40 = arith.mulf %26, %38 : vector<1x128xf32>
      %41 = arith.subf %39, %40 : vector<1x128xf32>
      %c0_29 = arith.constant 0 : index
      %c0_30 = arith.constant 0 : index
      %42 = vector.load %arg6[%c0_29, %c0_30] : memref<512x128xf32, #tpu.memory_space<vmem>>, vector<512x128xf32>
      %43 = vector.broadcast %38 : vector<1x128xf32> to vector<512x128xf32>
      %44 = arith.mulf %42, %43 : vector<512x128xf32>
      %45 = vector.broadcast %41 : vector<1x128xf32> to vector<512x128xf32>
      %46 = arith.addf %44, %45 : vector<512x128xf32>
      %cst_31 = arith.constant 0.000000e+00 : f32
      %47 = vector.broadcast %cst_31 : f32 to vector<512x128xf32>
      %48 = arith.cmpf oge, %46, %47 : vector<512x128xf32>
      %cst_32 = arith.constant 2.000000e-01 : f32
      %49 = vector.broadcast %cst_32 : f32 to vector<512x128xf32>
      %50 = arith.mulf %49, %46 : vector<512x128xf32>
      %51 = arith.select %48, %46, %50 : vector<512x128xi1>, vector<512x128xf32>
      %52 = arith.truncf %51 : vector<512x128xf32> to vector<512x128xbf16>
      %c0_33 = arith.constant 0 : index
      %c0_34 = arith.constant 0 : index
      %53 = vector.load %arg5[%c0_33, %c0_34] : memref<512x128xbf16, #tpu.memory_space<vmem>>, vector<512x128xbf16>
      tpu.vector_store %arg5[%c0_33, %c0_34], %52 {strides = array<i32>} : memref<512x128xbf16, #tpu.memory_space<vmem>>, vector<512x128xbf16>,
    } else {
    }
    return
  }
  func.func @transform_0(%arg0: i32) -> (i32, i32) {
    %c0_i32 = arith.constant 0 : i32
    %c0_i32_0 = arith.constant 0 : i32
    return %arg0, %c0_i32 : i32, i32
  }
  func.func @transform_1(%arg0: i32) -> (i32, i32) {
    %c0_i32 = arith.constant 0 : i32
    %c0_i32_0 = arith.constant 0 : i32
    %c0_i32_1 = arith.constant 0 : i32
    return %c0_i32, %c0_i32_0 : i32, i32
  }
  func.func @transform_2(%arg0: i32) -> (i32, i32) {
    %c0_i32 = arith.constant 0 : i32
    %c0_i32_0 = arith.constant 0 : i32
    %c0_i32_1 = arith.constant 0 : i32
    return %c0_i32, %c0_i32_0 : i32, i32
  }
  func.func @transform_3(%arg0: i32) -> (i32, i32) {
    %c0_i32 = arith.constant 0 : i32
    %c0_i32_0 = arith.constant 0 : i32
    %c0_i32_1 = arith.constant 0 : i32
    return %c0_i32, %c0_i32_0 : i32, i32
  }
  func.func @transform_4(%arg0: i32) -> (i32, i32) {
    %c0_i32 = arith.constant 0 : i32
    %c0_i32_0 = arith.constant 0 : i32
    %c0_i32_1 = arith.constant 0 : i32
    return %c0_i32, %c0_i32_0 : i32, i32
  }
}

module attributes {stable_mosaic.version = 11 : i64} {
  func.func @_conv_bn_lrelu_kernel(%arg0: i32, %arg1: memref<128x512xbf16, #tpu.memory_space<vmem>>, %arg2: memref<512x128xbf16, #tpu.memory_space<vmem>>, %arg3: memref<1x128xf32, #tpu.memory_space<vmem>>, %arg4: memref<1x128xf32, #tpu.memory_space<vmem>>, %arg5: memref<128x128xbf16, #tpu.memory_space<vmem>>, %arg6: memref<128x128xf32, #tpu.memory_space<vmem>>, %arg7: memref<1x128xf32, #tpu.memory_space<vmem>>, %arg8: memref<1x128xf32, #tpu.memory_space<vmem>>) attributes {dimension_semantics = [#tpu.dimension_semantics<arbitrary>], iteration_bounds = array<i64: 1>, scalar_prefetch = 0 : i64, scratch_operands = 3 : i64, tpu.core_type = #tpu.core_type<tc>, window_params = [{transform_indices = @transform_0, window_bounds = array<i64: 128, 512>}, {pipeline_mode = #tpu.pipeline_mode<synchronous>, transform_indices = @transform_1, window_bounds = array<i64: 512, 128>}, {pipeline_mode = #tpu.pipeline_mode<synchronous>, transform_indices = @transform_2, window_bounds = array<i64: 1, 128>}, {pipeline_mode = #tpu.pipeline_mode<synchronous>, transform_indices = @transform_3, window_bounds = array<i64: 1, 128>}, {pipeline_mode = #tpu.pipeline_mode<synchronous>, transform_indices = @transform_4, window_bounds = array<i64: 128, 128>}]} {
    %c0_i32 = arith.constant 0 : i32
    %0 = arith.cmpi eq, %arg0, %c0_i32 : i32
    %1 = arith.extui %0 : i1 to i32
    %c0_i32_0 = arith.constant 0 : i32
    %2 = arith.cmpi ne, %1, %c0_i32_0 : i32
    scf.if %2 {
      %cst_17 = arith.constant 0.000000e+00 : f32
      %24 = vector.broadcast %cst_17 : f32 to vector<1x128xf32>
      %c0_18 = arith.constant 0 : index
      %c0_19 = arith.constant 0 : index
      %25 = vector.load %arg7[%c0_18, %c0_19] : memref<1x128xf32, #tpu.memory_space<vmem>>, vector<1x128xf32>
      tpu.vector_store %arg7[%c0_18, %c0_19], %24 {strides = array<i32>} : memref<1x128xf32, #tpu.memory_space<vmem>>, vector<1x128xf32>,
      %cst_20 = arith.constant 0.000000e+00 : f32
      %26 = vector.broadcast %cst_20 : f32 to vector<1x128xf32>
      %c0_21 = arith.constant 0 : index
      %c0_22 = arith.constant 0 : index
      %27 = vector.load %arg8[%c0_21, %c0_22] : memref<1x128xf32, #tpu.memory_space<vmem>>, vector<1x128xf32>
      tpu.vector_store %arg8[%c0_21, %c0_22], %26 {strides = array<i32>} : memref<1x128xf32, #tpu.memory_space<vmem>>, vector<1x128xf32>,
    } else {
    }
    %c0 = arith.constant 0 : index
    %c0_1 = arith.constant 0 : index
    %3 = vector.load %arg1[%c0, %c0_1] : memref<128x512xbf16, #tpu.memory_space<vmem>>, vector<128x512xbf16>
    %c0_2 = arith.constant 0 : index
    %c0_3 = arith.constant 0 : index
    %4 = vector.load %arg2[%c0_2, %c0_3] : memref<512x128xbf16, #tpu.memory_space<vmem>>, vector<512x128xbf16>
    %cst = arith.constant dense<0.000000e+00> : vector<128x128xf32>
    %5 = tpu.matmul %3, %4, %cst {dimension_numbers = #tpu.dot_dimension_numbers<[1], [0], [0], [1], [0, 0, 1, 1], [], []>} : vector<128x512xbf16>, vector<512x128xbf16>, vector<128x128xf32> -> vector<128x128xf32>
    %c128_i32 = arith.constant 128 : i32
    %6 = arith.muli %arg0, %c128_i32 : i32
    %7 = tpu.assume_multiple %6, 8 : i32
    %8 = arith.index_cast %7 : i32 to index
    %c0_4 = arith.constant 0 : index
    %9 = vector.load %arg6[%8, %c0_4] : memref<128x128xf32, #tpu.memory_space<vmem>>, vector<128x128xf32>
    tpu.vector_store %arg6[%8, %c0_4], %5 {strides = array<i32>} : memref<128x128xf32, #tpu.memory_space<vmem>>, vector<128x128xf32>,
    %c0_5 = arith.constant 0 : index
    %c0_6 = arith.constant 0 : index
    %10 = vector.load %arg7[%c0_5, %c0_6] : memref<1x128xf32, #tpu.memory_space<vmem>>, vector<1x128xf32>
    %cst_7 = arith.constant dense<0.000000e+00> : vector<128xf32>
    %11 = vector.multi_reduction <add>, %5, %cst_7 [0] : vector<128x128xf32> to vector<128xf32>
    %12 = vector.shape_cast %11 : vector<128xf32> to vector<1x128xf32>
    %13 = arith.addf %10, %12 : vector<1x128xf32>
    %c0_8 = arith.constant 0 : index
    %c0_9 = arith.constant 0 : index
    %14 = vector.load %arg7[%c0_8, %c0_9] : memref<1x128xf32, #tpu.memory_space<vmem>>, vector<1x128xf32>
    tpu.vector_store %arg7[%c0_8, %c0_9], %13 {strides = array<i32>} : memref<1x128xf32, #tpu.memory_space<vmem>>, vector<1x128xf32>,
    %c0_10 = arith.constant 0 : index
    %c0_11 = arith.constant 0 : index
    %15 = vector.load %arg8[%c0_10, %c0_11] : memref<1x128xf32, #tpu.memory_space<vmem>>, vector<1x128xf32>
    %16 = arith.mulf %5, %5 : vector<128x128xf32>
    %cst_12 = arith.constant dense<0.000000e+00> : vector<128xf32>
    %17 = vector.multi_reduction <add>, %16, %cst_12 [0] : vector<128x128xf32> to vector<128xf32>
    %18 = vector.shape_cast %17 : vector<128xf32> to vector<1x128xf32>
    %19 = arith.addf %15, %18 : vector<1x128xf32>
    %c0_13 = arith.constant 0 : index
    %c0_14 = arith.constant 0 : index
    %20 = vector.load %arg8[%c0_13, %c0_14] : memref<1x128xf32, #tpu.memory_space<vmem>>, vector<1x128xf32>
    tpu.vector_store %arg8[%c0_13, %c0_14], %19 {strides = array<i32>} : memref<1x128xf32, #tpu.memory_space<vmem>>, vector<1x128xf32>,
    %c0_i32_15 = arith.constant 0 : i32
    %21 = arith.cmpi eq, %arg0, %c0_i32_15 : i32
    %22 = arith.extui %21 : i1 to i32
    %c0_i32_16 = arith.constant 0 : i32
    %23 = arith.cmpi ne, %22, %c0_i32_16 : i32
    scf.if %23 {
      %c0_17 = arith.constant 0 : index
      %c0_18 = arith.constant 0 : index
      %24 = vector.load %arg7[%c0_17, %c0_18] : memref<1x128xf32, #tpu.memory_space<vmem>>, vector<1x128xf32>
      %cst_19 = arith.constant 7.812500e-03 : f32
      %25 = vector.broadcast %cst_19 : f32 to vector<1x128xf32>
      %26 = arith.mulf %24, %25 : vector<1x128xf32>
      %c0_20 = arith.constant 0 : index
      %c0_21 = arith.constant 0 : index
      %27 = vector.load %arg8[%c0_20, %c0_21] : memref<1x128xf32, #tpu.memory_space<vmem>>, vector<1x128xf32>
      %cst_22 = arith.constant 7.812500e-03 : f32
      %28 = vector.broadcast %cst_22 : f32 to vector<1x128xf32>
      %29 = arith.mulf %27, %28 : vector<1x128xf32>
      %30 = arith.mulf %26, %26 : vector<1x128xf32>
      %31 = arith.subf %29, %30 : vector<1x128xf32>
      %cst_23 = arith.constant 0.000000e+00 : f32
      %32 = vector.broadcast %cst_23 : f32 to vector<1x128xf32>
      %33 = arith.maximumf %31, %32 : vector<1x128xf32>
      %c0_24 = arith.constant 0 : index
      %c0_25 = arith.constant 0 : index
      %34 = vector.load %arg3[%c0_24, %c0_25] : memref<1x128xf32, #tpu.memory_space<vmem>>, vector<1x128xf32>
      %cst_26 = arith.constant 9.99999974E-6 : f32
      %35 = vector.broadcast %cst_26 : f32 to vector<1x128xf32>
      %36 = arith.addf %33, %35 : vector<1x128xf32>
      %37 = math.rsqrt %36 : vector<1x128xf32>
      %38 = arith.mulf %34, %37 : vector<1x128xf32>
      %c0_27 = arith.constant 0 : index
      %c0_28 = arith.constant 0 : index
      %39 = vector.load %arg4[%c0_27, %c0_28] : memref<1x128xf32, #tpu.memory_space<vmem>>, vector<1x128xf32>
      %40 = arith.mulf %26, %38 : vector<1x128xf32>
      %41 = arith.subf %39, %40 : vector<1x128xf32>
      %c0_29 = arith.constant 0 : index
      %c0_30 = arith.constant 0 : index
      %42 = vector.load %arg6[%c0_29, %c0_30] : memref<128x128xf32, #tpu.memory_space<vmem>>, vector<128x128xf32>
      %43 = vector.broadcast %38 : vector<1x128xf32> to vector<128x128xf32>
      %44 = arith.mulf %42, %43 : vector<128x128xf32>
      %45 = vector.broadcast %41 : vector<1x128xf32> to vector<128x128xf32>
      %46 = arith.addf %44, %45 : vector<128x128xf32>
      %cst_31 = arith.constant 0.000000e+00 : f32
      %47 = vector.broadcast %cst_31 : f32 to vector<128x128xf32>
      %48 = arith.cmpf oge, %46, %47 : vector<128x128xf32>
      %cst_32 = arith.constant 2.000000e-01 : f32
      %49 = vector.broadcast %cst_32 : f32 to vector<128x128xf32>
      %50 = arith.mulf %49, %46 : vector<128x128xf32>
      %51 = arith.select %48, %46, %50 : vector<128x128xi1>, vector<128x128xf32>
      %52 = arith.truncf %51 : vector<128x128xf32> to vector<128x128xbf16>
      %c0_33 = arith.constant 0 : index
      %c0_34 = arith.constant 0 : index
      %53 = vector.load %arg5[%c0_33, %c0_34] : memref<128x128xbf16, #tpu.memory_space<vmem>>, vector<128x128xbf16>
      tpu.vector_store %arg5[%c0_33, %c0_34], %52 {strides = array<i32>} : memref<128x128xbf16, #tpu.memory_space<vmem>>, vector<128x128xbf16>,
    } else {
    }
    return
  }
  func.func @transform_0(%arg0: i32) -> (i32, i32) {
    %c0_i32 = arith.constant 0 : i32
    %c0_i32_0 = arith.constant 0 : i32
    return %arg0, %c0_i32 : i32, i32
  }
  func.func @transform_1(%arg0: i32) -> (i32, i32) {
    %c0_i32 = arith.constant 0 : i32
    %c0_i32_0 = arith.constant 0 : i32
    %c0_i32_1 = arith.constant 0 : i32
    return %c0_i32, %c0_i32_0 : i32, i32
  }
  func.func @transform_2(%arg0: i32) -> (i32, i32) {
    %c0_i32 = arith.constant 0 : i32
    %c0_i32_0 = arith.constant 0 : i32
    %c0_i32_1 = arith.constant 0 : i32
    return %c0_i32, %c0_i32_0 : i32, i32
  }
  func.func @transform_3(%arg0: i32) -> (i32, i32) {
    %c0_i32 = arith.constant 0 : i32
    %c0_i32_0 = arith.constant 0 : i32
    %c0_i32_1 = arith.constant 0 : i32
    return %c0_i32, %c0_i32_0 : i32, i32
  }
  func.func @transform_4(%arg0: i32) -> (i32, i32) {
    %c0_i32 = arith.constant 0 : i32
    %c0_i32_0 = arith.constant 0 : i32
    %c0_i32_1 = arith.constant 0 : i32
    return %c0_i32, %c0_i32_0 : i32, i32
  }
}

module attributes {stable_mosaic.version = 11 : i64} {
  func.func @_conv_bias_act_kernel(%arg0: i32, %arg1: memref<32x1024xbf16, #tpu.memory_space<vmem>>, %arg2: memref<1024x128xbf16, #tpu.memory_space<vmem>>, %arg3: memref<1x128xf32, #tpu.memory_space<vmem>>, %arg4: memref<32x128xf32, #tpu.memory_space<vmem>>) attributes {dimension_semantics = [#tpu.dimension_semantics<parallel>], iteration_bounds = array<i64: 2>, scalar_prefetch = 0 : i64, scratch_operands = 0 : i64, tpu.core_type = #tpu.core_type<tc>, window_params = [{transform_indices = @transform_0, window_bounds = array<i64: 32, 1024>}, {pipeline_mode = #tpu.pipeline_mode<synchronous>, transform_indices = @transform_1, window_bounds = array<i64: 1024, 128>}, {pipeline_mode = #tpu.pipeline_mode<synchronous>, transform_indices = @transform_2, window_bounds = array<i64: 1, 128>}, {transform_indices = @transform_3, window_bounds = array<i64: 32, 128>}]} {
    %c0 = arith.constant 0 : index
    %c0_0 = arith.constant 0 : index
    %0 = vector.load %arg1[%c0, %c0_0] : memref<32x1024xbf16, #tpu.memory_space<vmem>>, vector<32x1024xbf16>
    %c0_1 = arith.constant 0 : index
    %c0_2 = arith.constant 0 : index
    %1 = vector.load %arg2[%c0_1, %c0_2] : memref<1024x128xbf16, #tpu.memory_space<vmem>>, vector<1024x128xbf16>
    %cst = arith.constant dense<0.000000e+00> : vector<32x128xf32>
    %2 = tpu.matmul %0, %1, %cst {dimension_numbers = #tpu.dot_dimension_numbers<[1], [0], [0], [1], [0, 0, 1, 1], [], []>} : vector<32x1024xbf16>, vector<1024x128xbf16>, vector<32x128xf32> -> vector<32x128xf32>
    %c0_3 = arith.constant 0 : index
    %c0_4 = arith.constant 0 : index
    %3 = vector.load %arg3[%c0_3, %c0_4] : memref<1x128xf32, #tpu.memory_space<vmem>>, vector<1x128xf32>
    %4 = vector.broadcast %3 : vector<1x128xf32> to vector<32x128xf32>
    %5 = arith.addf %2, %4 : vector<32x128xf32>
    %c0_5 = arith.constant 0 : index
    %c0_6 = arith.constant 0 : index
    %6 = vector.load %arg4[%c0_5, %c0_6] : memref<32x128xf32, #tpu.memory_space<vmem>>, vector<32x128xf32>
    tpu.vector_store %arg4[%c0_5, %c0_6], %5 {strides = array<i32>} : memref<32x128xf32, #tpu.memory_space<vmem>>, vector<32x128xf32>,
    return
  }
  func.func @transform_0(%arg0: i32) -> (i32, i32) {
    %c0_i32 = arith.constant 0 : i32
    %c0_i32_0 = arith.constant 0 : i32
    return %arg0, %c0_i32 : i32, i32
  }
  func.func @transform_1(%arg0: i32) -> (i32, i32) {
    %c0_i32 = arith.constant 0 : i32
    %c0_i32_0 = arith.constant 0 : i32
    %c0_i32_1 = arith.constant 0 : i32
    return %c0_i32, %c0_i32_0 : i32, i32
  }
  func.func @transform_2(%arg0: i32) -> (i32, i32) {
    %c0_i32 = arith.constant 0 : i32
    %c0_i32_0 = arith.constant 0 : i32
    %c0_i32_1 = arith.constant 0 : i32
    return %c0_i32, %c0_i32_0 : i32, i32
  }
  func.func @transform_3(%arg0: i32) -> (i32, i32) {
    %c0_i32 = arith.constant 0 : i32
    %c0_i32_0 = arith.constant 0 : i32
    return %arg0, %c0_i32 : i32, i32
  }
}

</mosaic_0001>

<llo_original>
// kernel: _lambda_.4
$region0: #{_lambda_.4}
  #allocation0 [shape = 'u32[]', space=smem, size = 0x4, offset = 0x4, fixed_abs, tag = 'smem constant byte address 0x4 - core index']
  #allocation1 [shape = 'u32[144,128]{1,0:T(1,128)}', space=vmem, size = 0x12000, scoped, tag = 'internal scratch']
  %s0 = inlined_call_operand.vmem [shape: bf16[2048,48], index: 0, kind: input, shape index: {}]
  %s1 = inlined_call_operand.vmem [shape: bf16[48,128], index: 1, kind: input, shape index: {}]
  %s2 = inlined_call_operand.vmem [shape: f32[1,128], index: 2, kind: input, shape index: {}]
  %s3 = inlined_call_operand.vmem [shape: bf16[2048,128], index: 3, kind: output, shape index: {}]
  %s4 = sld [smem:[#allocation0]]
  $region45: #{_lambda_.4} parent=0
    _
  %s6 = ssub.s32 1, %s4
  %s7 = scalar_select 0, %s6, %s4
  loop: start=0, step=1, limit=4
  $region2: #{_lambda_.4} parent=0 // loop_pre_header
    _
  $region3: #{_lambda_.4} parent=0 // loop_header
    %s9 = sphi 0, %s13
    %p10 = scmp.ge.s32.totalorder %s9, 4
    %s19 = sphi 0, %s21
    %s22 = sphi 0, %s19
    %s23 = sphi 0, %s22
    %s39 = sphi 0, %s23
    %s43 = sphi 0, %s43
    %s45 = sphi 0, %s43
    %s46 = sphi 0, %s45
    %s60 = sphi 0, %s46
    %s64 = sphi 0, %s64
    %s66 = sphi 0, %s64
    %s67 = sphi 0, %s66
    %s81 = sphi 0, %s67
    %s87 = sphi 0, %s89
    %s90 = sphi 0, %s87
    %s91 = sphi 0, %s90
    %s107 = sphi 0, %s91
  $region4: #{_lambda_.4} parent=0 // loop_header_branch
    %12 = sbr.rel (%p10) target = $region8
  $region5: #{_lambda_.4} parent=0 // loop_body
    %s14 = ssub.s32 %s9, 1
    %s15 = ssub.s32 %s9, 2
    %s16 = sadd.s32 %s9, 1
    %s17 = ssub.s32 %s9, %s16
    %p18 = scmp.eq.s32.totalorder %s17, 0
    %s20 = sadd.s32 %s19, 1
    %s21 = scalar_select %p18, %s19, %s20
    %p24 = pneg %p18
    %p25 = scmp.eq.s32.totalorder %s9, 1
    %p26 = por %p24, %p25
    %p27 = scmp.ne.s32.totalorder %s19, %s22
    %p28 = scmp.eq.s32.totalorder %s9, 0
    %p29 = por %p27, %p28
    %p30 = scmp.ne.s32.totalorder %s19, %s22
    %p31 = scmp.eq.s32.totalorder %s14, 1
    %p32 = por %p30, %p31
    %p33 = scmp.ne.s32.totalorder %s22, %s23
    %p34 = scmp.eq.s32.totalorder %s14, 0
    %p35 = por %p33, %p34
    %p36 = scmp.ne.s32.totalorder %s22, %s23
    %p37 = scmp.eq.s32.totalorder %s15, 1
    %p38 = por %p36, %p37
    %p40 = scmp.ne.s32.totalorder %s23, %s39
    %p41 = scmp.eq.s32.totalorder %s15, 0
    %p42 = por %p40, %p41
    %s44 = sadd.s32 %s43, 1
    %p47 = scmp.eq.s32.totalorder %s9, 1
    %p48 = scmp.ne.s32.totalorder %s43, %s45
    %p49 = scmp.eq.s32.totalorder %s9, 0
    %p50 = por %p48, %p49
    %p51 = scmp.ne.s32.totalorder %s43, %s45
    %p52 = scmp.eq.s32.totalorder %s14, 1
    %p53 = por %p51, %p52
    %p54 = scmp.ne.s32.totalorder %s45, %s46
    %p55 = scmp.eq.s32.totalorder %s14, 0
    %p56 = por %p54, %p55
    %p57 = scmp.ne.s32.totalorder %s45, %s46
    %p58 = scmp.eq.s32.totalorder %s15, 1
    %p59 = por %p57, %p58
    %p61 = scmp.ne.s32.totalorder %s46, %s60
    %p62 = scmp.eq.s32.totalorder %s15, 0
    %p63 = por %p61, %p62
    %s65 = sadd.s32 %s64, 1
    %p68 = scmp.eq.s32.totalorder %s9, 1
    %p69 = scmp.ne.s32.totalorder %s64, %s66
    %p70 = scmp.eq.s32.totalorder %s9, 0
    %p71 = por %p69, %p70
    %p72 = scmp.ne.s32.totalorder %s64, %s66
    %p73 = scmp.eq.s32.totalorder %s14, 1
    %p74 = por %p72, %p73
    %p75 = scmp.ne.s32.totalorder %s66, %s67
    %p76 = scmp.eq.s32.totalorder %s14, 0
    %p77 = por %p75, %p76
    %p78 = scmp.ne.s32.totalorder %s66, %s67
    %p79 = scmp.eq.s32.totalorder %s15, 1
    %p80 = por %p78, %p79
    %p82 = scmp.ne.s32.totalorder %s67, %s81
    %p83 = scmp.eq.s32.totalorder %s15, 0
    %p84 = por %p82, %p83
    %s85 = ssub.s32 %s9, %s16
    %p86 = scmp.eq.s32.totalorder %s85, 0
    %s88 = sadd.s32 %s87, 1
    %s89 = scalar_select %p86, %s87, %s88
    %p92 = pneg %p86
    %p93 = scmp.eq.s32.totalorder %s9, 1
    %p94 = por %p92, %p93
    %p95 = scmp.ne.s32.totalorder %s87, %s90
    %p96 = scmp.eq.s32.totalorder %s9, 0
    %p97 = por %p95, %p96
    %p98 = scmp.ne.s32.totalorder %s87, %s90
    %p99 = scmp.eq.s32.totalorder %s14, 1
    %p100 = por %p98, %p99
    %p101 = scmp.ne.s32.totalorder %s90, %s91
    %p102 = scmp.eq.s32.totalorder %s14, 0
    %p103 = por %p101, %p102
    %p104 = scmp.ne.s32.totalorder %s90, %s91
    %p105 = scmp.eq.s32.totalorder %s15, 1
    %p106 = por %p104, %p105
    %p108 = scmp.ne.s32.totalorder %s91, %s107
    %p109 = scmp.eq.s32.totalorder %s15, 0
    %p110 = por %p108, %p109
    %p111 = scmp.le.s32.totalorder 1, %s9
    %p112 = scmp.lt.s32.totalorder %s9, 3
    %p113 = pnand %p111, %p112
    %p114 = pneg %p113
    // Predicated region
    $region9: #{_lambda_.4} parent=5 // pred_check
      _
    $region10: #{_lambda_.4} parent=5 // pred_check_branch
      %116 = sbr.rel (%p113) target = $region12
    $region11: #{_lambda_.4} parent=5 // pred_region
      %s117 = ssub.s32 %s9, 1
      // Predicated region
      $region13: #{_lambda_.4} parent=11 // pred_check
        %p118 = pneg %p56
      $region14: #{_lambda_.4} parent=11 // pred_check_branch
        %120 = sbr.rel (%p118) target = $region16
      $region15: #{_lambda_.4} parent=11 // pred_region
        _
      $region16: #{_lambda_.4} parent=11 // pred_fallthru
        _
      // Predicated region
      $region17: #{_lambda_.4} parent=11 // pred_check
        %p121 = pneg %p77
      $region18: #{_lambda_.4} parent=11 // pred_check_branch
        %123 = sbr.rel (%p121) target = $region20
      $region19: #{_lambda_.4} parent=11 // pred_region
        _
      $region20: #{_lambda_.4} parent=11 // pred_fallthru
        _
    $region12: #{_lambda_.4} parent=5 // pred_fallthru
      _
    %p124 = scmp.lt.s32.totalorder %s9, 2
    // Predicated region
    $region21: #{_lambda_.4} parent=5 // pred_check
      %p125 = pneg %p124
    $region22: #{_lambda_.4} parent=5 // pred_check_branch
      %127 = sbr.rel (%p125) target = $region24
    $region23: #{_lambda_.4} parent=5 // pred_region
      // Predicated region
      $region25: #{_lambda_.4} parent=23 // pred_check
        %p128 = pneg %p29
      $region26: #{_lambda_.4} parent=23 // pred_check_branch
        %130 = sbr.rel (%p128) target = $region28
      $region27: #{_lambda_.4} parent=23 // pred_region
        %s131 = smul.u32 128, %s9
        %p132 = scmp.lt.s32.totalorder %s131, 255
        %s133 = scalar_select %p132, %s131, 255
        %s134 = smul.addr %s133, 4
        %s135 = scalar_lea.vmem %s0, %s134
        %s136 = smul.u32 128, %s9
      $region28: #{_lambda_.4} parent=23 // pred_fallthru
        _
    $region24: #{_lambda_.4} parent=5 // pred_fallthru
      _
    %p137 = scmp.le.s32.totalorder 1, %s9
    %p138 = scmp.lt.s32.totalorder %s9, 3
    %p139 = pnand %p137, %p138
    %p140 = pneg %p139
    // Predicated region
    $region29: #{_lambda_.4} parent=5 // pred_check
      _
    $region30: #{_lambda_.4} parent=5 // pred_check_branch
      %142 = sbr.rel (%p139) target = $region32
    $region31: #{_lambda_.4} parent=5 // pred_region
      %s143 = ssub.s32 %s9, 1
      %s144 = smul.u32 128, %s14
      %p145 = scmp.lt.s32.totalorder %s144, 255
      %s146 = scalar_select %p145, %s144, 255
      %s147 = smul.addr %s146, 4
      %s148 = scalar_lea.vmem %s0, %s147
      %p149 = pneg %p35
      %p150 = pneg %p32
      %p151 = pneg %p56
      %p152 = pneg %p53
      %p153 = pneg %p77
      %p154 = pneg %p74
      %p155 = pneg %p103
      %p156 = pneg %p100
      %s157 = smul.u32 128, %s14
      %p158 = scmp.lt.s32.totalorder %s157, 255
      %s159 = scalar_select %p158, %s157, 255
      %s160 = smul.addr %s159, 4
      %s161 = scalar_lea.vmem %s3, %s160
      %s162 = smul.u32 128, %s14
      %p163 = scmp.lt.s32.totalorder %s162, 255
      %s164 = scalar_select %p163, %s162, 255
      %s165 = smul.addr %s164, 4
      %s166 = scalar_lea.vmem %s0, %s165
      %s167 = smul.u32 128, %s14
      %s168 = smul.u32 128, %s14
      %p169 = scmp.lt.s32.totalorder %s168, 255
      %s170 = scalar_select %p169, %s168, 255
      %s171 = smul.addr %s170, 4
      %s172 = scalar_lea.vmem %s3, %s171
      %s173 = smul.u32 128, %s14
      %v175 = vld [vmem:[%s166] sm:$0xf]
      %v176 = vld [vmem:[%s166 + $0x4] sm:$0xf]
      %v177 = vld [vmem:[%s166 + $0x8] sm:$0xf]
      %v178 = vld [vmem:[%s166 + $0xc] sm:$0xf]
      %v179 = vld [vmem:[%s166 + $0x10] sm:$0xf]
      %v180 = vld [vmem:[%s166 + $0x14] sm:$0xf]
      %v181 = vld [vmem:[%s166 + $0x18] sm:$0xf]
      %v182 = vld [vmem:[%s166 + $0x1c] sm:$0xf]
      %v183 = vld [vmem:[%s166 + $0x20] sm:$0xf]
      %v184 = vld [vmem:[%s166 + $0x24] sm:$0xf]
      %v185 = vld [vmem:[%s166 + $0x28] sm:$0xf]
      %v186 = vld [vmem:[%s166 + $0x2c] sm:$0xf]
      %v187 = vld [vmem:[%s166 + $0x30] sm:$0xf]
      %v188 = vld [vmem:[%s166 + $0x34] sm:$0xf]
      %v189 = vld [vmem:[%s166 + $0x38] sm:$0xf]
      %v190 = vld [vmem:[%s166 + $0x3c] sm:$0xf]
      %v191 = vld [vmem:[%s166 + $0x40] sm:$0xf]
      %v192 = vld [vmem:[%s166 + $0x44] sm:$0xf]
      %v193 = vld [vmem:[%s166 + $0x48] sm:$0xf]
      %v194 = vld [vmem:[%s166 + $0x4c] sm:$0xf]
      %v195 = vld [vmem:[%s166 + $0x50] sm:$0xf]
      %v196 = vld [vmem:[%s166 + $0x54] sm:$0xf]
      %v197 = vld [vmem:[%s166 + $0x58] sm:$0xf]
      %v198 = vld [vmem:[%s166 + $0x5c] sm:$0xf]
      %v199 = vld [vmem:[%s166 + $0x60] sm:$0xf]
      %v200 = vld [vmem:[%s166 + $0x64] sm:$0xf]
      %v201 = vld [vmem:[%s166 + $0x68] sm:$0xf]
      %v202 = vld [vmem:[%s166 + $0x6c] sm:$0xf]
      %v203 = vld [vmem:[%s166 + $0x70] sm:$0xf]
      %v204 = vld [vmem:[%s166 + $0x74] sm:$0xf]
      %v205 = vld [vmem:[%s166 + $0x78] sm:$0xf]
      %v206 = vld [vmem:[%s166 + $0x7c] sm:$0xf]
      %v207 = vld [vmem:[%s166 + $0x80] sm:$0xf]
      %v208 = vld [vmem:[%s166 + $0x84] sm:$0xf]
      %v209 = vld [vmem:[%s166 + $0x88] sm:$0xf]
      %v210 = vld [vmem:[%s166 + $0x8c] sm:$0xf]
      %v211 = vld [vmem:[%s166 + $0x90] sm:$0xf]
      %v212 = vld [vmem:[%s166 + $0x94] sm:$0xf]
      %v213 = vld [vmem:[%s166 + $0x98] sm:$0xf]
      %v214 = vld [vmem:[%s166 + $0x9c] sm:$0xf]
      %v215 = vld [vmem:[%s166 + $0xa0] sm:$0xf]
      %v216 = vld [vmem:[%s166 + $0xa4] sm:$0xf]
      %v217 = vld [vmem:[%s166 + $0xa8] sm:$0xf]
      %v218 = vld [vmem:[%s166 + $0xac] sm:$0xf]
      %v219 = vld [vmem:[%s166 + $0xb0] sm:$0xf]
      %v220 = vld [vmem:[%s166 + $0xb4] sm:$0xf]
      %v221 = vld [vmem:[%s166 + $0xb8] sm:$0xf]
      %v222 = vld [vmem:[%s166 + $0xbc] sm:$0xf]
      %v223 = vld [vmem:[%s166 + $0xc0] sm:$0xf]
      %v224 = vld [vmem:[%s166 + $0xc4] sm:$0xf]
      %v225 = vld [vmem:[%s166 + $0xc8] sm:$0xf]
      %v226 = vld [vmem:[%s166 + $0xcc] sm:$0xf]
      %v227 = vld [vmem:[%s166 + $0xd0] sm:$0xf]
      %v228 = vld [vmem:[%s166 + $0xd4] sm:$0xf]
      %v229 = vld [vmem:[%s166 + $0xd8] sm:$0xf]
      %v230 = vld [vmem:[%s166 + $0xdc] sm:$0xf]
      %v231 = vld [vmem:[%s166 + $0xe0] sm:$0xf]
      %v232 = vld [vmem:[%s166 + $0xe4] sm:$0xf]
      %v233 = vld [vmem:[%s166 + $0xe8] sm:$0xf]
      %v234 = vld [vmem:[%s166 + $0xec] sm:$0xf]
      %v235 = vld [vmem:[%s166 + $0xf0] sm:$0xf]
      %v236 = vld [vmem:[%s166 + $0xf4] sm:$0xf]
      %v237 = vld [vmem:[%s166 + $0xf8] sm:$0xf]
      %v238 = vld [vmem:[%s166 + $0xfc] sm:$0xf]
      %v239 = vld [vmem:[%s166 + $0x100] sm:$0xf]
      %v240 = vld [vmem:[%s166 + $0x104] sm:$0xf]
      %v241 = vld [vmem:[%s166 + $0x108] sm:$0xf]
      %v242 = vld [vmem:[%s166 + $0x10c] sm:$0xf]
      %v243 = vld [vmem:[%s166 + $0x110] sm:$0xf]
      %v244 = vld [vmem:[%s166 + $0x114] sm:$0xf]
      %v245 = vld [vmem:[%s166 + $0x118] sm:$0xf]
      %v246 = vld [vmem:[%s166 + $0x11c] sm:$0xf]
      %v247 = vld [vmem:[%s166 + $0x120] sm:$0xf]
      %v248 = vld [vmem:[%s166 + $0x124] sm:$0xf]
      %v249 = vld [vmem:[%s166 + $0x128] sm:$0xf]
      %v250 = vld [vmem:[%s166 + $0x12c] sm:$0xf]
      %v251 = vld [vmem:[%s166 + $0x130] sm:$0xf]
      %v252 = vld [vmem:[%s166 + $0x134] sm:$0xf]
      %v253 = vld [vmem:[%s166 + $0x138] sm:$0xf]
      %v254 = vld [vmem:[%s166 + $0x13c] sm:$0xf]
      %v255 = vld [vmem:[%s166 + $0x140] sm:$0xf]
      %v256 = vld [vmem:[%s166 + $0x144] sm:$0xf]
      %v257 = vld [vmem:[%s166 + $0x148] sm:$0xf]
      %v258 = vld [vmem:[%s166 + $0x14c] sm:$0xf]
      %v259 = vld [vmem:[%s166 + $0x150] sm:$0xf]
      %v260 = vld [vmem:[%s166 + $0x154] sm:$0xf]
      %v261 = vld [vmem:[%s166 + $0x158] sm:$0xf]
      %v262 = vld [vmem:[%s166 + $0x15c] sm:$0xf]
      %v263 = vld [vmem:[%s166 + $0x160] sm:$0xf]
      %v264 = vld [vmem:[%s166 + $0x164] sm:$0xf]
      %v265 = vld [vmem:[%s166 + $0x168] sm:$0xf]
      %v266 = vld [vmem:[%s166 + $0x16c] sm:$0xf]
      %v267 = vld [vmem:[%s166 + $0x170] sm:$0xf]
      %v268 = vld [vmem:[%s166 + $0x174] sm:$0xf]
      %v269 = vld [vmem:[%s166 + $0x178] sm:$0xf]
      %v270 = vld [vmem:[%s166 + $0x17c] sm:$0xf]
      %v271 = vld [vmem:[%s166 + $0x180] sm:$0xf]
      %v272 = vld [vmem:[%s166 + $0x184] sm:$0xf]
      %v273 = vld [vmem:[%s166 + $0x188] sm:$0xf]
      %v274 = vld [vmem:[%s166 + $0x18c] sm:$0xf]
      %v275 = vld [vmem:[%s166 + $0x190] sm:$0xf]
      %v276 = vld [vmem:[%s166 + $0x194] sm:$0xf]
      %v277 = vld [vmem:[%s166 + $0x198] sm:$0xf]
      %v278 = vld [vmem:[%s166 + $0x19c] sm:$0xf]
      %v279 = vld [vmem:[%s166 + $0x1a0] sm:$0xf]
      %v280 = vld [vmem:[%s166 + $0x1a4] sm:$0xf]
      %v281 = vld [vmem:[%s166 + $0x1a8] sm:$0xf]
      %v282 = vld [vmem:[%s166 + $0x1ac] sm:$0xf]
      %v283 = vld [vmem:[%s166 + $0x1b0] sm:$0xf]
      %v284 = vld [vmem:[%s166 + $0x1b4] sm:$0xf]
      %v285 = vld [vmem:[%s166 + $0x1b8] sm:$0xf]
      %v286 = vld [vmem:[%s166 + $0x1bc] sm:$0xf]
      %v287 = vld [vmem:[%s166 + $0x1c0] sm:$0xf]
      %v288 = vld [vmem:[%s166 + $0x1c4] sm:$0xf]
      %v289 = vld [vmem:[%s166 + $0x1c8] sm:$0xf]
      %v290 = vld [vmem:[%s166 + $0x1cc] sm:$0xf]
      %v291 = vld [vmem:[%s166 + $0x1d0] sm:$0xf]
      %v292 = vld [vmem:[%s166 + $0x1d4] sm:$0xf]
      %v293 = vld [vmem:[%s166 + $0x1d8] sm:$0xf]
      %v294 = vld [vmem:[%s166 + $0x1dc] sm:$0xf]
      %v295 = vld [vmem:[%s166 + $0x1e0] sm:$0xf]
      %v296 = vld [vmem:[%s166 + $0x1e4] sm:$0xf]
      %v297 = vld [vmem:[%s166 + $0x1e8] sm:$0xf]
      %v298 = vld [vmem:[%s166 + $0x1ec] sm:$0xf]
      %v299 = vld [vmem:[%s166 + $0x1f0] sm:$0xf]
      %v300 = vld [vmem:[%s166 + $0x1f4] sm:$0xf]
      %v301 = vld [vmem:[%s166 + $0x1f8] sm:$0xf]
      %v302 = vld [vmem:[%s166 + $0x1fc] sm:$0xf]
      %v303 = vld [vmem:[%s1] sm:$0xf]
      %v304 = vld [vmem:[%s1 + $0x4] sm:$0xf]
      %v305 = vld [vmem:[%s1 + $0x8] sm:$0xf]
      %v306 = vld [vmem:[%s1 + $0xc] sm:$0xf]
      %v307 = vld [vmem:[%s1 + $0x10] sm:$0xf]
      %v308 = vld [vmem:[%s1 + $0x14] sm:$0xf]
      %v309 = vld [vmem:[%s2] sm:$0x1]
      %v311 = vlaneseq
      %v312 = vshrl.u32 %v311, 7
      %v313 = vsub.s32 0, %v312
      %v314 = vrot.slane %v309, %v313
      %v444 = vunpack.c.l.b16 %v175
      %v445 = vunpack.c.l.b16 %v176
      %v446 = vunpack.c.l.b16 %v177
      %v447 = vunpack.c.l.b16 %v178
      %v448 = vunpack.c.l.b16 %v179
      %v449 = vunpack.c.l.b16 %v180
      %v450 = vunpack.c.l.b16 %v181
      %v451 = vunpack.c.l.b16 %v182
      %v452 = vunpack.c.l.b16 %v183
      %v453 = vunpack.c.l.b16 %v184
      %v454 = vunpack.c.l.b16 %v185
      %v455 = vunpack.c.l.b16 %v186
      %v456 = vunpack.c.l.b16 %v187
      %v457 = vunpack.c.l.b16 %v188
      %v458 = vunpack.c.l.b16 %v189
      %v459 = vunpack.c.l.b16 %v190
      %v460 = vunpack.c.l.b16 %v191
      %v461 = vunpack.c.l.b16 %v192
      %v462 = vunpack.c.l.b16 %v193
      %v463 = vunpack.c.l.b16 %v194
      %v464 = vunpack.c.l.b16 %v195
      %v465 = vunpack.c.l.b16 %v196
      %v466 = vunpack.c.l.b16 %v197
      %v467 = vunpack.c.l.b16 %v198
      %v468 = vunpack.c.l.b16 %v199
      %v469 = vunpack.c.l.b16 %v200
      %v470 = vunpack.c.l.b16 %v201
      %v471 = vunpack.c.l.b16 %v202
      %v472 = vunpack.c.l.b16 %v203
      %v473 = vunpack.c.l.b16 %v204
      %v474 = vunpack.c.l.b16 %v205
      %v475 = vunpack.c.l.b16 %v206
      %v476 = vunpack.c.l.b16 %v207
      %v477 = vunpack.c.l.b16 %v208
      %v478 = vunpack.c.l.b16 %v209
      %v479 = vunpack.c.l.b16 %v210
      %v480 = vunpack.c.l.b16 %v211
      %v481 = vunpack.c.l.b16 %v212
      %v482 = vunpack.c.l.b16 %v213
      %v483 = vunpack.c.l.b16 %v214
      %v484 = vunpack.c.l.b16 %v215
      %v485 = vunpack.c.l.b16 %v216
      %v486 = vunpack.c.l.b16 %v217
      %v487 = vunpack.c.l.b16 %v218
      %v488 = vunpack.c.l.b16 %v219
      %v489 = vunpack.c.l.b16 %v220
      %v490 = vunpack.c.l.b16 %v221
      %v491 = vunpack.c.l.b16 %v222
      %v492 = vunpack.c.l.b16 %v223
      %v493 = vunpack.c.l.b16 %v224
      %v494 = vunpack.c.l.b16 %v225
      %v495 = vunpack.c.l.b16 %v226
      %v496 = vunpack.c.l.b16 %v227
      %v497 = vunpack.c.l.b16 %v228
      %v498 = vunpack.c.l.b16 %v229
      %v499 = vunpack.c.l.b16 %v230
      %v500 = vunpack.c.l.b16 %v231
      %v501 = vunpack.c.l.b16 %v232
      %v502 = vunpack.c.l.b16 %v233
      %v503 = vunpack.c.l.b16 %v234
      %v504 = vunpack.c.l.b16 %v235
      %v505 = vunpack.c.l.b16 %v236
      %v506 = vunpack.c.l.b16 %v237
      %v507 = vunpack.c.l.b16 %v238
      %v508 = vunpack.c.l.b16 %v239
      %v509 = vunpack.c.l.b16 %v240
      %v510 = vunpack.c.l.b16 %v241
      %v511 = vunpack.c.l.b16 %v242
      %v512 = vunpack.c.l.b16 %v243
      %v513 = vunpack.c.l.b16 %v244
      %v514 = vunpack.c.l.b16 %v245
      %v515 = vunpack.c.l.b16 %v246
      %v516 = vunpack.c.l.b16 %v247
      %v517 = vunpack.c.l.b16 %v248
      %v518 = vunpack.c.l.b16 %v249
      %v519 = vunpack.c.l.b16 %v250
      %v520 = vunpack.c.l.b16 %v251
      %v521 = vunpack.c.l.b16 %v252
      %v522 = vunpack.c.l.b16 %v253
      %v523 = vunpack.c.l.b16 %v254
      %v524 = vunpack.c.l.b16 %v255
      %v525 = vunpack.c.l.b16 %v256
      %v526 = vunpack.c.l.b16 %v257
      %v527 = vunpack.c.l.b16 %v258
      %v528 = vunpack.c.l.b16 %v259
      %v529 = vunpack.c.l.b16 %v260
      %v530 = vunpack.c.l.b16 %v261
      %v531 = vunpack.c.l.b16 %v262
      %v532 = vunpack.c.l.b16 %v263
      %v533 = vunpack.c.l.b16 %v264
      %v534 = vunpack.c.l.b16 %v265
      %v535 = vunpack.c.l.b16 %v266
      %v536 = vunpack.c.l.b16 %v267
      %v537 = vunpack.c.l.b16 %v268
      %v538 = vunpack.c.l.b16 %v269
      %v539 = vunpack.c.l.b16 %v270
      %v540 = vunpack.c.l.b16 %v271
      %v541 = vunpack.c.l.b16 %v272
      %v542 = vunpack.c.l.b16 %v273
      %v543 = vunpack.c.l.b16 %v274
      %v544 = vunpack.c.l.b16 %v275
      %v545 = vunpack.c.l.b16 %v276
      %v546 = vunpack.c.l.b16 %v277
      %v547 = vunpack.c.l.b16 %v278
      %v548 = vunpack.c.l.b16 %v279
      %v549 = vunpack.c.l.b16 %v280
      %v550 = vunpack.c.l.b16 %v281
      %v551 = vunpack.c.l.b16 %v282
      %v552 = vunpack.c.l.b16 %v283
      %v553 = vunpack.c.l.b16 %v284
      %v554 = vunpack.c.l.b16 %v285
      %v555 = vunpack.c.l.b16 %v286
      %v556 = vunpack.c.l.b16 %v287
      %v557 = vunpack.c.l.b16 %v288
      %v558 = vunpack.c.l.b16 %v289
      %v559 = vunpack.c.l.b16 %v290
      %v560 = vunpack.c.l.b16 %v291
      %v561 = vunpack.c.l.b16 %v292
      %v562 = vunpack.c.l.b16 %v293
      %v563 = vunpack.c.l.b16 %v294
      %v564 = vunpack.c.l.b16 %v295
      %v565 = vunpack.c.l.b16 %v296
      %v566 = vunpack.c.l.b16 %v297
      %v567 = vunpack.c.l.b16 %v298
      %v568 = vunpack.c.l.b16 %v299
      %v569 = vunpack.c.l.b16 %v300
      %v570 = vunpack.c.l.b16 %v301
      %v571 = vunpack.c.l.b16 %v302
      %v572 = vpack.c.b16 %v445, %v444
      %v573 = vpack.c.b16 %v447, %v446
      %v574 = vpack.c.b16 %v449, %v448
      %v575 = vpack.c.b16 %v451, %v450
      %v576 = vpack.c.b16 %v453, %v452
      %v577 = vpack.c.b16 %v455, %v454
      %v578 = vpack.c.b16 %v457, %v456
      %v579 = vpack.c.b16 %v459, %v458
      %v580 = vpack.c.b16 %v461, %v460
      %v581 = vpack.c.b16 %v463, %v462
      %v582 = vpack.c.b16 %v465, %v464
      %v583 = vpack.c.b16 %v467, %v466
      %v584 = vpack.c.b16 %v469, %v468
      %v585 = vpack.c.b16 %v471, %v470
      %v586 = vpack.c.b16 %v473, %v472
      %v587 = vpack.c.b16 %v475, %v474
      %v588 = vpack.c.b16 %v477, %v476
      %v589 = vpack.c.b16 %v479, %v478
      %v590 = vpack.c.b16 %v481, %v480
      %v591 = vpack.c.b16 %v483, %v482
      %v592 = vpack.c.b16 %v485, %v484
      %v593 = vpack.c.b16 %v487, %v486
      %v594 = vpack.c.b16 %v489, %v488
      %v595 = vpack.c.b16 %v491, %v490
      %v596 = vpack.c.b16 %v493, %v492
      %v597 = vpack.c.b16 %v495, %v494
      %v598 = vpack.c.b16 %v497, %v496
      %v599 = vpack.c.b16 %v499, %v498
      %v600 = vpack.c.b16 %v501, %v500
      %v601 = vpack.c.b16 %v503, %v502
      %v602 = vpack.c.b16 %v505, %v504
      %v603 = vpack.c.b16 %v507, %v506
      %v604 = vpack.c.b16 %v509, %v508
      %v605 = vpack.c.b16 %v511, %v510
      %v606 = vpack.c.b16 %v513, %v512
      %v607 = vpack.c.b16 %v515, %v514
      %v608 = vpack.c.b16 %v517, %v516
      %v609 = vpack.c.b16 %v519, %v518
      %v610 = vpack.c.b16 %v521, %v520
      %v611 = vpack.c.b16 %v523, %v522
      %v612 = vpack.c.b16 %v525, %v524
      %v613 = vpack.c.b16 %v527, %v526
      %v614 = vpack.c.b16 %v529, %v528
      %v615 = vpack.c.b16 %v531, %v530
      %v616 = vpack.c.b16 %v533, %v532
      %v617 = vpack.c.b16 %v535, %v534
      %v618 = vpack.c.b16 %v537, %v536
      %v619 = vpack.c.b16 %v539, %v538
      %v620 = vpack.c.b16 %v541, %v540
      %v621 = vpack.c.b16 %v543, %v542
      %v622 = vpack.c.b16 %v545, %v544
      %v623 = vpack.c.b16 %v547, %v546
      %v624 = vpack.c.b16 %v549, %v548
      %v625 = vpack.c.b16 %v551, %v550
      %v626 = vpack.c.b16 %v553, %v552
      %v627 = vpack.c.b16 %v555, %v554
      %v628 = vpack.c.b16 %v557, %v556
      %v629 = vpack.c.b16 %v559, %v558
      %v630 = vpack.c.b16 %v561, %v560
      %v631 = vpack.c.b16 %v563, %v562
      %v632 = vpack.c.b16 %v565, %v564
      %v633 = vpack.c.b16 %v567, %v566
      %v634 = vpack.c.b16 %v569, %v568
      %v635 = vpack.c.b16 %v571, %v570
      %v642 = vunpack.c.l.b16 %v303
      %v643 = vunpack.c.l.b16 %v304
      %v644 = vunpack.c.l.b16 %v305
      %v645 = vunpack.c.l.b16 %v306
      %v646 = vunpack.c.l.b16 %v307
      %v647 = vunpack.c.l.b16 %v308
      %v648 = vpack.c.b16 %v643, %v642
      %v649 = vpack.c.b16 %v645, %v644
      %v650 = vpack.c.b16 %v647, %v646
      %vm654 = vcmask 392192
      %v656 = vsel %vm654, %v572, 0
      %v659 = vsel %vm654, %v573, 0
      %v662 = vsel %vm654, %v574, 0
      %v665 = vsel %vm654, %v575, 0
      %v668 = vsel %vm654, %v576, 0
      %v671 = vsel %vm654, %v577, 0
      %v674 = vsel %vm654, %v578, 0
      %v677 = vsel %vm654, %v579, 0
      %v680 = vsel %vm654, %v580, 0
      %v683 = vsel %vm654, %v581, 0
      %v686 = vsel %vm654, %v582, 0
      %v689 = vsel %vm654, %v583, 0
      %v692 = vsel %vm654, %v584, 0
      %v695 = vsel %vm654, %v585, 0
      %v698 = vsel %vm654, %v586, 0
      %v701 = vsel %vm654, %v587, 0
      %v704 = vsel %vm654, %v588, 0
      %v707 = vsel %vm654, %v589, 0
      %v710 = vsel %vm654, %v590, 0
      %v713 = vsel %vm654, %v591, 0
      %v716 = vsel %vm654, %v592, 0
      %v719 = vsel %vm654, %v593, 0
      %v722 = vsel %vm654, %v594, 0
      %v725 = vsel %vm654, %v595, 0
      %v728 = vsel %vm654, %v596, 0
      %v731 = vsel %vm654, %v597, 0
      %v734 = vsel %vm654, %v598, 0
      %v737 = vsel %vm654, %v599, 0
      %v740 = vsel %vm654, %v600, 0
      %v743 = vsel %vm654, %v601, 0
      %v746 = vsel %vm654, %v602, 0
      %v749 = vsel %vm654, %v603, 0
      %v752 = vsel %vm654, %v604, 0
      %v755 = vsel %vm654, %v605, 0
      %v758 = vsel %vm654, %v606, 0
      %v761 = vsel %vm654, %v607, 0
      %v764 = vsel %vm654, %v608, 0
      %v767 = vsel %vm654, %v609, 0
      %v770 = vsel %vm654, %v610, 0
      %v773 = vsel %vm654, %v611, 0
      %v776 = vsel %vm654, %v612, 0
      %v779 = vsel %vm654, %v613, 0
      %v782 = vsel %vm654, %v614, 0
      %v785 = vsel %vm654, %v615, 0
      %v788 = vsel %vm654, %v616, 0
      %v791 = vsel %vm654, %v617, 0
      %v794 = vsel %vm654, %v618, 0
      %v797 = vsel %vm654, %v619, 0
      %v800 = vsel %vm654, %v620, 0
      %v803 = vsel %vm654, %v621, 0
      %v806 = vsel %vm654, %v622, 0
      %v809 = vsel %vm654, %v623, 0
      %v812 = vsel %vm654, %v624, 0
      %v815 = vsel %vm654, %v625, 0
      %v818 = vsel %vm654, %v626, 0
      %v821 = vsel %vm654, %v627, 0
      %v824 = vsel %vm654, %v628, 0
      %v827 = vsel %vm654, %v629, 0
      %v830 = vsel %vm654, %v630, 0
      %v833 = vsel %vm654, %v631, 0
      %v836 = vsel %vm654, %v632, 0
      %v839 = vsel %vm654, %v633, 0
      %v842 = vsel %vm654, %v634, 0
      %v845 = vsel %vm654, %v635, 0
      %847 = vmatprep.subr.bf16.mxu0 0
      %848 = vmatpush1.bf16.msra.mxu0 %v648
      %849 = vmatprep.subr.bf16.mxu0 0
      %850 = vmatpush1.bf16.msra.mxu0 %v649
      %851 = vmatprep.subr.bf16.mxu0 0
      %852 = vmatpush1.bf16.msra.mxu0 %v650
      %853 = vmatprep.subr.bf16.mxu0 0
      %854 = vmatpush1.bf16.msra.mxu0 0
      %855 = vmatprep.subr.bf16.mxu0 0
      %856 = vmatpush1.bf16.msra.mxu0 0
      %857 = vmatprep.subr.bf16.mxu0 0
      %858 = vmatpush1.bf16.msra.mxu0 0
      %859 = vmatprep.subr.bf16.mxu0 0
      %860 = vmatpush1.bf16.msra.mxu0 0
      %861 = vmatprep.subr.bf16.mxu0 0
      %862 = vmatpush1.bf16.msra.mxu0 0
      %863 = vmatprep.subr.bf16.mxu0 0
      %864 = vmatpush1.bf16.msra.mxu0 0
      %865 = vmatprep.subr.bf16.mxu0 0
      %866 = vmatpush1.bf16.msra.mxu0 0
      %867 = vmatprep.subr.bf16.mxu0 0
      %868 = vmatpush1.bf16.msra.mxu0 0
      %869 = vmatprep.subr.bf16.mxu0 0
      %870 = vmatpush1.bf16.msra.mxu0 0
      %871 = vmatprep.subr.bf16.mxu0 0
      %872 = vmatpush1.bf16.msra.mxu0 0
      %873 = vmatprep.subr.bf16.mxu0 0
      %874 = vmatpush1.bf16.msra.mxu0 0
      %875 = vmatprep.subr.bf16.mxu0 0
      %876 = vmatpush1.bf16.msra.mxu0 0
      %877 = vmatprep.subr.bf16.mxu0 0
      %878 = vmatpush1.bf16.msra.mxu0 0
      %879 = vmatprep.mubr.bf16.mxu0 0
      %880 = vmatmul.mubr.bf16.gmra.mrb[0].mxu0 %v656
      %v881 = vpop.f32.mrb[0].mxu0
      %v882 = vadd.f32 %v314, %v881
      %v883 = vpop.f32.mrb[0].mxu0
      %v884 = vpop.f32.mrb[0].mxu0
      %v885 = vadd.f32 %v314, %v884
      %v886 = vpop.f32.mrb[0].mxu0
      %887 = vmatprep.mubr.bf16.mxu0 0
      %888 = vmatmul.mubr.bf16.gmra.mrb[0].mxu0 %v659
      %v889 = vpop.f32.mrb[0].mxu0
      %v890 = vadd.f32 %v314, %v889
      %v891 = vpop.f32.mrb[0].mxu0
      %v892 = vpop.f32.mrb[0].mxu0
      %v893 = vadd.f32 %v314, %v892
      %v894 = vpop.f32.mrb[0].mxu0
      %895 = vmatprep.mubr.bf16.mxu0 0
      %896 = vmatmul.mubr.bf16.gmra.mrb[0].mxu0 %v662
      %v897 = vpop.f32.mrb[0].mxu0
      %v898 = vadd.f32 %v314, %v897
      %v899 = vpop.f32.mrb[0].mxu0
      %v900 = vpop.f32.mrb[0].mxu0
      %v901 = vadd.f32 %v314, %v900
      %v902 = vpop.f32.mrb[0].mxu0
      %903 = vmatprep.mubr.bf16.mxu0 0
      %904 = vmatmul.mubr.bf16.gmra.mrb[0].mxu0 %v665
      %v905 = vpop.f32.mrb[0].mxu0
      %v906 = vadd.f32 %v314, %v905
      %v907 = vpop.f32.mrb[0].mxu0
      %v908 = vpop.f32.mrb[0].mxu0
      %v909 = vadd.f32 %v314, %v908
      %v910 = vpop.f32.mrb[0].mxu0
      %911 = vmatprep.mubr.bf16.mxu0 0
      %912 = vmatmul.mubr.bf16.gmra.mrb[0].mxu0 %v668
      %v913 = vpop.f32.mrb[0].mxu0
      %v914 = vadd.f32 %v314, %v913
      %v915 = vpop.f32.mrb[0].mxu0
      %v916 = vpop.f32.mrb[0].mxu0
      %v917 = vadd.f32 %v314, %v916
      %v918 = vpop.f32.mrb[0].mxu0
      %919 = vmatprep.mubr.bf16.mxu0 0
      %920 = vmatmul.mubr.bf16.gmra.mrb[0].mxu0 %v671
      %v921 = vpop.f32.mrb[0].mxu0
      %v922 = vadd.f32 %v314, %v921
      %v923 = vpop.f32.mrb[0].mxu0
      %v924 = vpop.f32.mrb[0].mxu0
      %v925 = vadd.f32 %v314, %v924
      %v926 = vpop.f32.mrb[0].mxu0
      %927 = vmatprep.mubr.bf16.mxu0 0
      %928 = vmatmul.mubr.bf16.gmra.mrb[0].mxu0 %v674
      %v929 = vpop.f32.mrb[0].mxu0
      %v930 = vadd.f32 %v314, %v929
      %v931 = vpop.f32.mrb[0].mxu0
      %v932 = vpop.f32.mrb[0].mxu0
      %v933 = vadd.f32 %v314, %v932
      %v934 = vpop.f32.mrb[0].mxu0
      %935 = vmatprep.mubr.bf16.mxu0 0
      %936 = vmatmul.mubr.bf16.gmra.mrb[0].mxu0 %v677
      %v937 = vpop.f32.mrb[0].mxu0
      %v938 = vadd.f32 %v314, %v937
      %v939 = vpop.f32.mrb[0].mxu0
      %v940 = vpop.f32.mrb[0].mxu0
      %v941 = vadd.f32 %v314, %v940
      %v942 = vpop.f32.mrb[0].mxu0
      %943 = vmatprep.mubr.bf16.mxu0 0
      %944 = vmatmul.mubr.bf16.gmra.mrb[0].mxu0 %v680
      %v945 = vpop.f32.mrb[0].mxu0
      %v946 = vadd.f32 %v314, %v945
      %v947 = vpop.f32.mrb[0].mxu0
      %v948 = vpop.f32.mrb[0].mxu0
      %v949 = vadd.f32 %v314, %v948
      %v950 = vpop.f32.mrb[0].mxu0
      %951 = vmatprep.mubr.bf16.mxu0 0
      %952 = vmatmul.mubr.bf16.gmra.mrb[0].mxu0 %v683
      %v953 = vpop.f32.mrb[0].mxu0
      %v954 = vadd.f32 %v314, %v953
      %v955 = vpop.f32.mrb[0].mxu0
      %v956 = vpop.f32.mrb[0].mxu0
      %v957 = vadd.f32 %v314, %v956
      %v958 = vpop.f32.mrb[0].mxu0
      %959 = vmatprep.mubr.bf16.mxu0 0
      %960 = vmatmul.mubr.bf16.gmra.mrb[0].mxu0 %v686
      %v961 = vpop.f32.mrb[0].mxu0
      %v962 = vadd.f32 %v314, %v961
      %v963 = vpop.f32.mrb[0].mxu0
      %v964 = vpop.f32.mrb[0].mxu0
      %v965 = vadd.f32 %v314, %v964
      %v966 = vpop.f32.mrb[0].mxu0
      %967 = vmatprep.mubr.bf16.mxu0 0
      %968 = vmatmul.mubr.bf16.gmra.mrb[0].mxu0 %v689
      %v969 = vpop.f32.mrb[0].mxu0
      %v970 = vadd.f32 %v314, %v969
      %v971 = vpop.f32.mrb[0].mxu0
      %v972 = vpop.f32.mrb[0].mxu0
      %v973 = vadd.f32 %v314, %v972
      %v974 = vpop.f32.mrb[0].mxu0
      %975 = vmatprep.mubr.bf16.mxu0 0
      %976 = vmatmul.mubr.bf16.gmra.mrb[0].mxu0 %v692
      %v977 = vpop.f32.mrb[0].mxu0
      %v978 = vadd.f32 %v314, %v977
      %v979 = vpop.f32.mrb[0].mxu0
      %v980 = vpop.f32.mrb[0].mxu0
      %v981 = vadd.f32 %v314, %v980
      %v982 = vpop.f32.mrb[0].mxu0
      %983 = vmatprep.mubr.bf16.mxu0 0
      %984 = vmatmul.mubr.bf16.gmra.mrb[0].mxu0 %v695
      %v985 = vpop.f32.mrb[0].mxu0
      %v986 = vadd.f32 %v314, %v985
      %v987 = vpop.f32.mrb[0].mxu0
      %v988 = vpop.f32.mrb[0].mxu0
      %v989 = vadd.f32 %v314, %v988
      %v990 = vpop.f32.mrb[0].mxu0
      %991 = vmatprep.mubr.bf16.mxu0 0
      %992 = vmatmul.mubr.bf16.gmra.mrb[0].mxu0 %v698
      %v993 = vpop.f32.mrb[0].mxu0
      %v994 = vadd.f32 %v314, %v993
      %v995 = vpop.f32.mrb[0].mxu0
      %v996 = vpop.f32.mrb[0].mxu0
      %v997 = vadd.f32 %v314, %v996
      %v998 = vpop.f32.mrb[0].mxu0
      %999 = vmatprep.mubr.bf16.mxu0 0
      %1000 = vmatmul.mubr.bf16.gmra.mrb[0].mxu0 %v701
      %v1001 = vpop.f32.mrb[0].mxu0
      %v1002 = vadd.f32 %v314, %v1001
      %v1003 = vpop.f32.mrb[0].mxu0
      %v1004 = vpop.f32.mrb[0].mxu0
      %v1005 = vadd.f32 %v314, %v1004
      %v1006 = vpop.f32.mrb[0].mxu0
      %1007 = vmatprep.mubr.bf16.mxu0 0
      %1008 = vmatmul.mubr.bf16.gmra.mrb[0].mxu0 %v704
      %v1009 = vpop.f32.mrb[0].mxu0
      %v1010 = vadd.f32 %v314, %v1009
      %v1011 = vpop.f32.mrb[0].mxu0
      %v1012 = vpop.f32.mrb[0].mxu0
      %v1013 = vadd.f32 %v314, %v1012
      %v1014 = vpop.f32.mrb[0].mxu0
      %1015 = vmatprep.mubr.bf16.mxu0 0
      %1016 = vmatmul.mubr.bf16.gmra.mrb[0].mxu0 %v707
      %v1017 = vpop.f32.mrb[0].mxu0
      %v1018 = vadd.f32 %v314, %v1017
      %v1019 = vpop.f32.mrb[0].mxu0
      %v1020 = vpop.f32.mrb[0].mxu0
      %v1021 = vadd.f32 %v314, %v1020
      %v1022 = vpop.f32.mrb[0].mxu0
      %1023 = vmatprep.mubr.bf16.mxu0 0
      %1024 = vmatmul.mubr.bf16.gmra.mrb[0].mxu0 %v710
      %v1025 = vpop.f32.mrb[0].mxu0
      %v1026 = vadd.f32 %v314, %v1025
      %v1027 = vpop.f32.mrb[0].mxu0
      %v1028 = vpop.f32.mrb[0].mxu0
      %v1029 = vadd.f32 %v314, %v1028
      %v1030 = vpop.f32.mrb[0].mxu0
      %1031 = vmatprep.mubr.bf16.mxu0 0
      %1032 = vmatmul.mubr.bf16.gmra.mrb[0].mxu0 %v713
      %v1033 = vpop.f32.mrb[0].mxu0
      %v1034 = vadd.f32 %v314, %v1033
      %v1035 = vpop.f32.mrb[0].mxu0
      %v1036 = vpop.f32.mrb[0].mxu0
      %v1037 = vadd.f32 %v314, %v1036
      %v1038 = vpop.f32.mrb[0].mxu0
      %1039 = vmatprep.mubr.bf16.mxu0 0
      %1040 = vmatmul.mubr.bf16.gmra.mrb[0].mxu0 %v716
      %v1041 = vpop.f32.mrb[0].mxu0
      %v1042 = vadd.f32 %v314, %v1041
      %v1043 = vpop.f32.mrb[0].mxu0
      %v1044 = vpop.f32.mrb[0].mxu0
      %v1045 = vadd.f32 %v314, %v1044
      %v1046 = vpop.f32.mrb[0].mxu0
      %1047 = vmatprep.mubr.bf16.mxu0 0
      %1048 = vmatmul.mubr.bf16.gmra.mrb[0].mxu0 %v719
      %v1049 = vpop.f32.mrb[0].mxu0
      %v1050 = vadd.f32 %v314, %v1049
      %v1051 = vpop.f32.mrb[0].mxu0
      %v1052 = vpop.f32.mrb[0].mxu0
      %v1053 = vadd.f32 %v314, %v1052
      %v1054 = vpop.f32.mrb[0].mxu0
      %1055 = vmatprep.mubr.bf16.mxu0 0
      %1056 = vmatmul.mubr.bf16.gmra.mrb[0].mxu0 %v722
      %v1057 = vpop.f32.mrb[0].mxu0
      %v1058 = vadd.f32 %v314, %v1057
      %v1059 = vpop.f32.mrb[0].mxu0
      %v1060 = vpop.f32.mrb[0].mxu0
      %v1061 = vadd.f32 %v314, %v1060
      %v1062 = vpop.f32.mrb[0].mxu0
      %1063 = vmatprep.mubr.bf16.mxu0 0
      %1064 = vmatmul.mubr.bf16.gmra.mrb[0].mxu0 %v725
      %v1065 = vpop.f32.mrb[0].mxu0
      %v1066 = vadd.f32 %v314, %v1065
      %v1067 = vpop.f32.mrb[0].mxu0
      %v1068 = vpop.f32.mrb[0].mxu0
      %v1069 = vadd.f32 %v314, %v1068
      %v1070 = vpop.f32.mrb[0].mxu0
      %1071 = vmatprep.mubr.bf16.mxu0 0
      %1072 = vmatmul.mubr.bf16.gmra.mrb[0].mxu0 %v728
      %v1073 = vpop.f32.mrb[0].mxu0
      %v1074 = vadd.f32 %v314, %v1073
      %v1075 = vpop.f32.mrb[0].mxu0
      %v1076 = vpop.f32.mrb[0].mxu0
      %v1077 = vadd.f32 %v314, %v1076
      %v1078 = vpop.f32.mrb[0].mxu0
      %1079 = vmatprep.mubr.bf16.mxu0 0
      %1080 = vmatmul.mubr.bf16.gmra.mrb[0].mxu0 %v731
      %v1081 = vpop.f32.mrb[0].mxu0
      %v1082 = vadd.f32 %v314, %v1081
      %v1083 = vpop.f32.mrb[0].mxu0
      %v1084 = vpop.f32.mrb[0].mxu0
      %v1085 = vadd.f32 %v314, %v1084
      %v1086 = vpop.f32.mrb[0].mxu0
      %1087 = vmatprep.mubr.bf16.mxu0 0
      %1088 = vmatmul.mubr.bf16.gmra.mrb[0].mxu0 %v734
      %v1089 = vpop.f32.mrb[0].mxu0
      %v1090 = vadd.f32 %v314, %v1089
      %v1091 = vpop.f32.mrb[0].mxu0
      %v1092 = vpop.f32.mrb[0].mxu0
      %v1093 = vadd.f32 %v314, %v1092
      %v1094 = vpop.f32.mrb[0].mxu0
      %1095 = vmatprep.mubr.bf16.mxu0 0
      %1096 = vmatmul.mubr.bf16.gmra.mrb[0].mxu0 %v737
      %v1097 = vpop.f32.mrb[0].mxu0
      %v1098 = vadd.f32 %v314, %v1097
      %v1099 = vpop.f32.mrb[0].mxu0
      %v1100 = vpop.f32.mrb[0].mxu0
      %v1101 = vadd.f32 %v314, %v1100
      %v1102 = vpop.f32.mrb[0].mxu0
      %1103 = vmatprep.mubr.bf16.mxu0 0
      %1104 = vmatmul.mubr.bf16.gmra.mrb[0].mxu0 %v740
      %v1105 = vpop.f32.mrb[0].mxu0
      %v1106 = vadd.f32 %v314, %v1105
      %v1107 = vpop.f32.mrb[0].mxu0
      %v1108 = vpop.f32.mrb[0].mxu0
      %v1109 = vadd.f32 %v314, %v1108
      %v1110 = vpop.f32.mrb[0].mxu0
      %1111 = vmatprep.mubr.bf16.mxu0 0
      %1112 = vmatmul.mubr.bf16.gmra.mrb[0].mxu0 %v743
      %v1113 = vpop.f32.mrb[0].mxu0
      %v1114 = vadd.f32 %v314, %v1113
      %v1115 = vpop.f32.mrb[0].mxu0
      %v1116 = vpop.f32.mrb[0].mxu0
      %v1117 = vadd.f32 %v314, %v1116
      %v1118 = vpop.f32.mrb[0].mxu0
      %1119 = vmatprep.mubr.bf16.mxu0 0
      %1120 = vmatmul.mubr.bf16.gmra.mrb[0].mxu0 %v746
      %v1121 = vpop.f32.mrb[0].mxu0
      %v1122 = vadd.f32 %v314, %v1121
      %v1123 = vpop.f32.mrb[0].mxu0
      %v1124 = vpop.f32.mrb[0].mxu0
      %v1125 = vadd.f32 %v314, %v1124
      %v1126 = vpop.f32.mrb[0].mxu0
      %1127 = vmatprep.mubr.bf16.mxu0 0
      %1128 = vmatmul.mubr.bf16.gmra.mrb[0].mxu0 %v749
      %v1129 = vpop.f32.mrb[0].mxu0
      %v1130 = vadd.f32 %v314, %v1129
      %v1131 = vpop.f32.mrb[0].mxu0
      %v1132 = vpop.f32.mrb[0].mxu0
      %v1133 = vadd.f32 %v314, %v1132
      %v1134 = vpop.f32.mrb[0].mxu0
      %1135 = vmatprep.mubr.bf16.mxu0 0
      %1136 = vmatmul.mubr.bf16.gmra.mrb[0].mxu0 %v752
      %v1137 = vpop.f32.mrb[0].mxu0
      %v1138 = vadd.f32 %v314, %v1137
      %v1139 = vpop.f32.mrb[0].mxu0
      %v1140 = vpop.f32.mrb[0].mxu0
      %v1141 = vadd.f32 %v314, %v1140
      %v1142 = vpop.f32.mrb[0].mxu0
      %1143 = vmatprep.mubr.bf16.mxu0 0
      %1144 = vmatmul.mubr.bf16.gmra.mrb[0].mxu0 %v755
      %v1145 = vpop.f32.mrb[0].mxu0
      %v1146 = vadd.f32 %v314, %v1145
      %v1147 = vpop.f32.mrb[0].mxu0
      %v1148 = vpop.f32.mrb[0].mxu0
      %v1149 = vadd.f32 %v314, %v1148
      %v1150 = vpop.f32.mrb[0].mxu0
      %1151 = vmatprep.mubr.bf16.mxu0 0
      %1152 = vmatmul.mubr.bf16.gmra.mrb[0].mxu0 %v758
      %v1153 = vpop.f32.mrb[0].mxu0
      %v1154 = vadd.f32 %v314, %v1153
      %v1155 = vpop.f32.mrb[0].mxu0
      %v1156 = vpop.f32.mrb[0].mxu0
      %v1157 = vadd.f32 %v314, %v1156
      %v1158 = vpop.f32.mrb[0].mxu0
      %1159 = vmatprep.mubr.bf16.mxu0 0
      %1160 = vmatmul.mubr.bf16.gmra.mrb[0].mxu0 %v761
      %v1161 = vpop.f32.mrb[0].mxu0
      %v1162 = vadd.f32 %v314, %v1161
      %v1163 = vpop.f32.mrb[0].mxu0
      %v1164 = vpop.f32.mrb[0].mxu0
      %v1165 = vadd.f32 %v314, %v1164
      %v1166 = vpop.f32.mrb[0].mxu0
      %1167 = vmatprep.mubr.bf16.mxu0 0
      %1168 = vmatmul.mubr.bf16.gmra.mrb[0].mxu0 %v764
      %v1169 = vpop.f32.mrb[0].mxu0
      %v1170 = vadd.f32 %v314, %v1169
      %v1171 = vpop.f32.mrb[0].mxu0
      %v1172 = vpop.f32.mrb[0].mxu0
      %v1173 = vadd.f32 %v314, %v1172
      %v1174 = vpop.f32.mrb[0].mxu0
      %1175 = vmatprep.mubr.bf16.mxu0 0
      %1176 = vmatmul.mubr.bf16.gmra.mrb[0].mxu0 %v767
      %v1177 = vpop.f32.mrb[0].mxu0
      %v1178 = vadd.f32 %v314, %v1177
      %v1179 = vpop.f32.mrb[0].mxu0
      %v1180 = vpop.f32.mrb[0].mxu0
      %v1181 = vadd.f32 %v314, %v1180
      %v1182 = vpop.f32.mrb[0].mxu0
      %1183 = vmatprep.mubr.bf16.mxu0 0
      %1184 = vmatmul.mubr.bf16.gmra.mrb[0].mxu0 %v770
      %v1185 = vpop.f32.mrb[0].mxu0
      %v1186 = vadd.f32 %v314, %v1185
      %v1187 = vpop.f32.mrb[0].mxu0
      %v1188 = vpop.f32.mrb[0].mxu0
      %v1189 = vadd.f32 %v314, %v1188
      %v1190 = vpop.f32.mrb[0].mxu0
      %1191 = vmatprep.mubr.bf16.mxu0 0
      %1192 = vmatmul.mubr.bf16.gmra.mrb[0].mxu0 %v773
      %v1193 = vpop.f32.mrb[0].mxu0
      %v1194 = vadd.f32 %v314, %v1193
      %v1195 = vpop.f32.mrb[0].mxu0
      %v1196 = vpop.f32.mrb[0].mxu0
      %v1197 = vadd.f32 %v314, %v1196
      %v1198 = vpop.f32.mrb[0].mxu0
      %1199 = vmatprep.mubr.bf16.mxu0 0
      %1200 = vmatmul.mubr.bf16.gmra.mrb[0].mxu0 %v776
      %v1201 = vpop.f32.mrb[0].mxu0
      %v1202 = vadd.f32 %v314, %v1201
      %v1203 = vpop.f32.mrb[0].mxu0
      %v1204 = vpop.f32.mrb[0].mxu0
      %v1205 = vadd.f32 %v314, %v1204
      %v1206 = vpop.f32.mrb[0].mxu0
      %1207 = vmatprep.mubr.bf16.mxu0 0
      %1208 = vmatmul.mubr.bf16.gmra.mrb[0].mxu0 %v779
      %v1209 = vpop.f32.mrb[0].mxu0
      %v1210 = vadd.f32 %v314, %v1209
      %v1211 = vpop.f32.mrb[0].mxu0
      %v1212 = vpop.f32.mrb[0].mxu0
      %v1213 = vadd.f32 %v314, %v1212
      %v1214 = vpop.f32.mrb[0].mxu0
      %1215 = vmatprep.mubr.bf16.mxu0 0
      %1216 = vmatmul.mubr.bf16.gmra.mrb[0].mxu0 %v782
      %v1217 = vpop.f32.mrb[0].mxu0
      %v1218 = vadd.f32 %v314, %v1217
      %v1219 = vpop.f32.mrb[0].mxu0
      %v1220 = vpop.f32.mrb[0].mxu0
      %v1221 = vadd.f32 %v314, %v1220
      %v1222 = vpop.f32.mrb[0].mxu0
      %1223 = vmatprep.mubr.bf16.mxu0 0
      %1224 = vmatmul.mubr.bf16.gmra.mrb[0].mxu0 %v785
      %v1225 = vpop.f32.mrb[0].mxu0
      %v1226 = vadd.f32 %v314, %v1225
      %v1227 = vpop.f32.mrb[0].mxu0
      %v1228 = vpop.f32.mrb[0].mxu0
      %v1229 = vadd.f32 %v314, %v1228
      %v1230 = vpop.f32.mrb[0].mxu0
      %1231 = vmatprep.mubr.bf16.mxu0 0
      %1232 = vmatmul.mubr.bf16.gmra.mrb[0].mxu0 %v788
      %v1233 = vpop.f32.mrb[0].mxu0
      %v1234 = vadd.f32 %v314, %v1233
      %v1235 = vpop.f32.mrb[0].mxu0
      %v1236 = vpop.f32.mrb[0].mxu0
      %v1237 = vadd.f32 %v314, %v1236
      %v1238 = vpop.f32.mrb[0].mxu0
      %1239 = vmatprep.mubr.bf16.mxu0 0
      %1240 = vmatmul.mubr.bf16.gmra.mrb[0].mxu0 %v791
      %v1241 = vpop.f32.mrb[0].mxu0
      %v1242 = vadd.f32 %v314, %v1241
      %v1243 = vpop.f32.mrb[0].mxu0
      %v1244 = vpop.f32.mrb[0].mxu0
      %v1245 = vadd.f32 %v314, %v1244
      %v1246 = vpop.f32.mrb[0].mxu0
      %1247 = vmatprep.mubr.bf16.mxu0 0
      %1248 = vmatmul.mubr.bf16.gmra.mrb[0].mxu0 %v794
      %v1249 = vpop.f32.mrb[0].mxu0
      %v1250 = vadd.f32 %v314, %v1249
      %v1251 = vpop.f32.mrb[0].mxu0
      %v1252 = vpop.f32.mrb[0].mxu0
      %v1253 = vadd.f32 %v314, %v1252
      %v1254 = vpop.f32.mrb[0].mxu0
      %1255 = vmatprep.mubr.bf16.mxu0 0
      %1256 = vmatmul.mubr.bf16.gmra.mrb[0].mxu0 %v797
      %v1257 = vpop.f32.mrb[0].mxu0
      %v1258 = vadd.f32 %v314, %v1257
      %v1259 = vpop.f32.mrb[0].mxu0
      %v1260 = vpop.f32.mrb[0].mxu0
      %v1261 = vadd.f32 %v314, %v1260
      %v1262 = vpop.f32.mrb[0].mxu0
      %1263 = vmatprep.mubr.bf16.mxu0 0
      %1264 = vmatmul.mubr.bf16.gmra.mrb[0].mxu0 %v800
      %v1265 = vpop.f32.mrb[0].mxu0
      %v1266 = vadd.f32 %v314, %v1265
      %v1267 = vpop.f32.mrb[0].mxu0
      %v1268 = vpop.f32.mrb[0].mxu0
      %v1269 = vadd.f32 %v314, %v1268
      %v1270 = vpop.f32.mrb[0].mxu0
      %1271 = vmatprep.mubr.bf16.mxu0 0
      %1272 = vmatmul.mubr.bf16.gmra.mrb[0].mxu0 %v803
      %v1273 = vpop.f32.mrb[0].mxu0
      %v1274 = vadd.f32 %v314, %v1273
      %v1275 = vpop.f32.mrb[0].mxu0
      %v1276 = vpop.f32.mrb[0].mxu0
      %v1277 = vadd.f32 %v314, %v1276
      %v1278 = vpop.f32.mrb[0].mxu0
      %1279 = vmatprep.mubr.bf16.mxu0 0
      %1280 = vmatmul.mubr.bf16.gmra.mrb[0].mxu0 %v806
      %v1281 = vpop.f32.mrb[0].mxu0
      %v1282 = vadd.f32 %v314, %v1281
      %v1283 = vpop.f32.mrb[0].mxu0
      %v1284 = vpop.f32.mrb[0].mxu0
      %v1285 = vadd.f32 %v314, %v1284
      %v1286 = vpop.f32.mrb[0].mxu0
      %1287 = vmatprep.mubr.bf16.mxu0 0
      %1288 = vmatmul.mubr.bf16.gmra.mrb[0].mxu0 %v809
      %v1289 = vpop.f32.mrb[0].mxu0
      %v1290 = vadd.f32 %v314, %v1289
      %v1291 = vpop.f32.mrb[0].mxu0
      %v1292 = vpop.f32.mrb[0].mxu0
      %v1293 = vadd.f32 %v314, %v1292
      %v1294 = vpop.f32.mrb[0].mxu0
      %1295 = vmatprep.mubr.bf16.mxu0 0
      %1296 = vmatmul.mubr.bf16.gmra.mrb[0].mxu0 %v812
      %v1297 = vpop.f32.mrb[0].mxu0
      %v1298 = vadd.f32 %v314, %v1297
      %v1299 = vpop.f32.mrb[0].mxu0
      %v1300 = vpop.f32.mrb[0].mxu0
      %v1301 = vadd.f32 %v314, %v1300
      %v1302 = vpop.f32.mrb[0].mxu0
      %1303 = vmatprep.mubr.bf16.mxu0 0
      %1304 = vmatmul.mubr.bf16.gmra.mrb[0].mxu0 %v815
      %v1305 = vpop.f32.mrb[0].mxu0
      %v1306 = vadd.f32 %v314, %v1305
      %v1307 = vpop.f32.mrb[0].mxu0
      %v1308 = vpop.f32.mrb[0].mxu0
      %v1309 = vadd.f32 %v314, %v1308
      %v1310 = vpop.f32.mrb[0].mxu0
      %1311 = vmatprep.mubr.bf16.mxu0 0
      %1312 = vmatmul.mubr.bf16.gmra.mrb[0].mxu0 %v818
      %v1313 = vpop.f32.mrb[0].mxu0
      %v1314 = vadd.f32 %v314, %v1313
      %v1315 = vpop.f32.mrb[0].mxu0
      %v1316 = vpop.f32.mrb[0].mxu0
      %v1317 = vadd.f32 %v314, %v1316
      %v1318 = vpop.f32.mrb[0].mxu0
      %1319 = vmatprep.mubr.bf16.mxu0 0
      %1320 = vmatmul.mubr.bf16.gmra.mrb[0].mxu0 %v821
      %v1321 = vpop.f32.mrb[0].mxu0
      %v1322 = vadd.f32 %v314, %v1321
      %v1323 = vpop.f32.mrb[0].mxu0
      %v1324 = vpop.f32.mrb[0].mxu0
      %v1325 = vadd.f32 %v314, %v1324
      %v1326 = vpop.f32.mrb[0].mxu0
      %1327 = vmatprep.mubr.bf16.mxu0 0
      %1328 = vmatmul.mubr.bf16.gmra.mrb[0].mxu0 %v824
      %v1329 = vpop.f32.mrb[0].mxu0
      %v1330 = vadd.f32 %v314, %v1329
      %v1331 = vpop.f32.mrb[0].mxu0
      %v1332 = vpop.f32.mrb[0].mxu0
      %v1333 = vadd.f32 %v314, %v1332
      %v1334 = vpop.f32.mrb[0].mxu0
      %1335 = vmatprep.mubr.bf16.mxu0 0
      %1336 = vmatmul.mubr.bf16.gmra.mrb[0].mxu0 %v827
      %v1337 = vpop.f32.mrb[0].mxu0
      %v1338 = vadd.f32 %v314, %v1337
      %v1339 = vpop.f32.mrb[0].mxu0
      %v1340 = vpop.f32.mrb[0].mxu0
      %v1341 = vadd.f32 %v314, %v1340
      %v1342 = vpop.f32.mrb[0].mxu0
      %1343 = vmatprep.mubr.bf16.mxu0 0
      %1344 = vmatmul.mubr.bf16.gmra.mrb[0].mxu0 %v830
      %v1345 = vpop.f32.mrb[0].mxu0
      %v1346 = vadd.f32 %v314, %v1345
      %v1347 = vpop.f32.mrb[0].mxu0
      %v1348 = vpop.f32.mrb[0].mxu0
      %v1349 = vadd.f32 %v314, %v1348
      %v1350 = vpop.f32.mrb[0].mxu0
      %1351 = vmatprep.mubr.bf16.mxu0 0
      %1352 = vmatmul.mubr.bf16.gmra.mrb[0].mxu0 %v833
      %v1353 = vpop.f32.mrb[0].mxu0
      %v1354 = vadd.f32 %v314, %v1353
      %v1355 = vpop.f32.mrb[0].mxu0
      %v1356 = vpop.f32.mrb[0].mxu0
      %v1357 = vadd.f32 %v314, %v1356
      %v1358 = vpop.f32.mrb[0].mxu0
      %1359 = vmatprep.mubr.bf16.mxu0 0
      %1360 = vmatmul.mubr.bf16.gmra.mrb[0].mxu0 %v836
      %v1361 = vpop.f32.mrb[0].mxu0
      %v1362 = vadd.f32 %v314, %v1361
      %v1363 = vpop.f32.mrb[0].mxu0
      %v1364 = vpop.f32.mrb[0].mxu0
      %v1365 = vadd.f32 %v314, %v1364
      %v1366 = vpop.f32.mrb[0].mxu0
      %1367 = vmatprep.mubr.bf16.mxu0 0
      %1368 = vmatmul.mubr.bf16.gmra.mrb[0].mxu0 %v839
      %v1369 = vpop.f32.mrb[0].mxu0
      %v1370 = vadd.f32 %v314, %v1369
      %v1371 = vpop.f32.mrb[0].mxu0
      %v1372 = vpop.f32.mrb[0].mxu0
      %v1373 = vadd.f32 %v314, %v1372
      %v1374 = vpop.f32.mrb[0].mxu0
      %1375 = vmatprep.mubr.bf16.mxu0 0
      %1376 = vmatmul.mubr.bf16.gmra.mrb[0].mxu0 %v842
      %v1377 = vpop.f32.mrb[0].mxu0
      %v1378 = vadd.f32 %v314, %v1377
      %v1379 = vpop.f32.mrb[0].mxu0
      %v1380 = vpop.f32.mrb[0].mxu0
      %v1381 = vadd.f32 %v314, %v1380
      %v1382 = vpop.f32.mrb[0].mxu0
      %1383 = vmatprep.mubr.bf16.mxu0 0
      %1384 = vmatmul.mubr.bf16.gmra.mrb[0].mxu0 %v845
      %v1385 = vpop.f32.mrb[0].mxu0
      %v1386 = vadd.f32 %v314, %v1385
      %v1387 = vpop.f32.mrb[0].mxu0
      %v1388 = vpop.f32.mrb[0].mxu0
      %v1389 = vadd.f32 %v314, %v1388
      %v1390 = vpop.f32.mrb[0].mxu0
      %1391 = vdwg.mxu0
      %vm1392 = vcmp.ge.f32.partialorder %v882, 0.0
      %vm1393 = vcmp.ge.f32.partialorder %v885, 0.0
      %vm1394 = vcmp.ge.f32.partialorder %v890, 0.0
      %vm1395 = vcmp.ge.f32.partialorder %v893, 0.0
      %vm1396 = vcmp.ge.f32.partialorder %v898, 0.0
      %vm1397 = vcmp.ge.f32.partialorder %v901, 0.0
      %vm1398 = vcmp.ge.f32.partialorder %v906, 0.0
      %vm1399 = vcmp.ge.f32.partialorder %v909, 0.0
      %vm1400 = vcmp.ge.f32.partialorder %v914, 0.0
      %vm1401 = vcmp.ge.f32.partialorder %v917, 0.0
      %vm1402 = vcmp.ge.f32.partialorder %v922, 0.0
      %vm1403 = vcmp.ge.f32.partialorder %v925, 0.0
      %vm1404 = vcmp.ge.f32.partialorder %v930, 0.0
      %vm1405 = vcmp.ge.f32.partialorder %v933, 0.0
      %vm1406 = vcmp.ge.f32.partialorder %v938, 0.0
      %vm1407 = vcmp.ge.f32.partialorder %v941, 0.0
      %vm1408 = vcmp.ge.f32.partialorder %v946, 0.0
      %vm1409 = vcmp.ge.f32.partialorder %v949, 0.0
      %vm1410 = vcmp.ge.f32.partialorder %v954, 0.0
      %vm1411 = vcmp.ge.f32.partialorder %v957, 0.0
      %vm1412 = vcmp.ge.f32.partialorder %v962, 0.0
      %vm1413 = vcmp.ge.f32.partialorder %v965, 0.0
      %vm1414 = vcmp.ge.f32.partialorder %v970, 0.0
      %vm1415 = vcmp.ge.f32.partialorder %v973, 0.0
      %vm1416 = vcmp.ge.f32.partialorder %v978, 0.0
      %vm1417 = vcmp.ge.f32.partialorder %v981, 0.0
      %vm1418 = vcmp.ge.f32.partialorder %v986, 0.0
      %vm1419 = vcmp.ge.f32.partialorder %v989, 0.0
      %vm1420 = vcmp.ge.f32.partialorder %v994, 0.0
      %vm1421 = vcmp.ge.f32.partialorder %v997, 0.0
      %vm1422 = vcmp.ge.f32.partialorder %v1002, 0.0
      %vm1423 = vcmp.ge.f32.partialorder %v1005, 0.0
      %vm1424 = vcmp.ge.f32.partialorder %v1010, 0.0
      %vm1425 = vcmp.ge.f32.partialorder %v1013, 0.0
      %vm1426 = vcmp.ge.f32.partialorder %v1018, 0.0
      %vm1427 = vcmp.ge.f32.partialorder %v1021, 0.0
      %vm1428 = vcmp.ge.f32.partialorder %v1026, 0.0
      %vm1429 = vcmp.ge.f32.partialorder %v1029, 0.0
      %vm1430 = vcmp.ge.f32.partialorder %v1034, 0.0
      %vm1431 = vcmp.ge.f32.partialorder %v1037, 0.0
      %vm1432 = vcmp.ge.f32.partialorder %v1042, 0.0
      %vm1433 = vcmp.ge.f32.partialorder %v1045, 0.0
      %vm1434 = vcmp.ge.f32.partialorder %v1050, 0.0
      %vm1435 = vcmp.ge.f32.partialorder %v1053, 0.0
      %vm1436 = vcmp.ge.f32.partialorder %v1058, 0.0
      %vm1437 = vcmp.ge.f32.partialorder %v1061, 0.0
      %vm1438 = vcmp.ge.f32.partialorder %v1066, 0.0
      %vm1439 = vcmp.ge.f32.partialorder %v1069, 0.0
      %vm1440 = vcmp.ge.f32.partialorder %v1074, 0.0
      %vm1441 = vcmp.ge.f32.partialorder %v1077, 0.0
      %vm1442 = vcmp.ge.f32.partialorder %v1082, 0.0
      %vm1443 = vcmp.ge.f32.partialorder %v1085, 0.0
      %vm1444 = vcmp.ge.f32.partialorder %v1090, 0.0
      %vm1445 = vcmp.ge.f32.partialorder %v1093, 0.0
      %vm1446 = vcmp.ge.f32.partialorder %v1098, 0.0
      %vm1447 = vcmp.ge.f32.partialorder %v1101, 0.0
      %vm1448 = vcmp.ge.f32.partialorder %v1106, 0.0
      %vm1449 = vcmp.ge.f32.partialorder %v1109, 0.0
      %vm1450 = vcmp.ge.f32.partialorder %v1114, 0.0
      %vm1451 = vcmp.ge.f32.partialorder %v1117, 0.0
      %vm1452 = vcmp.ge.f32.partialorder %v1122, 0.0
      %vm1453 = vcmp.ge.f32.partialorder %v1125, 0.0
      %vm1454 = vcmp.ge.f32.partialorder %v1130, 0.0
      %vm1455 = vcmp.ge.f32.partialorder %v1133, 0.0
      %vm1456 = vcmp.ge.f32.partialorder %v1138, 0.0
      %vm1457 = vcmp.ge.f32.partialorder %v1141, 0.0
      %vm1458 = vcmp.ge.f32.partialorder %v1146, 0.0
      %vm1459 = vcmp.ge.f32.partialorder %v1149, 0.0
      %vm1460 = vcmp.ge.f32.partialorder %v1154, 0.0
      %vm1461 = vcmp.ge.f32.partialorder %v1157, 0.0
      %vm1462 = vcmp.ge.f32.partialorder %v1162, 0.0
      %vm1463 = vcmp.ge.f32.partialorder %v1165, 0.0
      %vm1464 = vcmp.ge.f32.partialorder %v1170, 0.0
      %vm1465 = vcmp.ge.f32.partialorder %v1173, 0.0
      %vm1466 = vcmp.ge.f32.partialorder %v1178, 0.0
      %vm1467 = vcmp.ge.f32.partialorder %v1181, 0.0
      %vm1468 = vcmp.ge.f32.partialorder %v1186, 0.0
      %vm1469 = vcmp.ge.f32.partialorder %v1189, 0.0
      %vm1470 = vcmp.ge.f32.partialorder %v1194, 0.0
      %vm1471 = vcmp.ge.f32.partialorder %v1197, 0.0
      %vm1472 = vcmp.ge.f32.partialorder %v1202, 0.0
      %vm1473 = vcmp.ge.f32.partialorder %v1205, 0.0
      %vm1474 = vcmp.ge.f32.partialorder %v1210, 0.0
      %vm1475 = vcmp.ge.f32.partialorder %v1213, 0.0
      %vm1476 = vcmp.ge.f32.partialorder %v1218, 0.0
      %vm1477 = vcmp.ge.f32.partialorder %v1221, 0.0
      %vm1478 = vcmp.ge.f32.partialorder %v1226, 0.0
      %vm1479 = vcmp.ge.f32.partialorder %v1229, 0.0
      %vm1480 = vcmp.ge.f32.partialorder %v1234, 0.0
      %vm1481 = vcmp.ge.f32.partialorder %v1237, 0.0
      %vm1482 = vcmp.ge.f32.partialorder %v1242, 0.0
      %vm1483 = vcmp.ge.f32.partialorder %v1245, 0.0
      %vm1484 = vcmp.ge.f32.partialorder %v1250, 0.0
      %vm1485 = vcmp.ge.f32.partialorder %v1253, 0.0
      %vm1486 = vcmp.ge.f32.partialorder %v1258, 0.0
      %vm1487 = vcmp.ge.f32.partialorder %v1261, 0.0
      %vm1488 = vcmp.ge.f32.partialorder %v1266, 0.0
      %vm1489 = vcmp.ge.f32.partialorder %v1269, 0.0
      %vm1490 = vcmp.ge.f32.partialorder %v1274, 0.0
      %vm1491 = vcmp.ge.f32.partialorder %v1277, 0.0
      %vm1492 = vcmp.ge.f32.partialorder %v1282, 0.0
      %vm1493 = vcmp.ge.f32.partialorder %v1285, 0.0
      %vm1494 = vcmp.ge.f32.partialorder %v1290, 0.0
      %vm1495 = vcmp.ge.f32.partialorder %v1293, 0.0
      %vm1496 = vcmp.ge.f32.partialorder %v1298, 0.0
      %vm1497 = vcmp.ge.f32.partialorder %v1301, 0.0
      %vm1498 = vcmp.ge.f32.partialorder %v1306, 0.0
      %vm1499 = vcmp.ge.f32.partialorder %v1309, 0.0
      %vm1500 = vcmp.ge.f32.partialorder %v1314, 0.0
      %vm1501 = vcmp.ge.f32.partialorder %v1317, 0.0
      %vm1502 = vcmp.ge.f32.partialorder %v1322, 0.0
      %vm1503 = vcmp.ge.f32.partialorder %v1325, 0.0
      %vm1504 = vcmp.ge.f32.partialorder %v1330, 0.0
      %vm1505 = vcmp.ge.f32.partialorder %v1333, 0.0
      %vm1506 = vcmp.ge.f32.partialorder %v1338, 0.0
      %vm1507 = vcmp.ge.f32.partialorder %v1341, 0.0
      %vm1508 = vcmp.ge.f32.partialorder %v1346, 0.0
      %vm1509 = vcmp.ge.f32.partialorder %v1349, 0.0
      %vm1510 = vcmp.ge.f32.partialorder %v1354, 0.0
      %vm1511 = vcmp.ge.f32.partialorder %v1357, 0.0
      %vm1512 = vcmp.ge.f32.partialorder %v1362, 0.0
      %vm1513 = vcmp.ge.f32.partialorder %v1365, 0.0
      %vm1514 = vcmp.ge.f32.partialorder %v1370, 0.0
      %vm1515 = vcmp.ge.f32.partialorder %v1373, 0.0
      %vm1516 = vcmp.ge.f32.partialorder %v1378, 0.0
      %vm1517 = vcmp.ge.f32.partialorder %v1381, 0.0
      %vm1518 = vcmp.ge.f32.partialorder %v1386, 0.0
      %vm1519 = vcmp.ge.f32.partialorder %v1389, 0.0
      %v1520 = vmul.f32 %v882, 0.2
      %v1521 = vmul.f32 %v885, 0.2
      %v1522 = vmul.f32 %v890, 0.2
      %v1523 = vmul.f32 %v893, 0.2
      %v1524 = vmul.f32 %v898, 0.2
      %v1525 = vmul.f32 %v901, 0.2
      %v1526 = vmul.f32 %v906, 0.2
      %v1527 = vmul.f32 %v909, 0.2
      %v1528 = vmul.f32 %v914, 0.2
      %v1529 = vmul.f32 %v917, 0.2
      %v1530 = vmul.f32 %v922, 0.2
      %v1531 = vmul.f32 %v925, 0.2
      %v1532 = vmul.f32 %v930, 0.2
      %v1533 = vmul.f32 %v933, 0.2
      %v1534 = vmul.f32 %v938, 0.2
      %v1535 = vmul.f32 %v941, 0.2
      %v1536 = vmul.f32 %v946, 0.2
      %v1537 = vmul.f32 %v949, 0.2
      %v1538 = vmul.f32 %v954, 0.2
      %v1539 = vmul.f32 %v957, 0.2
      %v1540 = vmul.f32 %v962, 0.2
      %v1541 = vmul.f32 %v965, 0.2
      %v1542 = vmul.f32 %v970, 0.2
      %v1543 = vmul.f32 %v973, 0.2
      %v1544 = vmul.f32 %v978, 0.2
      %v1545 = vmul.f32 %v981, 0.2
      %v1546 = vmul.f32 %v986, 0.2
      %v1547 = vmul.f32 %v989, 0.2
      %v1548 = vmul.f32 %v994, 0.2
      %v1549 = vmul.f32 %v997, 0.2
      %v1550 = vmul.f32 %v1002, 0.2
      %v1551 = vmul.f32 %v1005, 0.2
      %v1552 = vmul.f32 %v1010, 0.2
      %v1553 = vmul.f32 %v1013, 0.2
      %v1554 = vmul.f32 %v1018, 0.2
      %v1555 = vmul.f32 %v1021, 0.2
      %v1556 = vmul.f32 %v1026, 0.2
      %v1557 = vmul.f32 %v1029, 0.2
      %v1558 = vmul.f32 %v1034, 0.2
      %v1559 = vmul.f32 %v1037, 0.2
      %v1560 = vmul.f32 %v1042, 0.2
      %v1561 = vmul.f32 %v1045, 0.2
      %v1562 = vmul.f32 %v1050, 0.2
      %v1563 = vmul.f32 %v1053, 0.2
      %v1564 = vmul.f32 %v1058, 0.2
      %v1565 = vmul.f32 %v1061, 0.2
      %v1566 = vmul.f32 %v1066, 0.2
      %v1567 = vmul.f32 %v1069, 0.2
      %v1568 = vmul.f32 %v1074, 0.2
      %v1569 = vmul.f32 %v1077, 0.2
      %v1570 = vmul.f32 %v1082, 0.2
      %v1571 = vmul.f32 %v1085, 0.2
      %v1572 = vmul.f32 %v1090, 0.2
      %v1573 = vmul.f32 %v1093, 0.2
      %v1574 = vmul.f32 %v1098, 0.2
      %v1575 = vmul.f32 %v1101, 0.2
      %v1576 = vmul.f32 %v1106, 0.2
      %v1577 = vmul.f32 %v1109, 0.2
      %v1578 = vmul.f32 %v1114, 0.2
      %v1579 = vmul.f32 %v1117, 0.2
      %v1580 = vmul.f32 %v1122, 0.2
      %v1581 = vmul.f32 %v1125, 0.2
      %v1582 = vmul.f32 %v1130, 0.2
      %v1583 = vmul.f32 %v1133, 0.2
      %v1584 = vmul.f32 %v1138, 0.2
      %v1585 = vmul.f32 %v1141, 0.2
      %v1586 = vmul.f32 %v1146, 0.2
      %v1587 = vmul.f32 %v1149, 0.2
      %v1588 = vmul.f32 %v1154, 0.2
      %v1589 = vmul.f32 %v1157, 0.2
      %v1590 = vmul.f32 %v1162, 0.2
      %v1591 = vmul.f32 %v1165, 0.2
      %v1592 = vmul.f32 %v1170, 0.2
      %v1593 = vmul.f32 %v1173, 0.2
      %v1594 = vmul.f32 %v1178, 0.2
      %v1595 = vmul.f32 %v1181, 0.2
      %v1596 = vmul.f32 %v1186, 0.2
      %v1597 = vmul.f32 %v1189, 0.2
      %v1598 = vmul.f32 %v1194, 0.2
      %v1599 = vmul.f32 %v1197, 0.2
      %v1600 = vmul.f32 %v1202, 0.2
      %v1601 = vmul.f32 %v1205, 0.2
      %v1602 = vmul.f32 %v1210, 0.2
      %v1603 = vmul.f32 %v1213, 0.2
      %v1604 = vmul.f32 %v1218, 0.2
      %v1605 = vmul.f32 %v1221, 0.2
      %v1606 = vmul.f32 %v1226, 0.2
      %v1607 = vmul.f32 %v1229, 0.2
      %v1608 = vmul.f32 %v1234, 0.2
      %v1609 = vmul.f32 %v1237, 0.2
      %v1610 = vmul.f32 %v1242, 0.2
      %v1611 = vmul.f32 %v1245, 0.2
      %v1612 = vmul.f32 %v1250, 0.2
      %v1613 = vmul.f32 %v1253, 0.2
      %v1614 = vmul.f32 %v1258, 0.2
      %v1615 = vmul.f32 %v1261, 0.2
      %v1616 = vmul.f32 %v1266, 0.2
      %v1617 = vmul.f32 %v1269, 0.2
      %v1618 = vmul.f32 %v1274, 0.2
      %v1619 = vmul.f32 %v1277, 0.2
      %v1620 = vmul.f32 %v1282, 0.2
      %v1621 = vmul.f32 %v1285, 0.2
      %v1622 = vmul.f32 %v1290, 0.2
      %v1623 = vmul.f32 %v1293, 0.2
      %v1624 = vmul.f32 %v1298, 0.2
      %v1625 = vmul.f32 %v1301, 0.2
      %v1626 = vmul.f32 %v1306, 0.2
      %v1627 = vmul.f32 %v1309, 0.2
      %v1628 = vmul.f32 %v1314, 0.2
      %v1629 = vmul.f32 %v1317, 0.2
      %v1630 = vmul.f32 %v1322, 0.2
      %v1631 = vmul.f32 %v1325, 0.2
      %v1632 = vmul.f32 %v1330, 0.2
      %v1633 = vmul.f32 %v1333, 0.2
      %v1634 = vmul.f32 %v1338, 0.2
      %v1635 = vmul.f32 %v1341, 0.2
      %v1636 = vmul.f32 %v1346, 0.2
      %v1637 = vmul.f32 %v1349, 0.2
      %v1638 = vmul.f32 %v1354, 0.2
      %v1639 = vmul.f32 %v1357, 0.2
      %v1640 = vmul.f32 %v1362, 0.2
      %v1641 = vmul.f32 %v1365, 0.2
      %v1642 = vmul.f32 %v1370, 0.2
      %v1643 = vmul.f32 %v1373, 0.2
      %v1644 = vmul.f32 %v1378, 0.2
      %v1645 = vmul.f32 %v1381, 0.2
      %v1646 = vmul.f32 %v1386, 0.2
      %v1647 = vmul.f32 %v1389, 0.2
      %v1648 = vsel %vm1392, %v882, %v1520
      %v1649 = vsel %vm1393, %v885, %v1521
      %v1650 = vsel %vm1394, %v890, %v1522
      %v1651 = vsel %vm1395, %v893, %v1523
      %v1652 = vsel %vm1396, %v898, %v1524
      %v1653 = vsel %vm1397, %v901, %v1525
      %v1654 = vsel %vm1398, %v906, %v1526
      %v1655 = vsel %vm1399, %v909, %v1527
      %v1656 = vsel %vm1400, %v914, %v1528
      %v1657 = vsel %vm1401, %v917, %v1529
      %v1658 = vsel %vm1402, %v922, %v1530
      %v1659 = vsel %vm1403, %v925, %v1531
      %v1660 = vsel %vm1404, %v930, %v1532
      %v1661 = vsel %vm1405, %v933, %v1533
      %v1662 = vsel %vm1406, %v938, %v1534
      %v1663 = vsel %vm1407, %v941, %v1535
      %v1664 = vsel %vm1408, %v946, %v1536
      %v1665 = vsel %vm1409, %v949, %v1537
      %v1666 = vsel %vm1410, %v954, %v1538
      %v1667 = vsel %vm1411, %v957, %v1539
      %v1668 = vsel %vm1412, %v962, %v1540
      %v1669 = vsel %vm1413, %v965, %v1541
      %v1670 = vsel %vm1414, %v970, %v1542
      %v1671 = vsel %vm1415, %v973, %v1543
      %v1672 = vsel %vm1416, %v978, %v1544
      %v1673 = vsel %vm1417, %v981, %v1545
      %v1674 = vsel %vm1418, %v986, %v1546
      %v1675 = vsel %vm1419, %v989, %v1547
      %v1676 = vsel %vm1420, %v994, %v1548
      %v1677 = vsel %vm1421, %v997, %v1549
      %v1678 = vsel %vm1422, %v1002, %v1550
      %v1679 = vsel %vm1423, %v1005, %v1551
      %v1680 = vsel %vm1424, %v1010, %v1552
      %v1681 = vsel %vm1425, %v1013, %v1553
      %v1682 = vsel %vm1426, %v1018, %v1554
      %v1683 = vsel %vm1427, %v1021, %v1555
      %v1684 = vsel %vm1428, %v1026, %v1556
      %v1685 = vsel %vm1429, %v1029, %v1557
      %v1686 = vsel %vm1430, %v1034, %v1558
      %v1687 = vsel %vm1431, %v1037, %v1559
      %v1688 = vsel %vm1432, %v1042, %v1560
      %v1689 = vsel %vm1433, %v1045, %v1561
      %v1690 = vsel %vm1434, %v1050, %v1562
      %v1691 = vsel %vm1435, %v1053, %v1563
      %v1692 = vsel %vm1436, %v1058, %v1564
      %v1693 = vsel %vm1437, %v1061, %v1565
      %v1694 = vsel %vm1438, %v1066, %v1566
      %v1695 = vsel %vm1439, %v1069, %v1567
      %v1696 = vsel %vm1440, %v1074, %v1568
      %v1697 = vsel %vm1441, %v1077, %v1569
      %v1698 = vsel %vm1442, %v1082, %v1570
      %v1699 = vsel %vm1443, %v1085, %v1571
      %v1700 = vsel %vm1444, %v1090, %v1572
      %v1701 = vsel %vm1445, %v1093, %v1573
      %v1702 = vsel %vm1446, %v1098, %v1574
      %v1703 = vsel %vm1447, %v1101, %v1575
      %v1704 = vsel %vm1448, %v1106, %v1576
      %v1705 = vsel %vm1449, %v1109, %v1577
      %v1706 = vsel %vm1450, %v1114, %v1578
      %v1707 = vsel %vm1451, %v1117, %v1579
      %v1708 = vsel %vm1452, %v1122, %v1580
      %v1709 = vsel %vm1453, %v1125, %v1581
      %v1710 = vsel %vm1454, %v1130, %v1582
      %v1711 = vsel %vm1455, %v1133, %v1583
      %v1712 = vsel %vm1456, %v1138, %v1584
      %v1713 = vsel %vm1457, %v1141, %v1585
      %v1714 = vsel %vm1458, %v1146, %v1586
      %v1715 = vsel %vm1459, %v1149, %v1587
      %v1716 = vsel %vm1460, %v1154, %v1588
      %v1717 = vsel %vm1461, %v1157, %v1589
      %v1718 = vsel %vm1462, %v1162, %v1590
      %v1719 = vsel %vm1463, %v1165, %v1591
      %v1720 = vsel %vm1464, %v1170, %v1592
      %v1721 = vsel %vm1465, %v1173, %v1593
      %v1722 = vsel %vm1466, %v1178, %v1594
      %v1723 = vsel %vm1467, %v1181, %v1595
      %v1724 = vsel %vm1468, %v1186, %v1596
      %v1725 = vsel %vm1469, %v1189, %v1597
      %v1726 = vsel %vm1470, %v1194, %v1598
      %v1727 = vsel %vm1471, %v1197, %v1599
      %v1728 = vsel %vm1472, %v1202, %v1600
      %v1729 = vsel %vm1473, %v1205, %v1601
      %v1730 = vsel %vm1474, %v1210, %v1602
      %v1731 = vsel %vm1475, %v1213, %v1603
      %v1732 = vsel %vm1476, %v1218, %v1604
      %v1733 = vsel %vm1477, %v1221, %v1605
      %v1734 = vsel %vm1478, %v1226, %v1606
      %v1735 = vsel %vm1479, %v1229, %v1607
      %v1736 = vsel %vm1480, %v1234, %v1608
      %v1737 = vsel %vm1481, %v1237, %v1609
      %v1738 = vsel %vm1482, %v1242, %v1610
      %v1739 = vsel %vm1483, %v1245, %v1611
      %v1740 = vsel %vm1484, %v1250, %v1612
      %v1741 = vsel %vm1485, %v1253, %v1613
      %v1742 = vsel %vm1486, %v1258, %v1614
      %v1743 = vsel %vm1487, %v1261, %v1615
      %v1744 = vsel %vm1488, %v1266, %v1616
      %v1745 = vsel %vm1489, %v1269, %v1617
      %v1746 = vsel %vm1490, %v1274, %v1618
      %v1747 = vsel %vm1491, %v1277, %v1619
      %v1748 = vsel %vm1492, %v1282, %v1620
      %v1749 = vsel %vm1493, %v1285, %v1621
      %v1750 = vsel %vm1494, %v1290, %v1622
      %v1751 = vsel %vm1495, %v1293, %v1623
      %v1752 = vsel %vm1496, %v1298, %v1624
      %v1753 = vsel %vm1497, %v1301, %v1625
      %v1754 = vsel %vm1498, %v1306, %v1626
      %v1755 = vsel %vm1499, %v1309, %v1627
      %v1756 = vsel %vm1500, %v1314, %v1628
      %v1757 = vsel %vm1501, %v1317, %v1629
      %v1758 = vsel %vm1502, %v1322, %v1630
      %v1759 = vsel %vm1503, %v1325, %v1631
      %v1760 = vsel %vm1504, %v1330, %v1632
      %v1761 = vsel %vm1505, %v1333, %v1633
      %v1762 = vsel %vm1506, %v1338, %v1634
      %v1763 = vsel %vm1507, %v1341, %v1635
      %v1764 = vsel %vm1508, %v1346, %v1636
      %v1765 = vsel %vm1509, %v1349, %v1637
      %v1766 = vsel %vm1510, %v1354, %v1638
      %v1767 = vsel %vm1511, %v1357, %v1639
      %v1768 = vsel %vm1512, %v1362, %v1640
      %v1769 = vsel %vm1513, %v1365, %v1641
      %v1770 = vsel %vm1514, %v1370, %v1642
      %v1771 = vsel %vm1515, %v1373, %v1643
      %v1772 = vsel %vm1516, %v1378, %v1644
      %v1773 = vsel %vm1517, %v1381, %v1645
      %v1774 = vsel %vm1518, %v1386, %v1646
      %v1775 = vsel %vm1519, %v1389, %v1647
      %v1776 = vpack.c.bf16 %v1649, %v1648
      %v1777 = vpack.c.bf16 %v1651, %v1650
      %v1778 = vpack.c.bf16 %v1653, %v1652
      %v1779 = vpack.c.bf16 %v1655, %v1654
      %v1780 = vpack.c.bf16 %v1657, %v1656
      %v1781 = vpack.c.bf16 %v1659, %v1658
      %v1782 = vpack.c.bf16 %v1661, %v1660
      %v1783 = vpack.c.bf16 %v1663, %v1662
      %v1784 = vpack.c.bf16 %v1665, %v1664
      %v1785 = vpack.c.bf16 %v1667, %v1666
      %v1786 = vpack.c.bf16 %v1669, %v1668
      %v1787 = vpack.c.bf16 %v1671, %v1670
      %v1788 = vpack.c.bf16 %v1673, %v1672
      %v1789 = vpack.c.bf16 %v1675, %v1674
      %v1790 = vpack.c.bf16 %v1677, %v1676
      %v1791 = vpack.c.bf16 %v1679, %v1678
      %v1792 = vpack.c.bf16 %v1681, %v1680
      %v1793 = vpack.c.bf16 %v1683, %v1682
      %v1794 = vpack.c.bf16 %v1685, %v1684
      %v1795 = vpack.c.bf16 %v1687, %v1686
      %v1796 = vpack.c.bf16 %v1689, %v1688
      %v1797 = vpack.c.bf16 %v1691, %v1690
      %v1798 = vpack.c.bf16 %v1693, %v1692
      %v1799 = vpack.c.bf16 %v1695, %v1694
      %v1800 = vpack.c.bf16 %v1697, %v1696
      %v1801 = vpack.c.bf16 %v1699, %v1698
      %v1802 = vpack.c.bf16 %v1701, %v1700
      %v1803 = vpack.c.bf16 %v1703, %v1702
      %v1804 = vpack.c.bf16 %v1705, %v1704
      %v1805 = vpack.c.bf16 %v1707, %v1706
      %v1806 = vpack.c.bf16 %v1709, %v1708
      %v1807 = vpack.c.bf16 %v1711, %v1710
      %v1808 = vpack.c.bf16 %v1713, %v1712
      %v1809 = vpack.c.bf16 %v1715, %v1714
      %v1810 = vpack.c.bf16 %v1717, %v1716
      %v1811 = vpack.c.bf16 %v1719, %v1718
      %v1812 = vpack.c.bf16 %v1721, %v1720
      %v1813 = vpack.c.bf16 %v1723, %v1722
      %v1814 = vpack.c.bf16 %v1725, %v1724
      %v1815 = vpack.c.bf16 %v1727, %v1726
      %v1816 = vpack.c.bf16 %v1729, %v1728
      %v1817 = vpack.c.bf16 %v1731, %v1730
      %v1818 = vpack.c.bf16 %v1733, %v1732
      %v1819 = vpack.c.bf16 %v1735, %v1734
      %v1820 = vpack.c.bf16 %v1737, %v1736
      %v1821 = vpack.c.bf16 %v1739, %v1738
      %v1822 = vpack.c.bf16 %v1741, %v1740
      %v1823 = vpack.c.bf16 %v1743, %v1742
      %v1824 = vpack.c.bf16 %v1745, %v1744
      %v1825 = vpack.c.bf16 %v1747, %v1746
      %v1826 = vpack.c.bf16 %v1749, %v1748
      %v1827 = vpack.c.bf16 %v1751, %v1750
      %v1828 = vpack.c.bf16 %v1753, %v1752
      %v1829 = vpack.c.bf16 %v1755, %v1754
      %v1830 = vpack.c.bf16 %v1757, %v1756
      %v1831 = vpack.c.bf16 %v1759, %v1758
      %v1832 = vpack.c.bf16 %v1761, %v1760
      %v1833 = vpack.c.bf16 %v1763, %v1762
      %v1834 = vpack.c.bf16 %v1765, %v1764
      %v1835 = vpack.c.bf16 %v1767, %v1766
      %v1836 = vpack.c.bf16 %v1769, %v1768
      %v1837 = vpack.c.bf16 %v1771, %v1770
      %v1838 = vpack.c.bf16 %v1773, %v1772
      %v1839 = vpack.c.bf16 %v1775, %v1774
      %v1904 = vunpack.c.l.b16 %v1776
      %v1905 = vunpack.c.h.b16 %v1776
      %v1906 = vunpack.c.l.b16 %v1777
      %v1907 = vunpack.c.h.b16 %v1777
      %v1908 = vunpack.c.l.b16 %v1778
      %v1909 = vunpack.c.h.b16 %v1778
      %v1910 = vunpack.c.l.b16 %v1779
      %v1911 = vunpack.c.h.b16 %v1779
      %v1912 = vunpack.c.l.b16 %v1780
      %v1913 = vunpack.c.h.b16 %v1780
      %v1914 = vunpack.c.l.b16 %v1781
      %v1915 = vunpack.c.h.b16 %v1781
      %v1916 = vunpack.c.l.b16 %v1782
      %v1917 = vunpack.c.h.b16 %v1782
      %v1918 = vunpack.c.l.b16 %v1783
      %v1919 = vunpack.c.h.b16 %v1783
      %v1920 = vunpack.c.l.b16 %v1784
      %v1921 = vunpack.c.h.b16 %v1784
      %v1922 = vunpack.c.l.b16 %v1785
      %v1923 = vunpack.c.h.b16 %v1785
      %v1924 = vunpack.c.l.b16 %v1786
      %v1925 = vunpack.c.h.b16 %v1786
      %v1926 = vunpack.c.l.b16 %v1787
      %v1927 = vunpack.c.h.b16 %v1787
      %v1928 = vunpack.c.l.b16 %v1788
      %v1929 = vunpack.c.h.b16 %v1788
      %v1930 = vunpack.c.l.b16 %v1789
      %v1931 = vunpack.c.h.b16 %v1789
      %v1932 = vunpack.c.l.b16 %v1790
      %v1933 = vunpack.c.h.b16 %v1790
      %v1934 = vunpack.c.l.b16 %v1791
      %v1935 = vunpack.c.h.b16 %v1791
      %v1936 = vunpack.c.l.b16 %v1792
      %v1937 = vunpack.c.h.b16 %v1792
      %v1938 = vunpack.c.l.b16 %v1793
      %v1939 = vunpack.c.h.b16 %v1793
      %v1940 = vunpack.c.l.b16 %v1794
      %v1941 = vunpack.c.h.b16 %v1794
      %v1942 = vunpack.c.l.b16 %v1795
      %v1943 = vunpack.c.h.b16 %v1795
      %v1944 = vunpack.c.l.b16 %v1796
      %v1945 = vunpack.c.h.b16 %v1796
      %v1946 = vunpack.c.l.b16 %v1797
      %v1947 = vunpack.c.h.b16 %v1797
      %v1948 = vunpack.c.l.b16 %v1798
      %v1949 = vunpack.c.h.b16 %v1798
      %v1950 = vunpack.c.l.b16 %v1799
      %v1951 = vunpack.c.h.b16 %v1799
      %v1952 = vunpack.c.l.b16 %v1800
      %v1953 = vunpack.c.h.b16 %v1800
      %v1954 = vunpack.c.l.b16 %v1801
      %v1955 = vunpack.c.h.b16 %v1801
      %v1956 = vunpack.c.l.b16 %v1802
      %v1957 = vunpack.c.h.b16 %v1802
      %v1958 = vunpack.c.l.b16 %v1803
      %v1959 = vunpack.c.h.b16 %v1803
      %v1960 = vunpack.c.l.b16 %v1804
      %v1961 = vunpack.c.h.b16 %v1804
      %v1962 = vunpack.c.l.b16 %v1805
      %v1963 = vunpack.c.h.b16 %v1805
      %v1964 = vunpack.c.l.b16 %v1806
      %v1965 = vunpack.c.h.b16 %v1806
      %v1966 = vunpack.c.l.b16 %v1807
      %v1967 = vunpack.c.h.b16 %v1807
      %v1968 = vunpack.c.l.b16 %v1808
      %v1969 = vunpack.c.h.b16 %v1808
      %v1970 = vunpack.c.l.b16 %v1809
      %v1971 = vunpack.c.h.b16 %v1809
      %v1972 = vunpack.c.l.b16 %v1810
      %v1973 = vunpack.c.h.b16 %v1810
      %v1974 = vunpack.c.l.b16 %v1811
      %v1975 = vunpack.c.h.b16 %v1811
      %v1976 = vunpack.c.l.b16 %v1812
      %v1977 = vunpack.c.h.b16 %v1812
      %v1978 = vunpack.c.l.b16 %v1813
      %v1979 = vunpack.c.h.b16 %v1813
      %v1980 = vunpack.c.l.b16 %v1814
      %v1981 = vunpack.c.h.b16 %v1814
      %v1982 = vunpack.c.l.b16 %v1815
      %v1983 = vunpack.c.h.b16 %v1815
      %v1984 = vunpack.c.l.b16 %v1816
      %v1985 = vunpack.c.h.b16 %v1816
      %v1986 = vunpack.c.l.b16 %v1817
      %v1987 = vunpack.c.h.b16 %v1817
      %v1988 = vunpack.c.l.b16 %v1818
      %v1989 = vunpack.c.h.b16 %v1818
      %v1990 = vunpack.c.l.b16 %v1819
      %v1991 = vunpack.c.h.b16 %v1819
      %v1992 = vunpack.c.l.b16 %v1820
      %v1993 = vunpack.c.h.b16 %v1820
      %v1994 = vunpack.c.l.b16 %v1821
      %v1995 = vunpack.c.h.b16 %v1821
      %v1996 = vunpack.c.l.b16 %v1822
      %v1997 = vunpack.c.h.b16 %v1822
      %v1998 = vunpack.c.l.b16 %v1823
      %v1999 = vunpack.c.h.b16 %v1823
      %v2000 = vunpack.c.l.b16 %v1824
      %v2001 = vunpack.c.h.b16 %v1824
      %v2002 = vunpack.c.l.b16 %v1825
      %v2003 = vunpack.c.h.b16 %v1825
      %v2004 = vunpack.c.l.b16 %v1826
      %v2005 = vunpack.c.h.b16 %v1826
      %v2006 = vunpack.c.l.b16 %v1827
      %v2007 = vunpack.c.h.b16 %v1827
      %v2008 = vunpack.c.l.b16 %v1828
      %v2009 = vunpack.c.h.b16 %v1828
      %v2010 = vunpack.c.l.b16 %v1829
      %v2011 = vunpack.c.h.b16 %v1829
      %v2012 = vunpack.c.l.b16 %v1830
      %v2013 = vunpack.c.h.b16 %v1830
      %v2014 = vunpack.c.l.b16 %v1831
      %v2015 = vunpack.c.h.b16 %v1831
      %v2016 = vunpack.c.l.b16 %v1832
      %v2017 = vunpack.c.h.b16 %v1832
      %v2018 = vunpack.c.l.b16 %v1833
      %v2019 = vunpack.c.h.b16 %v1833
      %v2020 = vunpack.c.l.b16 %v1834
      %v2021 = vunpack.c.h.b16 %v1834
      %v2022 = vunpack.c.l.b16 %v1835
      %v2023 = vunpack.c.h.b16 %v1835
      %v2024 = vunpack.c.l.b16 %v1836
      %v2025 = vunpack.c.h.b16 %v1836
      %v2026 = vunpack.c.l.b16 %v1837
      %v2027 = vunpack.c.h.b16 %v1837
      %v2028 = vunpack.c.l.b16 %v1838
      %v2029 = vunpack.c.h.b16 %v1838
      %v2030 = vunpack.c.l.b16 %v1839
      %v2031 = vunpack.c.h.b16 %v1839
      %v2032 = vpack.c.b16 %v1904, %v1904
      %v2033 = vpack.c.b16 %v1905, %v1905
      %v2034 = vpack.c.b16 %v1906, %v1906
      %v2035 = vpack.c.b16 %v1907, %v1907
      %v2036 = vpack.c.b16 %v1908, %v1908
      %v2037 = vpack.c.b16 %v1909, %v1909
      %v2038 = vpack.c.b16 %v1910, %v1910
      %v2039 = vpack.c.b16 %v1911, %v1911
      %v2040 = vpack.c.b16 %v1912, %v1912
      %v2041 = vpack.c.b16 %v1913, %v1913
      %v2042 = vpack.c.b16 %v1914, %v1914
      %v2043 = vpack.c.b16 %v1915, %v1915
      %v2044 = vpack.c.b16 %v1916, %v1916
      %v2045 = vpack.c.b16 %v1917, %v1917
      %v2046 = vpack.c.b16 %v1918, %v1918
      %v2047 = vpack.c.b16 %v1919, %v1919
      %v2048 = vpack.c.b16 %v1920, %v1920
      %v2049 = vpack.c.b16 %v1921, %v1921
      %v2050 = vpack.c.b16 %v1922, %v1922
      %v2051 = vpack.c.b16 %v1923, %v1923
      %v2052 = vpack.c.b16 %v1924, %v1924
      %v2053 = vpack.c.b16 %v1925, %v1925
      %v2054 = vpack.c.b16 %v1926, %v1926
      %v2055 = vpack.c.b16 %v1927, %v1927
      %v2056 = vpack.c.b16 %v1928, %v1928
      %v2057 = vpack.c.b16 %v1929, %v1929
      %v2058 = vpack.c.b16 %v1930, %v1930
      %v2059 = vpack.c.b16 %v1931, %v1931
      %v2060 = vpack.c.b16 %v1932, %v1932
      %v2061 = vpack.c.b16 %v1933, %v1933
      %v2062 = vpack.c.b16 %v1934, %v1934
      %v2063 = vpack.c.b16 %v1935, %v1935
      %v2064 = vpack.c.b16 %v1936, %v1936
      %v2065 = vpack.c.b16 %v1937, %v1937
      %v2066 = vpack.c.b16 %v1938, %v1938
      %v2067 = vpack.c.b16 %v1939, %v1939
      %v2068 = vpack.c.b16 %v1940, %v1940
      %v2069 = vpack.c.b16 %v1941, %v1941
      %v2070 = vpack.c.b16 %v1942, %v1942
      %v2071 = vpack.c.b16 %v1943, %v1943
      %v2072 = vpack.c.b16 %v1944, %v1944
      %v2073 = vpack.c.b16 %v1945, %v1945
      %v2074 = vpack.c.b16 %v1946, %v1946
      %v2075 = vpack.c.b16 %v1947, %v1947
      %v2076 = vpack.c.b16 %v1948, %v1948
      %v2077 = vpack.c.b16 %v1949, %v1949
      %v2078 = vpack.c.b16 %v1950, %v1950
      %v2079 = vpack.c.b16 %v1951, %v1951
      %v2080 = vpack.c.b16 %v1952, %v1952
      %v2081 = vpack.c.b16 %v1953, %v1953
      %v2082 = vpack.c.b16 %v1954, %v1954
      %v2083 = vpack.c.b16 %v1955, %v1955
      %v2084 = vpack.c.b16 %v1956, %v1956
      %v2085 = vpack.c.b16 %v1957, %v1957
      %v2086 = vpack.c.b16 %v1958, %v1958
      %v2087 = vpack.c.b16 %v1959, %v1959
      %v2088 = vpack.c.b16 %v1960, %v1960
      %v2089 = vpack.c.b16 %v1961, %v1961
      %v2090 = vpack.c.b16 %v1962, %v1962
      %v2091 = vpack.c.b16 %v1963, %v1963
      %v2092 = vpack.c.b16 %v1964, %v1964
      %v2093 = vpack.c.b16 %v1965, %v1965
      %v2094 = vpack.c.b16 %v1966, %v1966
      %v2095 = vpack.c.b16 %v1967, %v1967
      %v2096 = vpack.c.b16 %v1968, %v1968
      %v2097 = vpack.c.b16 %v1969, %v1969
      %v2098 = vpack.c.b16 %v1970, %v1970
      %v2099 = vpack.c.b16 %v1971, %v1971
      %v2100 = vpack.c.b16 %v1972, %v1972
      %v2101 = vpack.c.b16 %v1973, %v1973
      %v2102 = vpack.c.b16 %v1974, %v1974
      %v2103 = vpack.c.b16 %v1975, %v1975
      %v2104 = vpack.c.b16 %v1976, %v1976
      %v2105 = vpack.c.b16 %v1977, %v1977
      %v2106 = vpack.c.b16 %v1978, %v1978
      %v2107 = vpack.c.b16 %v1979, %v1979
      %v2108 = vpack.c.b16 %v1980, %v1980
      %v2109 = vpack.c.b16 %v1981, %v1981
      %v2110 = vpack.c.b16 %v1982, %v1982
      %v2111 = vpack.c.b16 %v1983, %v1983
      %v2112 = vpack.c.b16 %v1984, %v1984
      %v2113 = vpack.c.b16 %v1985, %v1985
      %v2114 = vpack.c.b16 %v1986, %v1986
      %v2115 = vpack.c.b16 %v1987, %v1987
      %v2116 = vpack.c.b16 %v1988, %v1988
      %v2117 = vpack.c.b16 %v1989, %v1989
      %v2118 = vpack.c.b16 %v1990, %v1990
      %v2119 = vpack.c.b16 %v1991, %v1991
      %v2120 = vpack.c.b16 %v1992, %v1992
      %v2121 = vpack.c.b16 %v1993, %v1993
      %v2122 = vpack.c.b16 %v1994, %v1994
      %v2123 = vpack.c.b16 %v1995, %v1995
      %v2124 = vpack.c.b16 %v1996, %v1996
      %v2125 = vpack.c.b16 %v1997, %v1997
      %v2126 = vpack.c.b16 %v1998, %v1998
      %v2127 = vpack.c.b16 %v1999, %v1999
      %v2128 = vpack.c.b16 %v2000, %v2000
      %v2129 = vpack.c.b16 %v2001, %v2001
      %v2130 = vpack.c.b16 %v2002, %v2002
      %v2131 = vpack.c.b16 %v2003, %v2003
      %v2132 = vpack.c.b16 %v2004, %v2004
      %v2133 = vpack.c.b16 %v2005, %v2005
      %v2134 = vpack.c.b16 %v2006, %v2006
      %v2135 = vpack.c.b16 %v2007, %v2007
      %v2136 = vpack.c.b16 %v2008, %v2008
      %v2137 = vpack.c.b16 %v2009, %v2009
      %v2138 = vpack.c.b16 %v2010, %v2010
      %v2139 = vpack.c.b16 %v2011, %v2011
      %v2140 = vpack.c.b16 %v2012, %v2012
      %v2141 = vpack.c.b16 %v2013, %v2013
      %v2142 = vpack.c.b16 %v2014, %v2014
      %v2143 = vpack.c.b16 %v2015, %v2015
      %v2144 = vpack.c.b16 %v2016, %v2016
      %v2145 = vpack.c.b16 %v2017, %v2017
      %v2146 = vpack.c.b16 %v2018, %v2018
      %v2147 = vpack.c.b16 %v2019, %v2019
      %v2148 = vpack.c.b16 %v2020, %v2020
      %v2149 = vpack.c.b16 %v2021, %v2021
      %v2150 = vpack.c.b16 %v2022, %v2022
      %v2151 = vpack.c.b16 %v2023, %v2023
      %v2152 = vpack.c.b16 %v2024, %v2024
      %v2153 = vpack.c.b16 %v2025, %v2025
      %v2154 = vpack.c.b16 %v2026, %v2026
      %v2155 = vpack.c.b16 %v2027, %v2027
      %v2156 = vpack.c.b16 %v2028, %v2028
      %v2157 = vpack.c.b16 %v2029, %v2029
      %v2158 = vpack.c.b16 %v2030, %v2030
      %v2159 = vpack.c.b16 %v2031, %v2031
      %2288 = vst [vmem:[%s172] sm:$0xf] %v2032
      %2289 = vst [vmem:[%s172 + $0x4] sm:$0xf] %v2033
      %2290 = vst [vmem:[%s172 + $0x8] sm:$0xf] %v2034
      %2291 = vst [vmem:[%s172 + $0xc] sm:$0xf] %v2035
      %2292 = vst [vmem:[%s172 + $0x10] sm:$0xf] %v2036
      %2293 = vst [vmem:[%s172 + $0x14] sm:$0xf] %v2037
      %2294 = vst [vmem:[%s172 + $0x18] sm:$0xf] %v2038
      %2295 = vst [vmem:[%s172 + $0x1c] sm:$0xf] %v2039
      %2296 = vst [vmem:[%s172 + $0x20] sm:$0xf] %v2040
      %2297 = vst [vmem:[%s172 + $0x24] sm:$0xf] %v2041
      %2298 = vst [vmem:[%s172 + $0x28] sm:$0xf] %v2042
      %2299 = vst [vmem:[%s172 + $0x2c] sm:$0xf] %v2043
      %2300 = vst [vmem:[%s172 + $0x30] sm:$0xf] %v2044
      %2301 = vst [vmem:[%s172 + $0x34] sm:$0xf] %v2045
      %2302 = vst [vmem:[%s172 + $0x38] sm:$0xf] %v2046
      %2303 = vst [vmem:[%s172 + $0x3c] sm:$0xf] %v2047
      %2304 = vst [vmem:[%s172 + $0x40] sm:$0xf] %v2048
      %2305 = vst [vmem:[%s172 + $0x44] sm:$0xf] %v2049
      %2306 = vst [vmem:[%s172 + $0x48] sm:$0xf] %v2050
      %2307 = vst [vmem:[%s172 + $0x4c] sm:$0xf] %v2051
      %2308 = vst [vmem:[%s172 + $0x50] sm:$0xf] %v2052
      %2309 = vst [vmem:[%s172 + $0x54] sm:$0xf] %v2053
      %2310 = vst [vmem:[%s172 + $0x58] sm:$0xf] %v2054
      %2311 = vst [vmem:[%s172 + $0x5c] sm:$0xf] %v2055
      %2312 = vst [vmem:[%s172 + $0x60] sm:$0xf] %v2056
      %2313 = vst [vmem:[%s172 + $0x64] sm:$0xf] %v2057
      %2314 = vst [vmem:[%s172 + $0x68] sm:$0xf] %v2058
      %2315 = vst [vmem:[%s172 + $0x6c] sm:$0xf] %v2059
      %2316 = vst [vmem:[%s172 + $0x70] sm:$0xf] %v2060
      %2317 = vst [vmem:[%s172 + $0x74] sm:$0xf] %v2061
      %2318 = vst [vmem:[%s172 + $0x78] sm:$0xf] %v2062
      %2319 = vst [vmem:[%s172 + $0x7c] sm:$0xf] %v2063
      %2320 = vst [vmem:[%s172 + $0x80] sm:$0xf] %v2064
      %2321 = vst [vmem:[%s172 + $0x84] sm:$0xf] %v2065
      %2322 = vst [vmem:[%s172 + $0x88] sm:$0xf] %v2066
      %2323 = vst [vmem:[%s172 + $0x8c] sm:$0xf] %v2067
      %2324 = vst [vmem:[%s172 + $0x90] sm:$0xf] %v2068
      %2325 = vst [vmem:[%s172 + $0x94] sm:$0xf] %v2069
      %2326 = vst [vmem:[%s172 + $0x98] sm:$0xf] %v2070
      %2327 = vst [vmem:[%s172 + $0x9c] sm:$0xf] %v2071
      %2328 = vst [vmem:[%s172 + $0xa0] sm:$0xf] %v2072
      %2329 = vst [vmem:[%s172 + $0xa4] sm:$0xf] %v2073
      %2330 = vst [vmem:[%s172 + $0xa8] sm:$0xf] %v2074
      %2331 = vst [vmem:[%s172 + $0xac] sm:$0xf] %v2075
      %2332 = vst [vmem:[%s172 + $0xb0] sm:$0xf] %v2076
      %2333 = vst [vmem:[%s172 + $0xb4] sm:$0xf] %v2077
      %2334 = vst [vmem:[%s172 + $0xb8] sm:$0xf] %v2078
      %2335 = vst [vmem:[%s172 + $0xbc] sm:$0xf] %v2079
      %2336 = vst [vmem:[%s172 + $0xc0] sm:$0xf] %v2080
      %2337 = vst [vmem:[%s172 + $0xc4] sm:$0xf] %v2081
      %2338 = vst [vmem:[%s172 + $0xc8] sm:$0xf] %v2082
      %2339 = vst [vmem:[%s172 + $0xcc] sm:$0xf] %v2083
      %2340 = vst [vmem:[%s172 + $0xd0] sm:$0xf] %v2084
      %2341 = vst [vmem:[%s172 + $0xd4] sm:$0xf] %v2085
      %2342 = vst [vmem:[%s172 + $0xd8] sm:$0xf] %v2086
      %2343 = vst [vmem:[%s172 + $0xdc] sm:$0xf] %v2087
      %2344 = vst [vmem:[%s172 + $0xe0] sm:$0xf] %v2088
      %2345 = vst [vmem:[%s172 + $0xe4] sm:$0xf] %v2089
      %2346 = vst [vmem:[%s172 + $0xe8] sm:$0xf] %v2090
      %2347 = vst [vmem:[%s172 + $0xec] sm:$0xf] %v2091
      %2348 = vst [vmem:[%s172 + $0xf0] sm:$0xf] %v2092
      %2349 = vst [vmem:[%s172 + $0xf4] sm:$0xf] %v2093
      %2350 = vst [vmem:[%s172 + $0xf8] sm:$0xf] %v2094
      %2351 = vst [vmem:[%s172 + $0xfc] sm:$0xf] %v2095
      %2352 = vst [vmem:[%s172 + $0x100] sm:$0xf] %v2096
      %2353 = vst [vmem:[%s172 + $0x104] sm:$0xf] %v2097
      %2354 = vst [vmem:[%s172 + $0x108] sm:$0xf] %v2098
      %2355 = vst [vmem:[%s172 + $0x10c] sm:$0xf] %v2099
      %2356 = vst [vmem:[%s172 + $0x110] sm:$0xf] %v2100
      %2357 = vst [vmem:[%s172 + $0x114] sm:$0xf] %v2101
      %2358 = vst [vmem:[%s172 + $0x118] sm:$0xf] %v2102
      %2359 = vst [vmem:[%s172 + $0x11c] sm:$0xf] %v2103
      %2360 = vst [vmem:[%s172 + $0x120] sm:$0xf] %v2104
      %2361 = vst [vmem:[%s172 + $0x124] sm:$0xf] %v2105
      %2362 = vst [vmem:[%s172 + $0x128] sm:$0xf] %v2106
      %2363 = vst [vmem:[%s172 + $0x12c] sm:$0xf] %v2107
      %2364 = vst [vmem:[%s172 + $0x130] sm:$0xf] %v2108
      %2365 = vst [vmem:[%s172 + $0x134] sm:$0xf] %v2109
      %2366 = vst [vmem:[%s172 + $0x138] sm:$0xf] %v2110
      %2367 = vst [vmem:[%s172 + $0x13c] sm:$0xf] %v2111
      %2368 = vst [vmem:[%s172 + $0x140] sm:$0xf] %v2112
      %2369 = vst [vmem:[%s172 + $0x144] sm:$0xf] %v2113
      %2370 = vst [vmem:[%s172 + $0x148] sm:$0xf] %v2114
      %2371 = vst [vmem:[%s172 + $0x14c] sm:$0xf] %v2115
      %2372 = vst [vmem:[%s172 + $0x150] sm:$0xf] %v2116
      %2373 = vst [vmem:[%s172 + $0x154] sm:$0xf] %v2117
      %2374 = vst [vmem:[%s172 + $0x158] sm:$0xf] %v2118
      %2375 = vst [vmem:[%s172 + $0x15c] sm:$0xf] %v2119
      %2376 = vst [vmem:[%s172 + $0x160] sm:$0xf] %v2120
      %2377 = vst [vmem:[%s172 + $0x164] sm:$0xf] %v2121
      %2378 = vst [vmem:[%s172 + $0x168] sm:$0xf] %v2122
      %2379 = vst [vmem:[%s172 + $0x16c] sm:$0xf] %v2123
      %2380 = vst [vmem:[%s172 + $0x170] sm:$0xf] %v2124
      %2381 = vst [vmem:[%s172 + $0x174] sm:$0xf] %v2125
      %2382 = vst [vmem:[%s172 + $0x178] sm:$0xf] %v2126
      %2383 = vst [vmem:[%s172 + $0x17c] sm:$0xf] %v2127
      %2384 = vst [vmem:[%s172 + $0x180] sm:$0xf] %v2128
      %2385 = vst [vmem:[%s172 + $0x184] sm:$0xf] %v2129
      %2386 = vst [vmem:[%s172 + $0x188] sm:$0xf] %v2130
      %2387 = vst [vmem:[%s172 + $0x18c] sm:$0xf] %v2131
      %2388 = vst [vmem:[%s172 + $0x190] sm:$0xf] %v2132
      %2389 = vst [vmem:[%s172 + $0x194] sm:$0xf] %v2133
      %2390 = vst [vmem:[%s172 + $0x198] sm:$0xf] %v2134
      %2391 = vst [vmem:[%s172 + $0x19c] sm:$0xf] %v2135
      %2392 = vst [vmem:[%s172 + $0x1a0] sm:$0xf] %v2136
      %2393 = vst [vmem:[%s172 + $0x1a4] sm:$0xf] %v2137
      %2394 = vst [vmem:[%s172 + $0x1a8] sm:$0xf] %v2138
      %2395 = vst [vmem:[%s172 + $0x1ac] sm:$0xf] %v2139
      %2396 = vst [vmem:[%s172 + $0x1b0] sm:$0xf] %v2140
      %2397 = vst [vmem:[%s172 + $0x1b4] sm:$0xf] %v2141
      %2398 = vst [vmem:[%s172 + $0x1b8] sm:$0xf] %v2142
      %2399 = vst [vmem:[%s172 + $0x1bc] sm:$0xf] %v2143
      %2400 = vst [vmem:[%s172 + $0x1c0] sm:$0xf] %v2144
      %2401 = vst [vmem:[%s172 + $0x1c4] sm:$0xf] %v2145
      %2402 = vst [vmem:[%s172 + $0x1c8] sm:$0xf] %v2146
      %2403 = vst [vmem:[%s172 + $0x1cc] sm:$0xf] %v2147
      %2404 = vst [vmem:[%s172 + $0x1d0] sm:$0xf] %v2148
      %2405 = vst [vmem:[%s172 + $0x1d4] sm:$0xf] %v2149
      %2406 = vst [vmem:[%s172 + $0x1d8] sm:$0xf] %v2150
      %2407 = vst [vmem:[%s172 + $0x1dc] sm:$0xf] %v2151
      %2408 = vst [vmem:[%s172 + $0x1e0] sm:$0xf] %v2152
      %2409 = vst [vmem:[%s172 + $0x1e4] sm:$0xf] %v2153
      %2410 = vst [vmem:[%s172 + $0x1e8] sm:$0xf] %v2154
      %2411 = vst [vmem:[%s172 + $0x1ec] sm:$0xf] %v2155
      %2412 = vst [vmem:[%s172 + $0x1f0] sm:$0xf] %v2156
      %2413 = vst [vmem:[%s172 + $0x1f4] sm:$0xf] %v2157
      %2414 = vst [vmem:[%s172 + $0x1f8] sm:$0xf] %v2158
      %2415 = vst [vmem:[%s172 + $0x1fc] sm:$0xf] %v2159
      %s2416 = smul.u32 128, %s14
      %p2417 = scmp.lt.s32.totalorder %s2416, 255
      %s2418 = scalar_select %p2417, %s2416, 255
      %s2419 = smul.addr %s2418, 4
      %s2420 = scalar_lea.vmem %s3, %s2419
      // Predicated region
      $region33: #{_lambda_.4} parent=31 // pred_check
        %p2421 = pneg %p100
      $region34: #{_lambda_.4} parent=31 // pred_check_branch
        %2423 = sbr.rel (%p2421) target = $region36
      $region35: #{_lambda_.4} parent=31 // pred_region
        %s2424 = smul.u32 128, %s14
      $region36: #{_lambda_.4} parent=31 // pred_fallthru
        _
    $region32: #{_lambda_.4} parent=5 // pred_fallthru
      _
    %p2425 = scmp.le.s32.totalorder 2, %s9
    // Predicated region
    $region37: #{_lambda_.4} parent=5 // pred_check
      %p2426 = pneg %p2425
    $region38: #{_lambda_.4} parent=5 // pred_check_branch
      %2428 = sbr.rel (%p2426) target = $region40
    $region39: #{_lambda_.4} parent=5 // pred_region
      %s2429 = ssub.s32 %s9, 2
      // Predicated region
      $region41: #{_lambda_.4} parent=39 // pred_check
        %p2430 = pneg %p106
      $region42: #{_lambda_.4} parent=39 // pred_check_branch
        %2432 = sbr.rel (%p2430) target = $region44
      $region43: #{_lambda_.4} parent=39 // pred_region
        %s2433 = smul.u32 128, %s15
        %p2434 = scmp.lt.s32.totalorder %s2433, 255
        %s2435 = scalar_select %p2434, %s2433, 255
        %s2436 = smul.addr %s2435, 4
        %s2437 = scalar_lea.vmem %s3, %s2436
      $region44: #{_lambda_.4} parent=39 // pred_fallthru
        _
    $region40: #{_lambda_.4} parent=5 // pred_fallthru
      _
  $region6: #{_lambda_.4} parent=0 // loop_footer
    %s13 = sadd.s32 1, %s9
  $region7: #{_lambda_.4} parent=0 // loop_footer_branch
    %8 = sbr.rel target = $region3
  $region8: #{_lambda_.4} parent=0 // loop_exit
    _

// kernel: _lambda_.5
$region0: #{_lambda_.5}
  #allocation0 [shape = 'u32[]', space=smem, size = 0x4, offset = 0x4, fixed_abs, tag = 'smem constant byte address 0x4 - core index']
  #allocation1 [shape = 'u32[144,128]{1,0:T(1,128)}', space=vmem, size = 0x12000, scoped, tag = 'internal scratch']
  #allocation2 [shape = 'f32[512,128]{1,0:T(8,128)}', space=vmem, size = 0x40000, scoped, tag = 'scratch operand']
  #allocation3 [shape = 'f32[1,128]{1,0:T(1,128)}', space=vmem, size = 0x200, scoped, tag = 'scratch operand']
  #allocation4 [shape = 'f32[1,128]{1,0:T(1,128)}', space=vmem, size = 0x200, scoped, tag = 'scratch operand']
  %s0 = inlined_call_operand.vmem [shape: bf16[512,256], index: 0, kind: input, shape index: {}]
  %s1 = inlined_call_operand.vmem [shape: bf16[256,128], index: 1, kind: input, shape index: {}]
  %s2 = inlined_call_operand.vmem [shape: f32[1,128], index: 2, kind: input, shape index: {}]
  %s3 = inlined_call_operand.vmem [shape: f32[1,128], index: 3, kind: input, shape index: {}]
  %s4 = inlined_call_operand.vmem [shape: bf16[512,128], index: 4, kind: output, shape index: {}]
  %s5 = sld [smem:[#allocation0]]
  $region34: #{_lambda_.5} parent=0
    _
  %s7 = ssub.s32 1, %s5
  %s8 = scalar_select 0, %s7, %s5
  // Predicated region
  $region2: #{_lambda_.5} parent=0 // pred_check
    _
  $region3: #{_lambda_.5} parent=0 // pred_check_branch
    %10 = sbr.rel (0) target = $region5
  $region4: #{_lambda_.5} parent=0 // pred_region
    _
  $region5: #{_lambda_.5} parent=0 // pred_fallthru
    _
  // Predicated region
  $region6: #{_lambda_.5} parent=0 // pred_check
    _
  $region7: #{_lambda_.5} parent=0 // pred_check_branch
    %12 = sbr.rel (0) target = $region9
  $region8: #{_lambda_.5} parent=0 // pred_region
    _
  $region9: #{_lambda_.5} parent=0 // pred_fallthru
    _
  // Predicated region
  $region10: #{_lambda_.5} parent=0 // pred_check
    _
  $region11: #{_lambda_.5} parent=0 // pred_check_branch
    %14 = sbr.rel (0) target = $region13
  $region12: #{_lambda_.5} parent=0 // pred_region
    _
  $region13: #{_lambda_.5} parent=0 // pred_fallthru
    _
  // Predicated region
  $region14: #{_lambda_.5} parent=0 // pred_check
    _
  $region15: #{_lambda_.5} parent=0 // pred_check_branch
    %16 = sbr.rel (0) target = $region17
  $region16: #{_lambda_.5} parent=0 // pred_region
    _
  $region17: #{_lambda_.5} parent=0 // pred_fallthru
    _
  %p18 = scmp.eq.s32.totalorder 0, 0
  // Predicated region
  $region18: #{_lambda_.5} parent=0 // pred_check
    %p19 = pneg %p18
  $region19: #{_lambda_.5} parent=0 // pred_check_branch
    %21 = sbr.rel (%p19) target = $region21
  $region20: #{_lambda_.5} parent=0 // pred_region
    %22 = vst [vmem:[#allocation3] sm:$0x1] 0.0
    %23 = vst [vmem:[#allocation4] sm:$0x1] 0.0
  $region21: #{_lambda_.5} parent=0 // pred_fallthru
    _
  %v24 = vld [vmem:[%s0] sm:$0xff]
  %v25 = vld [vmem:[%s0 + $0x8] sm:$0xff]
  %v26 = vld [vmem:[%s0 + $0x10] sm:$0xff]
  %v27 = vld [vmem:[%s0 + $0x18] sm:$0xff]
  %v28 = vld [vmem:[%s0 + $0x20] sm:$0xff]
  %v29 = vld [vmem:[%s0 + $0x28] sm:$0xff]
  %v30 = vld [vmem:[%s0 + $0x30] sm:$0xff]
  %v31 = vld [vmem:[%s0 + $0x38] sm:$0xff]
  %v32 = vld [vmem:[%s0 + $0x40] sm:$0xff]
  %v33 = vld [vmem:[%s0 + $0x48] sm:$0xff]
  %v34 = vld [vmem:[%s0 + $0x50] sm:$0xff]
  %v35 = vld [vmem:[%s0 + $0x58] sm:$0xff]
  %v36 = vld [vmem:[%s0 + $0x60] sm:$0xff]
  %v37 = vld [vmem:[%s0 + $0x68] sm:$0xff]
  %v38 = vld [vmem:[%s0 + $0x70] sm:$0xff]
  %v39 = vld [vmem:[%s0 + $0x78] sm:$0xff]
  %v40 = vld [vmem:[%s0 + $0x80] sm:$0xff]
  %v41 = vld [vmem:[%s0 + $0x88] sm:$0xff]
  %v42 = vld [vmem:[%s0 + $0x90] sm:$0xff]
  %v43 = vld [vmem:[%s0 + $0x98] sm:$0xff]
  %v44 = vld [vmem:[%s0 + $0xa0] sm:$0xff]
  %v45 = vld [vmem:[%s0 + $0xa8] sm:$0xff]
  %v46 = vld [vmem:[%s0 + $0xb0] sm:$0xff]
  %v47 = vld [vmem:[%s0 + $0xb8] sm:$0xff]
  %v48 = vld [vmem:[%s0 + $0xc0] sm:$0xff]
  %v49 = vld [vmem:[%s0 + $0xc8] sm:$0xff]
  %v50 = vld [vmem:[%s0 + $0xd0] sm:$0xff]
  %v51 = vld [vmem:[%s0 + $0xd8] sm:$0xff]
  %v52 = vld [vmem:[%s0 + $0xe0] sm:$0xff]
  %v53 = vld [vmem:[%s0 + $0xe8] sm:$0xff]
  %v54 = vld [vmem:[%s0 + $0xf0] sm:$0xff]
  %v55 = vld [vmem:[%s0 + $0xf8] sm:$0xff]
  %v56 = vld [vmem:[%s0 + $0x100] sm:$0xff]
  %v57 = vld [vmem:[%s0 + $0x108] sm:$0xff]
  %v58 = vld [vmem:[%s0 + $0x110] sm:$0xff]
  %v59 = vld [vmem:[%s0 + $0x118] sm:$0xff]
  %v60 = vld [vmem:[%s0 + $0x120] sm:$0xff]
  %v61 = vld [vmem:[%s0 + $0x128] sm:$0xff]
  %v62 = vld [vmem:[%s0 + $0x130] sm:$0xff]
  %v63 = vld [vmem:[%s0 + $0x138] sm:$0xff]
  %v64 = vld [vmem:[%s0 + $0x140] sm:$0xff]
  %v65 = vld [vmem:[%s0 + $0x148] sm:$0xff]
  %v66 = vld [vmem:[%s0 + $0x150] sm:$0xff]
  %v67 = vld [vmem:[%s0 + $0x158] sm:$0xff]
  %v68 = vld [vmem:[%s0 + $0x160] sm:$0xff]
  %v69 = vld [vmem:[%s0 + $0x168] sm:$0xff]
  %v70 = vld [vmem:[%s0 + $0x170] sm:$0xff]
  %v71 = vld [vmem:[%s0 + $0x178] sm:$0xff]
  %v72 = vld [vmem:[%s0 + $0x180] sm:$0xff]
  %v73 = vld [vmem:[%s0 + $0x188] sm:$0xff]
  %v74 = vld [vmem:[%s0 + $0x190] sm:$0xff]
  %v75 = vld [vmem:[%s0 + $0x198] sm:$0xff]
  %v76 = vld [vmem:[%s0 + $0x1a0] sm:$0xff]
  %v77 = vld [vmem:[%s0 + $0x1a8] sm:$0xff]
  %v78 = vld [vmem:[%s0 + $0x1b0] sm:$0xff]
  %v79 = vld [vmem:[%s0 + $0x1b8] sm:$0xff]
  %v80 = vld [vmem:[%s0 + $0x1c0] sm:$0xff]
  %v81 = vld [vmem:[%s0 + $0x1c8] sm:$0xff]
  %v82 = vld [vmem:[%s0 + $0x1d0] sm:$0xff]
  %v83 = vld [vmem:[%s0 + $0x1d8] sm:$0xff]
  %v84 = vld [vmem:[%s0 + $0x1e0] sm:$0xff]
  %v85 = vld [vmem:[%s0 + $0x1e8] sm:$0xff]
  %v86 = vld [vmem:[%s0 + $0x1f0] sm:$0xff]
  %v87 = vld [vmem:[%s0 + $0x1f8] sm:$0xff]
  %v88 = vld [vmem:[%s1] sm:$0xf]
  %v89 = vld [vmem:[%s1 + $0x4] sm:$0xf]
  %v90 = vld [vmem:[%s1 + $0x8] sm:$0xf]
  %v91 = vld [vmem:[%s1 + $0xc] sm:$0xf]
  %v92 = vld [vmem:[%s1 + $0x10] sm:$0xf]
  %v93 = vld [vmem:[%s1 + $0x14] sm:$0xf]
  %v94 = vld [vmem:[%s1 + $0x18] sm:$0xf]
  %v95 = vld [vmem:[%s1 + $0x1c] sm:$0xf]
  %v96 = vld [vmem:[%s1 + $0x20] sm:$0xf]
  %v97 = vld [vmem:[%s1 + $0x24] sm:$0xf]
  %v98 = vld [vmem:[%s1 + $0x28] sm:$0xf]
  %v99 = vld [vmem:[%s1 + $0x2c] sm:$0xf]
  %v100 = vld [vmem:[%s1 + $0x30] sm:$0xf]
  %v101 = vld [vmem:[%s1 + $0x34] sm:$0xf]
  %v102 = vld [vmem:[%s1 + $0x38] sm:$0xf]
  %v103 = vld [vmem:[%s1 + $0x3c] sm:$0xf]
  %v104 = vld [vmem:[%s1 + $0x40] sm:$0xf]
  %v105 = vld [vmem:[%s1 + $0x44] sm:$0xf]
  %v106 = vld [vmem:[%s1 + $0x48] sm:$0xf]
  %v107 = vld [vmem:[%s1 + $0x4c] sm:$0xf]
  %v108 = vld [vmem:[%s1 + $0x50] sm:$0xf]
  %v109 = vld [vmem:[%s1 + $0x54] sm:$0xf]
  %v110 = vld [vmem:[%s1 + $0x58] sm:$0xf]
  %v111 = vld [vmem:[%s1 + $0x5c] sm:$0xf]
  %v112 = vld [vmem:[%s1 + $0x60] sm:$0xf]
  %v113 = vld [vmem:[%s1 + $0x64] sm:$0xf]
  %v114 = vld [vmem:[%s1 + $0x68] sm:$0xf]
  %v115 = vld [vmem:[%s1 + $0x6c] sm:$0xf]
  %v116 = vld [vmem:[%s1 + $0x70] sm:$0xf]
  %v117 = vld [vmem:[%s1 + $0x74] sm:$0xf]
  %v118 = vld [vmem:[%s1 + $0x78] sm:$0xf]
  %v119 = vld [vmem:[%s1 + $0x7c] sm:$0xf]
  %v184 = vunpack.c.l.b16 %v24
  %v185 = vunpack.c.h.b16 %v24
  %v186 = vunpack.c.l.b16 %v25
  %v187 = vunpack.c.h.b16 %v25
  %v188 = vunpack.c.l.b16 %v26
  %v189 = vunpack.c.h.b16 %v26
  %v190 = vunpack.c.l.b16 %v27
  %v191 = vunpack.c.h.b16 %v27
  %v192 = vunpack.c.l.b16 %v28
  %v193 = vunpack.c.h.b16 %v28
  %v194 = vunpack.c.l.b16 %v29
  %v195 = vunpack.c.h.b16 %v29
  %v196 = vunpack.c.l.b16 %v30
  %v197 = vunpack.c.h.b16 %v30
  %v198 = vunpack.c.l.b16 %v31
  %v199 = vunpack.c.h.b16 %v31
  %v200 = vunpack.c.l.b16 %v32
  %v201 = vunpack.c.h.b16 %v32
  %v202 = vunpack.c.l.b16 %v33
  %v203 = vunpack.c.h.b16 %v33
  %v204 = vunpack.c.l.b16 %v34
  %v205 = vunpack.c.h.b16 %v34
  %v206 = vunpack.c.l.b16 %v35
  %v207 = vunpack.c.h.b16 %v35
  %v208 = vunpack.c.l.b16 %v36
  %v209 = vunpack.c.h.b16 %v36
  %v210 = vunpack.c.l.b16 %v37
  %v211 = vunpack.c.h.b16 %v37
  %v212 = vunpack.c.l.b16 %v38
  %v213 = vunpack.c.h.b16 %v38
  %v214 = vunpack.c.l.b16 %v39
  %v215 = vunpack.c.h.b16 %v39
  %v216 = vunpack.c.l.b16 %v40
  %v217 = vunpack.c.h.b16 %v40
  %v218 = vunpack.c.l.b16 %v41
  %v219 = vunpack.c.h.b16 %v41
  %v220 = vunpack.c.l.b16 %v42
  %v221 = vunpack.c.h.b16 %v42
  %v222 = vunpack.c.l.b16 %v43
  %v223 = vunpack.c.h.b16 %v43
  %v224 = vunpack.c.l.b16 %v44
  %v225 = vunpack.c.h.b16 %v44
  %v226 = vunpack.c.l.b16 %v45
  %v227 = vunpack.c.h.b16 %v45
  %v228 = vunpack.c.l.b16 %v46
  %v229 = vunpack.c.h.b16 %v46
  %v230 = vunpack.c.l.b16 %v47
  %v231 = vunpack.c.h.b16 %v47
  %v232 = vunpack.c.l.b16 %v48
  %v233 = vunpack.c.h.b16 %v48
  %v234 = vunpack.c.l.b16 %v49
  %v235 = vunpack.c.h.b16 %v49
  %v236 = vunpack.c.l.b16 %v50
  %v237 = vunpack.c.h.b16 %v50
  %v238 = vunpack.c.l.b16 %v51
  %v239 = vunpack.c.h.b16 %v51
  %v240 = vunpack.c.l.b16 %v52
  %v241 = vunpack.c.h.b16 %v52
  %v242 = vunpack.c.l.b16 %v53
  %v243 = vunpack.c.h.b16 %v53
  %v244 = vunpack.c.l.b16 %v54
  %v245 = vunpack.c.h.b16 %v54
  %v246 = vunpack.c.l.b16 %v55
  %v247 = vunpack.c.h.b16 %v55
  %v248 = vunpack.c.l.b16 %v56
  %v249 = vunpack.c.h.b16 %v56
  %v250 = vunpack.c.l.b16 %v57
  %v251 = vunpack.c.h.b16 %v57
  %v252 = vunpack.c.l.b16 %v58
  %v253 = vunpack.c.h.b16 %v58
  %v254 = vunpack.c.l.b16 %v59
  %v255 = vunpack.c.h.b16 %v59
  %v256 = vunpack.c.l.b16 %v60
  %v257 = vunpack.c.h.b16 %v60
  %v258 = vunpack.c.l.b16 %v61
  %v259 = vunpack.c.h.b16 %v61
  %v260 = vunpack.c.l.b16 %v62
  %v261 = vunpack.c.h.b16 %v62
  %v262 = vunpack.c.l.b16 %v63
  %v263 = vunpack.c.h.b16 %v63
  %v264 = vunpack.c.l.b16 %v64
  %v265 = vunpack.c.h.b16 %v64
  %v266 = vunpack.c.l.b16 %v65
  %v267 = vunpack.c.h.b16 %v65
  %v268 = vunpack.c.l.b16 %v66
  %v269 = vunpack.c.h.b16 %v66
  %v270 = vunpack.c.l.b16 %v67
  %v271 = vunpack.c.h.b16 %v67
  %v272 = vunpack.c.l.b16 %v68
  %v273 = vunpack.c.h.b16 %v68
  %v274 = vunpack.c.l.b16 %v69
  %v275 = vunpack.c.h.b16 %v69
  %v276 = vunpack.c.l.b16 %v70
  %v277 = vunpack.c.h.b16 %v70
  %v278 = vunpack.c.l.b16 %v71
  %v279 = vunpack.c.h.b16 %v71
  %v280 = vunpack.c.l.b16 %v72
  %v281 = vunpack.c.h.b16 %v72
  %v282 = vunpack.c.l.b16 %v73
  %v283 = vunpack.c.h.b16 %v73
  %v284 = vunpack.c.l.b16 %v74
  %v285 = vunpack.c.h.b16 %v74
  %v286 = vunpack.c.l.b16 %v75
  %v287 = vunpack.c.h.b16 %v75
  %v288 = vunpack.c.l.b16 %v76
  %v289 = vunpack.c.h.b16 %v76
  %v290 = vunpack.c.l.b16 %v77
  %v291 = vunpack.c.h.b16 %v77
  %v292 = vunpack.c.l.b16 %v78
  %v293 = vunpack.c.h.b16 %v78
  %v294 = vunpack.c.l.b16 %v79
  %v295 = vunpack.c.h.b16 %v79
  %v296 = vunpack.c.l.b16 %v80
  %v297 = vunpack.c.h.b16 %v80
  %v298 = vunpack.c.l.b16 %v81
  %v299 = vunpack.c.h.b16 %v81
  %v300 = vunpack.c.l.b16 %v82
  %v301 = vunpack.c.h.b16 %v82
  %v302 = vunpack.c.l.b16 %v83
  %v303 = vunpack.c.h.b16 %v83
  %v304 = vunpack.c.l.b16 %v84
  %v305 = vunpack.c.h.b16 %v84
  %v306 = vunpack.c.l.b16 %v85
  %v307 = vunpack.c.h.b16 %v85
  %v308 = vunpack.c.l.b16 %v86
  %v309 = vunpack.c.h.b16 %v86
  %v310 = vunpack.c.l.b16 %v87
  %v311 = vunpack.c.h.b16 %v87
  %v312 = vpack.c.b16 %v186, %v184
  %v313 = vpack.c.b16 %v187, %v185
  %v314 = vpack.c.b16 %v190, %v188
  %v315 = vpack.c.b16 %v191, %v189
  %v316 = vpack.c.b16 %v194, %v192
  %v317 = vpack.c.b16 %v195, %v193
  %v318 = vpack.c.b16 %v198, %v196
  %v319 = vpack.c.b16 %v199, %v197
  %v320 = vpack.c.b16 %v202, %v200
  %v321 = vpack.c.b16 %v203, %v201
  %v322 = vpack.c.b16 %v206, %v204
  %v323 = vpack.c.b16 %v207, %v205
  %v324 = vpack.c.b16 %v210, %v208
  %v325 = vpack.c.b16 %v211, %v209
  %v326 = vpack.c.b16 %v214, %v212
  %v327 = vpack.c.b16 %v215, %v213
  %v328 = vpack.c.b16 %v218, %v216
  %v329 = vpack.c.b16 %v219, %v217
  %v330 = vpack.c.b16 %v222, %v220
  %v331 = vpack.c.b16 %v223, %v221
  %v332 = vpack.c.b16 %v226, %v224
  %v333 = vpack.c.b16 %v227, %v225
  %v334 = vpack.c.b16 %v230, %v228
  %v335 = vpack.c.b16 %v231, %v229
  %v336 = vpack.c.b16 %v234, %v232
  %v337 = vpack.c.b16 %v235, %v233
  %v338 = vpack.c.b16 %v238, %v236
  %v339 = vpack.c.b16 %v239, %v237
  %v340 = vpack.c.b16 %v242, %v240
  %v341 = vpack.c.b16 %v243, %v241
  %v342 = vpack.c.b16 %v246, %v244
  %v343 = vpack.c.b16 %v247, %v245
  %v344 = vpack.c.b16 %v250, %v248
  %v345 = vpack.c.b16 %v251, %v249
  %v346 = vpack.c.b16 %v254, %v252
  %v347 = vpack.c.b16 %v255, %v253
  %v348 = vpack.c.b16 %v258, %v256
  %v349 = vpack.c.b16 %v259, %v257
  %v350 = vpack.c.b16 %v262, %v260
  %v351 = vpack.c.b16 %v263, %v261
  %v352 = vpack.c.b16 %v266, %v264
  %v353 = vpack.c.b16 %v267, %v265
  %v354 = vpack.c.b16 %v270, %v268
  %v355 = vpack.c.b16 %v271, %v269
  %v356 = vpack.c.b16 %v274, %v272
  %v357 = vpack.c.b16 %v275, %v273
  %v358 = vpack.c.b16 %v278, %v276
  %v359 = vpack.c.b16 %v279, %v277
  %v360 = vpack.c.b16 %v282, %v280
  %v361 = vpack.c.b16 %v283, %v281
  %v362 = vpack.c.b16 %v286, %v284
  %v363 = vpack.c.b16 %v287, %v285
  %v364 = vpack.c.b16 %v290, %v288
  %v365 = vpack.c.b16 %v291, %v289
  %v366 = vpack.c.b16 %v294, %v292
  %v367 = vpack.c.b16 %v295, %v293
  %v368 = vpack.c.b16 %v298, %v296
  %v369 = vpack.c.b16 %v299, %v297
  %v370 = vpack.c.b16 %v302, %v300
  %v371 = vpack.c.b16 %v303, %v301
  %v372 = vpack.c.b16 %v306, %v304
  %v373 = vpack.c.b16 %v307, %v305
  %v374 = vpack.c.b16 %v310, %v308
  %v375 = vpack.c.b16 %v311, %v309
  %v472 = vunpack.c.l.b16 %v88
  %v473 = vunpack.c.l.b16 %v89
  %v474 = vunpack.c.l.b16 %v90
  %v475 = vunpack.c.l.b16 %v91
  %v476 = vunpack.c.l.b16 %v92
  %v477 = vunpack.c.l.b16 %v93
  %v478 = vunpack.c.l.b16 %v94
  %v479 = vunpack.c.l.b16 %v95
  %v480 = vunpack.c.l.b16 %v96
  %v481 = vunpack.c.l.b16 %v97
  %v482 = vunpack.c.l.b16 %v98
  %v483 = vunpack.c.l.b16 %v99
  %v484 = vunpack.c.l.b16 %v100
  %v485 = vunpack.c.l.b16 %v101
  %v486 = vunpack.c.l.b16 %v102
  %v487 = vunpack.c.l.b16 %v103
  %v488 = vunpack.c.l.b16 %v104
  %v489 = vunpack.c.l.b16 %v105
  %v490 = vunpack.c.l.b16 %v106
  %v491 = vunpack.c.l.b16 %v107
  %v492 = vunpack.c.l.b16 %v108
  %v493 = vunpack.c.l.b16 %v109
  %v494 = vunpack.c.l.b16 %v110
  %v495 = vunpack.c.l.b16 %v111
  %v496 = vunpack.c.l.b16 %v112
  %v497 = vunpack.c.l.b16 %v113
  %v498 = vunpack.c.l.b16 %v114
  %v499 = vunpack.c.l.b16 %v115
  %v500 = vunpack.c.l.b16 %v116
  %v501 = vunpack.c.l.b16 %v117
  %v502 = vunpack.c.l.b16 %v118
  %v503 = vunpack.c.l.b16 %v119
  %v504 = vpack.c.b16 %v473, %v472
  %v505 = vpack.c.b16 %v475, %v474
  %v506 = vpack.c.b16 %v477, %v476
  %v507 = vpack.c.b16 %v479, %v478
  %v508 = vpack.c.b16 %v481, %v480
  %v509 = vpack.c.b16 %v483, %v482
  %v510 = vpack.c.b16 %v485, %v484
  %v511 = vpack.c.b16 %v487, %v486
  %v512 = vpack.c.b16 %v489, %v488
  %v513 = vpack.c.b16 %v491, %v490
  %v514 = vpack.c.b16 %v493, %v492
  %v515 = vpack.c.b16 %v495, %v494
  %v516 = vpack.c.b16 %v497, %v496
  %v517 = vpack.c.b16 %v499, %v498
  %v518 = vpack.c.b16 %v501, %v500
  %v519 = vpack.c.b16 %v503, %v502
  %536 = vmatprep.subr.bf16.mxu0 0
  %537 = vmatpush1.bf16.msra.mxu0 %v504
  %538 = vmatprep.subr.bf16.mxu0 0
  %539 = vmatpush1.bf16.msra.mxu0 %v505
  %540 = vmatprep.subr.bf16.mxu0 0
  %541 = vmatpush1.bf16.msra.mxu0 %v506
  %542 = vmatprep.subr.bf16.mxu0 0
  %543 = vmatpush1.bf16.msra.mxu0 %v507
  %544 = vmatprep.subr.bf16.mxu0 0
  %545 = vmatpush1.bf16.msra.mxu0 %v508
  %546 = vmatprep.subr.bf16.mxu0 0
  %547 = vmatpush1.bf16.msra.mxu0 %v509
  %548 = vmatprep.subr.bf16.mxu0 0
  %549 = vmatpush1.bf16.msra.mxu0 %v510
  %550 = vmatprep.subr.bf16.mxu0 0
  %551 = vmatpush1.bf16.msra.mxu0 %v511
  %552 = vmatprep.subr.bf16.mxu0 0
  %553 = vmatpush1.bf16.msra.mxu0 %v512
  %554 = vmatprep.subr.bf16.mxu0 0
  %555 = vmatpush1.bf16.msra.mxu0 %v513
  %556 = vmatprep.subr.bf16.mxu0 0
  %557 = vmatpush1.bf16.msra.mxu0 %v514
  %558 = vmatprep.subr.bf16.mxu0 0
  %559 = vmatpush1.bf16.msra.mxu0 %v515
  %560 = vmatprep.subr.bf16.mxu0 0
  %561 = vmatpush1.bf16.msra.mxu0 %v516
  %562 = vmatprep.subr.bf16.mxu0 0
  %563 = vmatpush1.bf16.msra.mxu0 %v517
  %564 = vmatprep.subr.bf16.mxu0 0
  %565 = vmatpush1.bf16.msra.mxu0 %v518
  %566 = vmatprep.subr.bf16.mxu0 0
  %567 = vmatpush1.bf16.msra.mxu0 %v519
  %568 = vmatprep.mubr.bf16.mxu0 %v313
  %569 = vmatmul.mubr.bf16.gmra.mrb[0].mxu0 %v312
  %v570 = vpop.f32.mrb[0].mxu0
  %v571 = vadd.f32 0.0, %v570
  %v572 = vpop.f32.mrb[0].mxu0
  %v573 = vpop.f32.mrb[0].mxu0
  %v574 = vadd.f32 0.0, %v573
  %v575 = vpop.f32.mrb[0].mxu0
  %576 = vmatprep.mubr.bf16.mxu0 %v315
  %577 = vmatmul.mubr.bf16.gmra.mrb[0].mxu0 %v314
  %v578 = vpop.f32.mrb[0].mxu0
  %v579 = vadd.f32 0.0, %v578
  %v580 = vpop.f32.mrb[0].mxu0
  %v581 = vpop.f32.mrb[0].mxu0
  %v582 = vadd.f32 0.0, %v581
  %v583 = vpop.f32.mrb[0].mxu0
  %584 = vmatprep.mubr.bf16.mxu0 %v317
  %585 = vmatmul.mubr.bf16.gmra.mrb[0].mxu0 %v316
  %v586 = vpop.f32.mrb[0].mxu0
  %v587 = vadd.f32 0.0, %v586
  %v588 = vpop.f32.mrb[0].mxu0
  %v589 = vpop.f32.mrb[0].mxu0
  %v590 = vadd.f32 0.0, %v589
  %v591 = vpop.f32.mrb[0].mxu0
  %592 = vmatprep.mubr.bf16.mxu0 %v319
  %593 = vmatmul.mubr.bf16.gmra.mrb[0].mxu0 %v318
  %v594 = vpop.f32.mrb[0].mxu0
  %v595 = vadd.f32 0.0, %v594
  %v596 = vpop.f32.mrb[0].mxu0
  %v597 = vpop.f32.mrb[0].mxu0
  %v598 = vadd.f32 0.0, %v597
  %v599 = vpop.f32.mrb[0].mxu0
  %600 = vmatprep.mubr.bf16.mxu0 %v321
  %601 = vmatmul.mubr.bf16.gmra.mrb[0].mxu0 %v320
  %v602 = vpop.f32.mrb[0].mxu0
  %v603 = vadd.f32 0.0, %v602
  %v604 = vpop.f32.mrb[0].mxu0
  %v605 = vpop.f32.mrb[0].mxu0
  %v606 = vadd.f32 0.0, %v605
  %v607 = vpop.f32.mrb[0].mxu0
  %608 = vmatprep.mubr.bf16.mxu0 %v323
  %609 = vmatmul.mubr.bf16.gmra.mrb[0].mxu0 %v322
  %v610 = vpop.f32.mrb[0].mxu0
  %v611 = vadd.f32 0.0, %v610
  %v612 = vpop.f32.mrb[0].mxu0
  %v613 = vpop.f32.mrb[0].mxu0
  %v614 = vadd.f32 0.0, %v613
  %v615 = vpop.f32.mrb[0].mxu0
  %616 = vmatprep.mubr.bf16.mxu0 %v325
  %617 = vmatmul.mubr.bf16.gmra.mrb[0].mxu0 %v324
  %v618 = vpop.f32.mrb[0].mxu0
  %v619 = vadd.f32 0.0, %v618
  %v620 = vpop.f32.mrb[0].mxu0
  %v621 = vpop.f32.mrb[0].mxu0
  %v622 = vadd.f32 0.0, %v621
  %v623 = vpop.f32.mrb[0].mxu0
  %624 = vmatprep.mubr.bf16.mxu0 %v327
  %625 = vmatmul.mubr.bf16.gmra.mrb[0].mxu0 %v326
  %v626 = vpop.f32.mrb[0].mxu0
  %v627 = vadd.f32 0.0, %v626
  %v628 = vpop.f32.mrb[0].mxu0
  %v629 = vpop.f32.mrb[0].mxu0
  %v630 = vadd.f32 0.0, %v629
  %v631 = vpop.f32.mrb[0].mxu0
  %632 = vmatprep.mubr.bf16.mxu0 %v329
  %633 = vmatmul.mubr.bf16.gmra.mrb[0].mxu0 %v328
  %v634 = vpop.f32.mrb[0].mxu0
  %v635 = vadd.f32 0.0, %v634
  %v636 = vpop.f32.mrb[0].mxu0
  %v637 = vpop.f32.mrb[0].mxu0
  %v638 = vadd.f32 0.0, %v637
  %v639 = vpop.f32.mrb[0].mxu0
  %640 = vmatprep.mubr.bf16.mxu0 %v331
  %641 = vmatmul.mubr.bf16.gmra.mrb[0].mxu0 %v330
  %v642 = vpop.f32.mrb[0].mxu0
  %v643 = vadd.f32 0.0, %v642
  %v644 = vpop.f32.mrb[0].mxu0
  %v645 = vpop.f32.mrb[0].mxu0
  %v646 = vadd.f32 0.0, %v645
  %v647 = vpop.f32.mrb[0].mxu0
  %648 = vmatprep.mubr.bf16.mxu0 %v333
  %649 = vmatmul.mubr.bf16.gmra.mrb[0].mxu0 %v332
  %v650 = vpop.f32.mrb[0].mxu0
  %v651 = vadd.f32 0.0, %v650
  %v652 = vpop.f32.mrb[0].mxu0
  %v653 = vpop.f32.mrb[0].mxu0
  %v654 = vadd.f32 0.0, %v653
  %v655 = vpop.f32.mrb[0].mxu0
  %656 = vmatprep.mubr.bf16.mxu0 %v335
  %657 = vmatmul.mubr.bf16.gmra.mrb[0].mxu0 %v334
  %v658 = vpop.f32.mrb[0].mxu0
  %v659 = vadd.f32 0.0, %v658
  %v660 = vpop.f32.mrb[0].mxu0
  %v661 = vpop.f32.mrb[0].mxu0
  %v662 = vadd.f32 0.0, %v661
  %v663 = vpop.f32.mrb[0].mxu0
  %664 = vmatprep.mubr.bf16.mxu0 %v337
  %665 = vmatmul.mubr.bf16.gmra.mrb[0].mxu0 %v336
  %v666 = vpop.f32.mrb[0].mxu0
  %v667 = vadd.f32 0.0, %v666
  %v668 = vpop.f32.mrb[0].mxu0
  %v669 = vpop.f32.mrb[0].mxu0
  %v670 = vadd.f32 0.0, %v669
  %v671 = vpop.f32.mrb[0].mxu0
  %672 = vmatprep.mubr.bf16.mxu0 %v339
  %673 = vmatmul.mubr.bf16.gmra.mrb[0].mxu0 %v338
  %v674 = vpop.f32.mrb[0].mxu0
  %v675 = vadd.f32 0.0, %v674
  %v676 = vpop.f32.mrb[0].mxu0
  %v677 = vpop.f32.mrb[0].mxu0
  %v678 = vadd.f32 0.0, %v677
  %v679 = vpop.f32.mrb[0].mxu0
  %680 = vmatprep.mubr.bf16.mxu0 %v341
  %681 = vmatmul.mubr.bf16.gmra.mrb[0].mxu0 %v340
  %v682 = vpop.f32.mrb[0].mxu0
  %v683 = vadd.f32 0.0, %v682
  %v684 = vpop.f32.mrb[0].mxu0
  %v685 = vpop.f32.mrb[0].mxu0
  %v686 = vadd.f32 0.0, %v685
  %v687 = vpop.f32.mrb[0].mxu0
  %688 = vmatprep.mubr.bf16.mxu0 %v343
  %689 = vmatmul.mubr.bf16.gmra.mrb[0].mxu0 %v342
  %v690 = vpop.f32.mrb[0].mxu0
  %v691 = vadd.f32 0.0, %v690
  %v692 = vpop.f32.mrb[0].mxu0
  %v693 = vpop.f32.mrb[0].mxu0
  %v694 = vadd.f32 0.0, %v693
  %v695 = vpop.f32.mrb[0].mxu0
  %696 = vmatprep.mubr.bf16.mxu0 %v345
  %697 = vmatmul.mubr.bf16.gmra.mrb[0].mxu0 %v344
  %v698 = vpop.f32.mrb[0].mxu0
  %v699 = vadd.f32 0.0, %v698
  %v700 = vpop.f32.mrb[0].mxu0
  %v701 = vpop.f32.mrb[0].mxu0
  %v702 = vadd.f32 0.0, %v701
  %v703 = vpop.f32.mrb[0].mxu0
  %704 = vmatprep.mubr.bf16.mxu0 %v347
  %705 = vmatmul.mubr.bf16.gmra.mrb[0].mxu0 %v346
  %v706 = vpop.f32.mrb[0].mxu0
  %v707 = vadd.f32 0.0, %v706
  %v708 = vpop.f32.mrb[0].mxu0
  %v709 = vpop.f32.mrb[0].mxu0
  %v710 = vadd.f32 0.0, %v709
  %v711 = vpop.f32.mrb[0].mxu0
  %712 = vmatprep.mubr.bf16.mxu0 %v349
  %713 = vmatmul.mubr.bf16.gmra.mrb[0].mxu0 %v348
  %v714 = vpop.f32.mrb[0].mxu0
  %v715 = vadd.f32 0.0, %v714
  %v716 = vpop.f32.mrb[0].mxu0
  %v717 = vpop.f32.mrb[0].mxu0
  %v718 = vadd.f32 0.0, %v717
  %v719 = vpop.f32.mrb[0].mxu0
  %720 = vmatprep.mubr.bf16.mxu0 %v351
  %721 = vmatmul.mubr.bf16.gmra.mrb[0].mxu0 %v350
  %v722 = vpop.f32.mrb[0].mxu0
  %v723 = vadd.f32 0.0, %v722
  %v724 = vpop.f32.mrb[0].mxu0
  %v725 = vpop.f32.mrb[0].mxu0
  %v726 = vadd.f32 0.0, %v725
  %v727 = vpop.f32.mrb[0].mxu0
  %728 = vmatprep.mubr.bf16.mxu0 %v353
  %729 = vmatmul.mubr.bf16.gmra.mrb[0].mxu0 %v352
  %v730 = vpop.f32.mrb[0].mxu0
  %v731 = vadd.f32 0.0, %v730
  %v732 = vpop.f32.mrb[0].mxu0
  %v733 = vpop.f32.mrb[0].mxu0
  %v734 = vadd.f32 0.0, %v733
  %v735 = vpop.f32.mrb[0].mxu0
  %736 = vmatprep.mubr.bf16.mxu0 %v355
  %737 = vmatmul.mubr.bf16.gmra.mrb[0].mxu0 %v354
  %v738 = vpop.f32.mrb[0].mxu0
  %v739 = vadd.f32 0.0, %v738
  %v740 = vpop.f32.mrb[0].mxu0
  %v741 = vpop.f32.mrb[0].mxu0
  %v742 = vadd.f32 0.0, %v741
  %v743 = vpop.f32.mrb[0].mxu0
  %744 = vmatprep.mubr.bf16.mxu0 %v357
  %745 = vmatmul.mubr.bf16.gmra.mrb[0].mxu0 %v356
  %v746 = vpop.f32.mrb[0].mxu0
  %v747 = vadd.f32 0.0, %v746
  %v748 = vpop.f32.mrb[0].mxu0
  %v749 = vpop.f32.mrb[0].mxu0
  %v750 = vadd.f32 0.0, %v749
  %v751 = vpop.f32.mrb[0].mxu0
  %752 = vmatprep.mubr.bf16.mxu0 %v359
  %753 = vmatmul.mubr.bf16.gmra.mrb[0].mxu0 %v358
  %v754 = vpop.f32.mrb[0].mxu0
  %v755 = vadd.f32 0.0, %v754
  %v756 = vpop.f32.mrb[0].mxu0
  %v757 = vpop.f32.mrb[0].mxu0
  %v758 = vadd.f32 0.0, %v757
  %v759 = vpop.f32.mrb[0].mxu0
  %760 = vmatprep.mubr.bf16.mxu0 %v361
  %761 = vmatmul.mubr.bf16.gmra.mrb[0].mxu0 %v360
  %v762 = vpop.f32.mrb[0].mxu0
  %v763 = vadd.f32 0.0, %v762
  %v764 = vpop.f32.mrb[0].mxu0
  %v765 = vpop.f32.mrb[0].mxu0
  %v766 = vadd.f32 0.0, %v765
  %v767 = vpop.f32.mrb[0].mxu0
  %768 = vmatprep.mubr.bf16.mxu0 %v363
  %769 = vmatmul.mubr.bf16.gmra.mrb[0].mxu0 %v362
  %v770 = vpop.f32.mrb[0].mxu0
  %v771 = vadd.f32 0.0, %v770
  %v772 = vpop.f32.mrb[0].mxu0
  %v773 = vpop.f32.mrb[0].mxu0
  %v774 = vadd.f32 0.0, %v773
  %v775 = vpop.f32.mrb[0].mxu0
  %776 = vmatprep.mubr.bf16.mxu0 %v365
  %777 = vmatmul.mubr.bf16.gmra.mrb[0].mxu0 %v364
  %v778 = vpop.f32.mrb[0].mxu0
  %v779 = vadd.f32 0.0, %v778
  %v780 = vpop.f32.mrb[0].mxu0
  %v781 = vpop.f32.mrb[0].mxu0
  %v782 = vadd.f32 0.0, %v781
  %v783 = vpop.f32.mrb[0].mxu0
  %784 = vmatprep.mubr.bf16.mxu0 %v367
  %785 = vmatmul.mubr.bf16.gmra.mrb[0].mxu0 %v366
  %v786 = vpop.f32.mrb[0].mxu0
  %v787 = vadd.f32 0.0, %v786
  %v788 = vpop.f32.mrb[0].mxu0
  %v789 = vpop.f32.mrb[0].mxu0
  %v790 = vadd.f32 0.0, %v789
  %v791 = vpop.f32.mrb[0].mxu0
  %792 = vmatprep.mubr.bf16.mxu0 %v369
  %793 = vmatmul.mubr.bf16.gmra.mrb[0].mxu0 %v368
  %v794 = vpop.f32.mrb[0].mxu0
  %v795 = vadd.f32 0.0, %v794
  %v796 = vpop.f32.mrb[0].mxu0
  %v797 = vpop.f32.mrb[0].mxu0
  %v798 = vadd.f32 0.0, %v797
  %v799 = vpop.f32.mrb[0].mxu0
  %800 = vmatprep.mubr.bf16.mxu0 %v371
  %801 = vmatmul.mubr.bf16.gmra.mrb[0].mxu0 %v370
  %v802 = vpop.f32.mrb[0].mxu0
  %v803 = vadd.f32 0.0, %v802
  %v804 = vpop.f32.mrb[0].mxu0
  %v805 = vpop.f32.mrb[0].mxu0
  %v806 = vadd.f32 0.0, %v805
  %v807 = vpop.f32.mrb[0].mxu0
  %808 = vmatprep.mubr.bf16.mxu0 %v373
  %809 = vmatmul.mubr.bf16.gmra.mrb[0].mxu0 %v372
  %v810 = vpop.f32.mrb[0].mxu0
  %v811 = vadd.f32 0.0, %v810
  %v812 = vpop.f32.mrb[0].mxu0
  %v813 = vpop.f32.mrb[0].mxu0
  %v814 = vadd.f32 0.0, %v813
  %v815 = vpop.f32.mrb[0].mxu0
  %816 = vmatprep.mubr.bf16.mxu0 %v375
  %817 = vmatmul.mubr.bf16.gmra.mrb[0].mxu0 %v374
  %v818 = vpop.f32.mrb[0].mxu0
  %v819 = vadd.f32 0.0, %v818
  %v820 = vpop.f32.mrb[0].mxu0
  %v821 = vpop.f32.mrb[0].mxu0
  %v822 = vadd.f32 0.0, %v821
  %v823 = vpop.f32.mrb[0].mxu0
  %824 = vdwg.mxu0
  %s825 = smul.u32 0, 512
  %s826 = scalar_lea.vmem [#allocation2], %s825
  %827 = vst [vmem:[%s826] sm:$0xff] %v571
  %828 = vst [vmem:[%s826 + $0x8] sm:$0xff] %v574
  %829 = vst [vmem:[%s826 + $0x10] sm:$0xff] %v579
  %830 = vst [vmem:[%s826 + $0x18] sm:$0xff] %v582
  %831 = vst [vmem:[%s826 + $0x20] sm:$0xff] %v587
  %832 = vst [vmem:[%s826 + $0x28] sm:$0xff] %v590
  %833 = vst [vmem:[%s826 + $0x30] sm:$0xff] %v595
  %834 = vst [vmem:[%s826 + $0x38] sm:$0xff] %v598
  %835 = vst [vmem:[%s826 + $0x40] sm:$0xff] %v603
  %836 = vst [vmem:[%s826 + $0x48] sm:$0xff] %v606
  %837 = vst [vmem:[%s826 + $0x50] sm:$0xff] %v611
  %838 = vst [vmem:[%s826 + $0x58] sm:$0xff] %v614
  %839 = vst [vmem:[%s826 + $0x60] sm:$0xff] %v619
  %840 = vst [vmem:[%s826 + $0x68] sm:$0xff] %v622
  %841 = vst [vmem:[%s826 + $0x70] sm:$0xff] %v627
  %842 = vst [vmem:[%s826 + $0x78] sm:$0xff] %v630
  %843 = vst [vmem:[%s826 + $0x80] sm:$0xff] %v635
  %844 = vst [vmem:[%s826 + $0x88] sm:$0xff] %v638
  %845 = vst [vmem:[%s826 + $0x90] sm:$0xff] %v643
  %846 = vst [vmem:[%s826 + $0x98] sm:$0xff] %v646
  %847 = vst [vmem:[%s826 + $0xa0] sm:$0xff] %v651
  %848 = vst [vmem:[%s826 + $0xa8] sm:$0xff] %v654
  %849 = vst [vmem:[%s826 + $0xb0] sm:$0xff] %v659
  %850 = vst [vmem:[%s826 + $0xb8] sm:$0xff] %v662
  %851 = vst [vmem:[%s826 + $0xc0] sm:$0xff] %v667
  %852 = vst [vmem:[%s826 + $0xc8] sm:$0xff] %v670
  %853 = vst [vmem:[%s826 + $0xd0] sm:$0xff] %v675
  %854 = vst [vmem:[%s826 + $0xd8] sm:$0xff] %v678
  %855 = vst [vmem:[%s826 + $0xe0] sm:$0xff] %v683
  %856 = vst [vmem:[%s826 + $0xe8] sm:$0xff] %v686
  %857 = vst [vmem:[%s826 + $0xf0] sm:$0xff] %v691
  %858 = vst [vmem:[%s826 + $0xf8] sm:$0xff] %v694
  %859 = vst [vmem:[%s826 + $0x100] sm:$0xff] %v699
  %860 = vst [vmem:[%s826 + $0x108] sm:$0xff] %v702
  %861 = vst [vmem:[%s826 + $0x110] sm:$0xff] %v707
  %862 = vst [vmem:[%s826 + $0x118] sm:$0xff] %v710
  %863 = vst [vmem:[%s826 + $0x120] sm:$0xff] %v715
  %864 = vst [vmem:[%s826 + $0x128] sm:$0xff] %v718
  %865 = vst [vmem:[%s826 + $0x130] sm:$0xff] %v723
  %866 = vst [vmem:[%s826 + $0x138] sm:$0xff] %v726
  %867 = vst [vmem:[%s826 + $0x140] sm:$0xff] %v731
  %868 = vst [vmem:[%s826 + $0x148] sm:$0xff] %v734
  %869 = vst [vmem:[%s826 + $0x150] sm:$0xff] %v739
  %870 = vst [vmem:[%s826 + $0x158] sm:$0xff] %v742
  %871 = vst [vmem:[%s826 + $0x160] sm:$0xff] %v747
  %872 = vst [vmem:[%s826 + $0x168] sm:$0xff] %v750
  %873 = vst [vmem:[%s826 + $0x170] sm:$0xff] %v755
  %874 = vst [vmem:[%s826 + $0x178] sm:$0xff] %v758
  %875 = vst [vmem:[%s826 + $0x180] sm:$0xff] %v763
  %876 = vst [vmem:[%s826 + $0x188] sm:$0xff] %v766
  %877 = vst [vmem:[%s826 + $0x190] sm:$0xff] %v771
  %878 = vst [vmem:[%s826 + $0x198] sm:$0xff] %v774
  %879 = vst [vmem:[%s826 + $0x1a0] sm:$0xff] %v779
  %880 = vst [vmem:[%s826 + $0x1a8] sm:$0xff] %v782
  %881 = vst [vmem:[%s826 + $0x1b0] sm:$0xff] %v787
  %882 = vst [vmem:[%s826 + $0x1b8] sm:$0xff] %v790
  %883 = vst [vmem:[%s826 + $0x1c0] sm:$0xff] %v795
  %884 = vst [vmem:[%s826 + $0x1c8] sm:$0xff] %v798
  %885 = vst [vmem:[%s826 + $0x1d0] sm:$0xff] %v803
  %886 = vst [vmem:[%s826 + $0x1d8] sm:$0xff] %v806
  %887 = vst [vmem:[%s826 + $0x1e0] sm:$0xff] %v811
  %888 = vst [vmem:[%s826 + $0x1e8] sm:$0xff] %v814
  %889 = vst [vmem:[%s826 + $0x1f0] sm:$0xff] %v819
  %890 = vst [vmem:[%s826 + $0x1f8] sm:$0xff] %v822
  %v891 = vld [vmem:[#allocation3] sm:$0x1]
  %v892 = vadd.f32 %v571, %v574
  %v893 = vadd.f32 %v892, %v579
  %v894 = vadd.f32 %v893, %v582
  %v895 = vadd.f32 %v894, %v587
  %v896 = vadd.f32 %v895, %v590
  %v897 = vadd.f32 %v896, %v595
  %v898 = vadd.f32 %v897, %v598
  %v899 = vadd.f32 %v898, %v603
  %v900 = vadd.f32 %v899, %v606
  %v901 = vadd.f32 %v900, %v611
  %v902 = vadd.f32 %v901, %v614
  %v903 = vadd.f32 %v902, %v619
  %v904 = vadd.f32 %v903, %v622
  %v905 = vadd.f32 %v904, %v627
  %v906 = vadd.f32 %v905, %v630
  %v907 = vadd.f32 %v906, %v635
  %v908 = vadd.f32 %v907, %v638
  %v909 = vadd.f32 %v908, %v643
  %v910 = vadd.f32 %v909, %v646
  %v911 = vadd.f32 %v910, %v651
  %v912 = vadd.f32 %v911, %v654
  %v913 = vadd.f32 %v912, %v659
  %v914 = vadd.f32 %v913, %v662
  %v915 = vadd.f32 %v914, %v667
  %v916 = vadd.f32 %v915, %v670
  %v917 = vadd.f32 %v916, %v675
  %v918 = vadd.f32 %v917, %v678
  %v919 = vadd.f32 %v918, %v683
  %v920 = vadd.f32 %v919, %v686
  %v921 = vadd.f32 %v920, %v691
  %v922 = vadd.f32 %v921, %v694
  %v923 = vadd.f32 %v922, %v699
  %v924 = vadd.f32 %v923, %v702
  %v925 = vadd.f32 %v924, %v707
  %v926 = vadd.f32 %v925, %v710
  %v927 = vadd.f32 %v926, %v715
  %v928 = vadd.f32 %v927, %v718
  %v929 = vadd.f32 %v928, %v723
  %v930 = vadd.f32 %v929, %v726
  %v931 = vadd.f32 %v930, %v731
  %v932 = vadd.f32 %v931, %v734
  %v933 = vadd.f32 %v932, %v739
  %v934 = vadd.f32 %v933, %v742
  %v935 = vadd.f32 %v934, %v747
  %v936 = vadd.f32 %v935, %v750
  %v937 = vadd.f32 %v936, %v755
  %v938 = vadd.f32 %v937, %v758
  %v939 = vadd.f32 %v938, %v763
  %v940 = vadd.f32 %v939, %v766
  %v941 = vadd.f32 %v940, %v771
  %v942 = vadd.f32 %v941, %v774
  %v943 = vadd.f32 %v942, %v779
  %v944 = vadd.f32 %v943, %v782
  %v945 = vadd.f32 %v944, %v787
  %v946 = vadd.f32 %v945, %v790
  %v947 = vadd.f32 %v946, %v795
  %v948 = vadd.f32 %v947, %v798
  %v949 = vadd.f32 %v948, %v803
  %v950 = vadd.f32 %v949, %v806
  %v951 = vadd.f32 %v950, %v811
  %v952 = vadd.f32 %v951, %v814
  %v953 = vadd.f32 %v952, %v819
  %v954 = vadd.f32 %v953, %v822
  %v955 = vrot.slane %v954, 4
  %v956 = vadd.f32 %v954, %v955
  %v957 = vrot.slane %v956, 2
  %v958 = vadd.f32 %v956, %v957
  %v959 = vrot.slane %v958, 1
  %v960 = vadd.f32 %v958, %v959
  %v961 = vadd.f32 %v891, %v960
  %962 = vst [vmem:[#allocation3] sm:$0x1] %v961
  %v963 = vld [vmem:[#allocation4] sm:$0x1]
  %v964 = vmul.f32 %v571, %v571
  %v965 = vmul.f32 %v574, %v574
  %v966 = vmul.f32 %v579, %v579
  %v967 = vmul.f32 %v582, %v582
  %v968 = vmul.f32 %v587, %v587
  %v969 = vmul.f32 %v590, %v590
  %v970 = vmul.f32 %v595, %v595
  %v971 = vmul.f32 %v598, %v598
  %v972 = vmul.f32 %v603, %v603
  %v973 = vmul.f32 %v606, %v606
  %v974 = vmul.f32 %v611, %v611
  %v975 = vmul.f32 %v614, %v614
  %v976 = vmul.f32 %v619, %v619
  %v977 = vmul.f32 %v622, %v622
  %v978 = vmul.f32 %v627, %v627
  %v979 = vmul.f32 %v630, %v630
  %v980 = vmul.f32 %v635, %v635
  %v981 = vmul.f32 %v638, %v638
  %v982 = vmul.f32 %v643, %v643
  %v983 = vmul.f32 %v646, %v646
  %v984 = vmul.f32 %v651, %v651
  %v985 = vmul.f32 %v654, %v654
  %v986 = vmul.f32 %v659, %v659
  %v987 = vmul.f32 %v662, %v662
  %v988 = vmul.f32 %v667, %v667
  %v989 = vmul.f32 %v670, %v670
  %v990 = vmul.f32 %v675, %v675
  %v991 = vmul.f32 %v678, %v678
  %v992 = vmul.f32 %v683, %v683
  %v993 = vmul.f32 %v686, %v686
  %v994 = vmul.f32 %v691, %v691
  %v995 = vmul.f32 %v694, %v694
  %v996 = vmul.f32 %v699, %v699
  %v997 = vmul.f32 %v702, %v702
  %v998 = vmul.f32 %v707, %v707
  %v999 = vmul.f32 %v710, %v710
  %v1000 = vmul.f32 %v715, %v715
  %v1001 = vmul.f32 %v718, %v718
  %v1002 = vmul.f32 %v723, %v723
  %v1003 = vmul.f32 %v726, %v726
  %v1004 = vmul.f32 %v731, %v731
  %v1005 = vmul.f32 %v734, %v734
  %v1006 = vmul.f32 %v739, %v739
  %v1007 = vmul.f32 %v742, %v742
  %v1008 = vmul.f32 %v747, %v747
  %v1009 = vmul.f32 %v750, %v750
  %v1010 = vmul.f32 %v755, %v755
  %v1011 = vmul.f32 %v758, %v758
  %v1012 = vmul.f32 %v763, %v763
  %v1013 = vmul.f32 %v766, %v766
  %v1014 = vmul.f32 %v771, %v771
  %v1015 = vmul.f32 %v774, %v774
  %v1016 = vmul.f32 %v779, %v779
  %v1017 = vmul.f32 %v782, %v782
  %v1018 = vmul.f32 %v787, %v787
  %v1019 = vmul.f32 %v790, %v790
  %v1020 = vmul.f32 %v795, %v795
  %v1021 = vmul.f32 %v798, %v798
  %v1022 = vmul.f32 %v803, %v803
  %v1023 = vmul.f32 %v806, %v806
  %v1024 = vmul.f32 %v811, %v811
  %v1025 = vmul.f32 %v814, %v814
  %v1026 = vmul.f32 %v819, %v819
  %v1027 = vmul.f32 %v822, %v822
  %v1028 = vadd.f32 %v964, %v965
  %v1029 = vadd.f32 %v1028, %v966
  %v1030 = vadd.f32 %v1029, %v967
  %v1031 = vadd.f32 %v1030, %v968
  %v1032 = vadd.f32 %v1031, %v969
  %v1033 = vadd.f32 %v1032, %v970
  %v1034 = vadd.f32 %v1033, %v971
  %v1035 = vadd.f32 %v1034, %v972
  %v1036 = vadd.f32 %v1035, %v973
  %v1037 = vadd.f32 %v1036, %v974
  %v1038 = vadd.f32 %v1037, %v975
  %v1039 = vadd.f32 %v1038, %v976
  %v1040 = vadd.f32 %v1039, %v977
  %v1041 = vadd.f32 %v1040, %v978
  %v1042 = vadd.f32 %v1041, %v979
  %v1043 = vadd.f32 %v1042, %v980
  %v1044 = vadd.f32 %v1043, %v981
  %v1045 = vadd.f32 %v1044, %v982
  %v1046 = vadd.f32 %v1045, %v983
  %v1047 = vadd.f32 %v1046, %v984
  %v1048 = vadd.f32 %v1047, %v985
  %v1049 = vadd.f32 %v1048, %v986
  %v1050 = vadd.f32 %v1049, %v987
  %v1051 = vadd.f32 %v1050, %v988
  %v1052 = vadd.f32 %v1051, %v989
  %v1053 = vadd.f32 %v1052, %v990
  %v1054 = vadd.f32 %v1053, %v991
  %v1055 = vadd.f32 %v1054, %v992
  %v1056 = vadd.f32 %v1055, %v993
  %v1057 = vadd.f32 %v1056, %v994
  %v1058 = vadd.f32 %v1057, %v995
  %v1059 = vadd.f32 %v1058, %v996
  %v1060 = vadd.f32 %v1059, %v997
  %v1061 = vadd.f32 %v1060, %v998
  %v1062 = vadd.f32 %v1061, %v999
  %v1063 = vadd.f32 %v1062, %v1000
  %v1064 = vadd.f32 %v1063, %v1001
  %v1065 = vadd.f32 %v1064, %v1002
  %v1066 = vadd.f32 %v1065, %v1003
  %v1067 = vadd.f32 %v1066, %v1004
  %v1068 = vadd.f32 %v1067, %v1005
  %v1069 = vadd.f32 %v1068, %v1006
  %v1070 = vadd.f32 %v1069, %v1007
  %v1071 = vadd.f32 %v1070, %v1008
  %v1072 = vadd.f32 %v1071, %v1009
  %v1073 = vadd.f32 %v1072, %v1010
  %v1074 = vadd.f32 %v1073, %v1011
  %v1075 = vadd.f32 %v1074, %v1012
  %v1076 = vadd.f32 %v1075, %v1013
  %v1077 = vadd.f32 %v1076, %v1014
  %v1078 = vadd.f32 %v1077, %v1015
  %v1079 = vadd.f32 %v1078, %v1016
  %v1080 = vadd.f32 %v1079, %v1017
  %v1081 = vadd.f32 %v1080, %v1018
  %v1082 = vadd.f32 %v1081, %v1019
  %v1083 = vadd.f32 %v1082, %v1020
  %v1084 = vadd.f32 %v1083, %v1021
  %v1085 = vadd.f32 %v1084, %v1022
  %v1086 = vadd.f32 %v1085, %v1023
  %v1087 = vadd.f32 %v1086, %v1024
  %v1088 = vadd.f32 %v1087, %v1025
  %v1089 = vadd.f32 %v1088, %v1026
  %v1090 = vadd.f32 %v1089, %v1027
  %v1091 = vrot.slane %v1090, 4
  %v1092 = vadd.f32 %v1090, %v1091
  %v1093 = vrot.slane %v1092, 2
  %v1094 = vadd.f32 %v1092, %v1093
  %v1095 = vrot.slane %v1094, 1
  %v1096 = vadd.f32 %v1094, %v1095
  %v1097 = vadd.f32 %v963, %v1096
  %1098 = vst [vmem:[#allocation4] sm:$0x1] %v1097
  // Predicated region
  $region22: #{_lambda_.5} parent=0 // pred_check
    %p1099 = pneg %p18
  $region23: #{_lambda_.5} parent=0 // pred_check_branch
    %1101 = sbr.rel (%p1099) target = $region25
  $region24: #{_lambda_.5} parent=0 // pred_region
    %v1102 = vld [vmem:[#allocation3] sm:$0x1]
    %v1103 = vmul.f32 %v1102, 0.001953125
    %v1104 = vld [vmem:[#allocation4] sm:$0x1]
    %v1105 = vmul.f32 %v1104, 0.001953125
    %v1106 = vmul.f32 %v1103, %v1103
    %v1107 = vsub.f32 %v1105, %v1106
    %v1108 = vmax.f32 %v1107, 0.0
    %v1109 = vld [vmem:[%s2] sm:$0x1]
    %v1110 = vadd.f32 %v1108, 1e-05
    %v1111 = vrsqrt.pop %v1110
    %v1112 = vmul.f32 %v1109, %v1111
    %v1113 = vld [vmem:[%s3] sm:$0x1]
    %v1114 = vmul.f32 %v1103, %v1112
    %v1115 = vsub.f32 %v1113, %v1114
    %v1116 = vld [vmem:[#allocation2] sm:$0xff]
    %v1117 = vld [vmem:[#allocation2 + $0x8] sm:$0xff]
    %v1118 = vld [vmem:[#allocation2 + $0x10] sm:$0xff]
    %v1119 = vld [vmem:[#allocation2 + $0x18] sm:$0xff]
    %v1120 = vld [vmem:[#allocation2 + $0x20] sm:$0xff]
    %v1121 = vld [vmem:[#allocation2 + $0x28] sm:$0xff]
    %v1122 = vld [vmem:[#allocation2 + $0x30] sm:$0xff]
    %v1123 = vld [vmem:[#allocation2 + $0x38] sm:$0xff]
    %v1124 = vld [vmem:[#allocation2 + $0x40] sm:$0xff]
    %v1125 = vld [vmem:[#allocation2 + $0x48] sm:$0xff]
    %v1126 = vld [vmem:[#allocation2 + $0x50] sm:$0xff]
    %v1127 = vld [vmem:[#allocation2 + $0x58] sm:$0xff]
    %v1128 = vld [vmem:[#allocation2 + $0x60] sm:$0xff]
    %v1129 = vld [vmem:[#allocation2 + $0x68] sm:$0xff]
    %v1130 = vld [vmem:[#allocation2 + $0x70] sm:$0xff]
    %v1131 = vld [vmem:[#allocation2 + $0x78] sm:$0xff]
    %v1132 = vld [vmem:[#allocation2 + $0x80] sm:$0xff]
    %v1133 = vld [vmem:[#allocation2 + $0x88] sm:$0xff]
    %v1134 = vld [vmem:[#allocation2 + $0x90] sm:$0xff]
    %v1135 = vld [vmem:[#allocation2 + $0x98] sm:$0xff]
    %v1136 = vld [vmem:[#allocation2 + $0xa0] sm:$0xff]
    %v1137 = vld [vmem:[#allocation2 + $0xa8] sm:$0xff]
    %v1138 = vld [vmem:[#allocation2 + $0xb0] sm:$0xff]
    %v1139 = vld [vmem:[#allocation2 + $0xb8] sm:$0xff]
    %v1140 = vld [vmem:[#allocation2 + $0xc0] sm:$0xff]
    %v1141 = vld [vmem:[#allocation2 + $0xc8] sm:$0xff]
    %v1142 = vld [vmem:[#allocation2 + $0xd0] sm:$0xff]
    %v1143 = vld [vmem:[#allocation2 + $0xd8] sm:$0xff]
    %v1144 = vld [vmem:[#allocation2 + $0xe0] sm:$0xff]
    %v1145 = vld [vmem:[#allocation2 + $0xe8] sm:$0xff]
    %v1146 = vld [vmem:[#allocation2 + $0xf0] sm:$0xff]
    %v1147 = vld [vmem:[#allocation2 + $0xf8] sm:$0xff]
    %v1148 = vld [vmem:[#allocation2 + $0x100] sm:$0xff]
    %v1149 = vld [vmem:[#allocation2 + $0x108] sm:$0xff]
    %v1150 = vld [vmem:[#allocation2 + $0x110] sm:$0xff]
    %v1151 = vld [vmem:[#allocation2 + $0x118] sm:$0xff]
    %v1152 = vld [vmem:[#allocation2 + $0x120] sm:$0xff]
    %v1153 = vld [vmem:[#allocation2 + $0x128] sm:$0xff]
    %v1154 = vld [vmem:[#allocation2 + $0x130] sm:$0xff]
    %v1155 = vld [vmem:[#allocation2 + $0x138] sm:$0xff]
    %v1156 = vld [vmem:[#allocation2 + $0x140] sm:$0xff]
    %v1157 = vld [vmem:[#allocation2 + $0x148] sm:$0xff]
    %v1158 = vld [vmem:[#allocation2 + $0x150] sm:$0xff]
    %v1159 = vld [vmem:[#allocation2 + $0x158] sm:$0xff]
    %v1160 = vld [vmem:[#allocation2 + $0x160] sm:$0xff]
    %v1161 = vld [vmem:[#allocation2 + $0x168] sm:$0xff]
    %v1162 = vld [vmem:[#allocation2 + $0x170] sm:$0xff]
    %v1163 = vld [vmem:[#allocation2 + $0x178] sm:$0xff]
    %v1164 = vld [vmem:[#allocation2 + $0x180] sm:$0xff]
    %v1165 = vld [vmem:[#allocation2 + $0x188] sm:$0xff]
    %v1166 = vld [vmem:[#allocation2 + $0x190] sm:$0xff]
    %v1167 = vld [vmem:[#allocation2 + $0x198] sm:$0xff]
    %v1168 = vld [vmem:[#allocation2 + $0x1a0] sm:$0xff]
    %v1169 = vld [vmem:[#allocation2 + $0x1a8] sm:$0xff]
    %v1170 = vld [vmem:[#allocation2 + $0x1b0] sm:$0xff]
    %v1171 = vld [vmem:[#allocation2 + $0x1b8] sm:$0xff]
    %v1172 = vld [vmem:[#allocation2 + $0x1c0] sm:$0xff]
    %v1173 = vld [vmem:[#allocation2 + $0x1c8] sm:$0xff]
    %v1174 = vld [vmem:[#allocation2 + $0x1d0] sm:$0xff]
    %v1175 = vld [vmem:[#allocation2 + $0x1d8] sm:$0xff]
    %v1176 = vld [vmem:[#allocation2 + $0x1e0] sm:$0xff]
    %v1177 = vld [vmem:[#allocation2 + $0x1e8] sm:$0xff]
    %v1178 = vld [vmem:[#allocation2 + $0x1f0] sm:$0xff]
    %v1179 = vld [vmem:[#allocation2 + $0x1f8] sm:$0xff]
    %v1181 = vlaneseq
    %v1182 = vshrl.u32 %v1181, 7
    %v1183 = vsub.s32 0, %v1182
    %v1184 = vrot.slane %v1112, %v1183
    %v1186 = vmul.f32 %v1116, %v1184
    %v1187 = vmul.f32 %v1117, %v1184
    %v1188 = vmul.f32 %v1118, %v1184
    %v1189 = vmul.f32 %v1119, %v1184
    %v1190 = vmul.f32 %v1120, %v1184
    %v1191 = vmul.f32 %v1121, %v1184
    %v1192 = vmul.f32 %v1122, %v1184
    %v1193 = vmul.f32 %v1123, %v1184
    %v1194 = vmul.f32 %v1124, %v1184
    %v1195 = vmul.f32 %v1125, %v1184
    %v1196 = vmul.f32 %v1126, %v1184
    %v1197 = vmul.f32 %v1127, %v1184
    %v1198 = vmul.f32 %v1128, %v1184
    %v1199 = vmul.f32 %v1129, %v1184
    %v1200 = vmul.f32 %v1130, %v1184
    %v1201 = vmul.f32 %v1131, %v1184
    %v1202 = vmul.f32 %v1132, %v1184
    %v1203 = vmul.f32 %v1133, %v1184
    %v1204 = vmul.f32 %v1134, %v1184
    %v1205 = vmul.f32 %v1135, %v1184
    %v1206 = vmul.f32 %v1136, %v1184
    %v1207 = vmul.f32 %v1137, %v1184
    %v1208 = vmul.f32 %v1138, %v1184
    %v1209 = vmul.f32 %v1139, %v1184
    %v1210 = vmul.f32 %v1140, %v1184
    %v1211 = vmul.f32 %v1141, %v1184
    %v1212 = vmul.f32 %v1142, %v1184
    %v1213 = vmul.f32 %v1143, %v1184
    %v1214 = vmul.f32 %v1144, %v1184
    %v1215 = vmul.f32 %v1145, %v1184
    %v1216 = vmul.f32 %v1146, %v1184
    %v1217 = vmul.f32 %v1147, %v1184
    %v1218 = vmul.f32 %v1148, %v1184
    %v1219 = vmul.f32 %v1149, %v1184
    %v1220 = vmul.f32 %v1150, %v1184
    %v1221 = vmul.f32 %v1151, %v1184
    %v1222 = vmul.f32 %v1152, %v1184
    %v1223 = vmul.f32 %v1153, %v1184
    %v1224 = vmul.f32 %v1154, %v1184
    %v1225 = vmul.f32 %v1155, %v1184
    %v1226 = vmul.f32 %v1156, %v1184
    %v1227 = vmul.f32 %v1157, %v1184
    %v1228 = vmul.f32 %v1158, %v1184
    %v1229 = vmul.f32 %v1159, %v1184
    %v1230 = vmul.f32 %v1160, %v1184
    %v1231 = vmul.f32 %v1161, %v1184
    %v1232 = vmul.f32 %v1162, %v1184
    %v1233 = vmul.f32 %v1163, %v1184
    %v1234 = vmul.f32 %v1164, %v1184
    %v1235 = vmul.f32 %v1165, %v1184
    %v1236 = vmul.f32 %v1166, %v1184
    %v1237 = vmul.f32 %v1167, %v1184
    %v1238 = vmul.f32 %v1168, %v1184
    %v1239 = vmul.f32 %v1169, %v1184
    %v1240 = vmul.f32 %v1170, %v1184
    %v1241 = vmul.f32 %v1171, %v1184
    %v1242 = vmul.f32 %v1172, %v1184
    %v1243 = vmul.f32 %v1173, %v1184
    %v1244 = vmul.f32 %v1174, %v1184
    %v1245 = vmul.f32 %v1175, %v1184
    %v1246 = vmul.f32 %v1176, %v1184
    %v1247 = vmul.f32 %v1177, %v1184
    %v1248 = vmul.f32 %v1178, %v1184
    %v1249 = vmul.f32 %v1179, %v1184
    %v1251 = vlaneseq
    %v1252 = vshrl.u32 %v1251, 7
    %v1253 = vsub.s32 0, %v1252
    %v1254 = vrot.slane %v1115, %v1253
    %v1256 = vadd.f32 %v1186, %v1254
    %v1257 = vadd.f32 %v1187, %v1254
    %v1258 = vadd.f32 %v1188, %v1254
    %v1259 = vadd.f32 %v1189, %v1254
    %v1260 = vadd.f32 %v1190, %v1254
    %v1261 = vadd.f32 %v1191, %v1254
    %v1262 = vadd.f32 %v1192, %v1254
    %v1263 = vadd.f32 %v1193, %v1254
    %v1264 = vadd.f32 %v1194, %v1254
    %v1265 = vadd.f32 %v1195, %v1254
    %v1266 = vadd.f32 %v1196, %v1254
    %v1267 = vadd.f32 %v1197, %v1254
    %v1268 = vadd.f32 %v1198, %v1254
    %v1269 = vadd.f32 %v1199, %v1254
    %v1270 = vadd.f32 %v1200, %v1254
    %v1271 = vadd.f32 %v1201, %v1254
    %v1272 = vadd.f32 %v1202, %v1254
    %v1273 = vadd.f32 %v1203, %v1254
    %v1274 = vadd.f32 %v1204, %v1254
    %v1275 = vadd.f32 %v1205, %v1254
    %v1276 = vadd.f32 %v1206, %v1254
    %v1277 = vadd.f32 %v1207, %v1254
    %v1278 = vadd.f32 %v1208, %v1254
    %v1279 = vadd.f32 %v1209, %v1254
    %v1280 = vadd.f32 %v1210, %v1254
    %v1281 = vadd.f32 %v1211, %v1254
    %v1282 = vadd.f32 %v1212, %v1254
    %v1283 = vadd.f32 %v1213, %v1254
    %v1284 = vadd.f32 %v1214, %v1254
    %v1285 = vadd.f32 %v1215, %v1254
    %v1286 = vadd.f32 %v1216, %v1254
    %v1287 = vadd.f32 %v1217, %v1254
    %v1288 = vadd.f32 %v1218, %v1254
    %v1289 = vadd.f32 %v1219, %v1254
    %v1290 = vadd.f32 %v1220, %v1254
    %v1291 = vadd.f32 %v1221, %v1254
    %v1292 = vadd.f32 %v1222, %v1254
    %v1293 = vadd.f32 %v1223, %v1254
    %v1294 = vadd.f32 %v1224, %v1254
    %v1295 = vadd.f32 %v1225, %v1254
    %v1296 = vadd.f32 %v1226, %v1254
    %v1297 = vadd.f32 %v1227, %v1254
    %v1298 = vadd.f32 %v1228, %v1254
    %v1299 = vadd.f32 %v1229, %v1254
    %v1300 = vadd.f32 %v1230, %v1254
    %v1301 = vadd.f32 %v1231, %v1254
    %v1302 = vadd.f32 %v1232, %v1254
    %v1303 = vadd.f32 %v1233, %v1254
    %v1304 = vadd.f32 %v1234, %v1254
    %v1305 = vadd.f32 %v1235, %v1254
    %v1306 = vadd.f32 %v1236, %v1254
    %v1307 = vadd.f32 %v1237, %v1254
    %v1308 = vadd.f32 %v1238, %v1254
    %v1309 = vadd.f32 %v1239, %v1254
    %v1310 = vadd.f32 %v1240, %v1254
    %v1311 = vadd.f32 %v1241, %v1254
    %v1312 = vadd.f32 %v1242, %v1254
    %v1313 = vadd.f32 %v1243, %v1254
    %v1314 = vadd.f32 %v1244, %v1254
    %v1315 = vadd.f32 %v1245, %v1254
    %v1316 = vadd.f32 %v1246, %v1254
    %v1317 = vadd.f32 %v1247, %v1254
    %v1318 = vadd.f32 %v1248, %v1254
    %v1319 = vadd.f32 %v1249, %v1254
    %vm1320 = vcmp.ge.f32.partialorder %v1256, 0.0
    %vm1321 = vcmp.ge.f32.partialorder %v1257, 0.0
    %vm1322 = vcmp.ge.f32.partialorder %v1258, 0.0
    %vm1323 = vcmp.ge.f32.partialorder %v1259, 0.0
    %vm1324 = vcmp.ge.f32.partialorder %v1260, 0.0
    %vm1325 = vcmp.ge.f32.partialorder %v1261, 0.0
    %vm1326 = vcmp.ge.f32.partialorder %v1262, 0.0
    %vm1327 = vcmp.ge.f32.partialorder %v1263, 0.0
    %vm1328 = vcmp.ge.f32.partialorder %v1264, 0.0
    %vm1329 = vcmp.ge.f32.partialorder %v1265, 0.0
    %vm1330 = vcmp.ge.f32.partialorder %v1266, 0.0
    %vm1331 = vcmp.ge.f32.partialorder %v1267, 0.0
    %vm1332 = vcmp.ge.f32.partialorder %v1268, 0.0
    %vm1333 = vcmp.ge.f32.partialorder %v1269, 0.0
    %vm1334 = vcmp.ge.f32.partialorder %v1270, 0.0
    %vm1335 = vcmp.ge.f32.partialorder %v1271, 0.0
    %vm1336 = vcmp.ge.f32.partialorder %v1272, 0.0
    %vm1337 = vcmp.ge.f32.partialorder %v1273, 0.0
    %vm1338 = vcmp.ge.f32.partialorder %v1274, 0.0
    %vm1339 = vcmp.ge.f32.partialorder %v1275, 0.0
    %vm1340 = vcmp.ge.f32.partialorder %v1276, 0.0
    %vm1341 = vcmp.ge.f32.partialorder %v1277, 0.0
    %vm1342 = vcmp.ge.f32.partialorder %v1278, 0.0
    %vm1343 = vcmp.ge.f32.partialorder %v1279, 0.0
    %vm1344 = vcmp.ge.f32.partialorder %v1280, 0.0
    %vm1345 = vcmp.ge.f32.partialorder %v1281, 0.0
    %vm1346 = vcmp.ge.f32.partialorder %v1282, 0.0
    %vm1347 = vcmp.ge.f32.partialorder %v1283, 0.0
    %vm1348 = vcmp.ge.f32.partialorder %v1284, 0.0
    %vm1349 = vcmp.ge.f32.partialorder %v1285, 0.0
    %vm1350 = vcmp.ge.f32.partialorder %v1286, 0.0
    %vm1351 = vcmp.ge.f32.partialorder %v1287, 0.0
    %vm1352 = vcmp.ge.f32.partialorder %v1288, 0.0
    %vm1353 = vcmp.ge.f32.partialorder %v1289, 0.0
    %vm1354 = vcmp.ge.f32.partialorder %v1290, 0.0
    %vm1355 = vcmp.ge.f32.partialorder %v1291, 0.0
    %vm1356 = vcmp.ge.f32.partialorder %v1292, 0.0
    %vm1357 = vcmp.ge.f32.partialorder %v1293, 0.0
    %vm1358 = vcmp.ge.f32.partialorder %v1294, 0.0
    %vm1359 = vcmp.ge.f32.partialorder %v1295, 0.0
    %vm1360 = vcmp.ge.f32.partialorder %v1296, 0.0
    %vm1361 = vcmp.ge.f32.partialorder %v1297, 0.0
    %vm1362 = vcmp.ge.f32.partialorder %v1298, 0.0
    %vm1363 = vcmp.ge.f32.partialorder %v1299, 0.0
    %vm1364 = vcmp.ge.f32.partialorder %v1300, 0.0
    %vm1365 = vcmp.ge.f32.partialorder %v1301, 0.0
    %vm1366 = vcmp.ge.f32.partialorder %v1302, 0.0
    %vm1367 = vcmp.ge.f32.partialorder %v1303, 0.0
    %vm1368 = vcmp.ge.f32.partialorder %v1304, 0.0
    %vm1369 = vcmp.ge.f32.partialorder %v1305, 0.0
    %vm1370 = vcmp.ge.f32.partialorder %v1306, 0.0
    %vm1371 = vcmp.ge.f32.partialorder %v1307, 0.0
    %vm1372 = vcmp.ge.f32.partialorder %v1308, 0.0
    %vm1373 = vcmp.ge.f32.partialorder %v1309, 0.0
    %vm1374 = vcmp.ge.f32.partialorder %v1310, 0.0
    %vm1375 = vcmp.ge.f32.partialorder %v1311, 0.0
    %vm1376 = vcmp.ge.f32.partialorder %v1312, 0.0
    %vm1377 = vcmp.ge.f32.partialorder %v1313, 0.0
    %vm1378 = vcmp.ge.f32.partialorder %v1314, 0.0
    %vm1379 = vcmp.ge.f32.partialorder %v1315, 0.0
    %vm1380 = vcmp.ge.f32.partialorder %v1316, 0.0
    %vm1381 = vcmp.ge.f32.partialorder %v1317, 0.0
    %vm1382 = vcmp.ge.f32.partialorder %v1318, 0.0
    %vm1383 = vcmp.ge.f32.partialorder %v1319, 0.0
    %v1384 = vmul.f32 %v1256, 0.2
    %v1385 = vmul.f32 %v1257, 0.2
    %v1386 = vmul.f32 %v1258, 0.2
    %v1387 = vmul.f32 %v1259, 0.2
    %v1388 = vmul.f32 %v1260, 0.2
    %v1389 = vmul.f32 %v1261, 0.2
    %v1390 = vmul.f32 %v1262, 0.2
    %v1391 = vmul.f32 %v1263, 0.2
    %v1392 = vmul.f32 %v1264, 0.2
    %v1393 = vmul.f32 %v1265, 0.2
    %v1394 = vmul.f32 %v1266, 0.2
    %v1395 = vmul.f32 %v1267, 0.2
    %v1396 = vmul.f32 %v1268, 0.2
    %v1397 = vmul.f32 %v1269, 0.2
    %v1398 = vmul.f32 %v1270, 0.2
    %v1399 = vmul.f32 %v1271, 0.2
    %v1400 = vmul.f32 %v1272, 0.2
    %v1401 = vmul.f32 %v1273, 0.2
    %v1402 = vmul.f32 %v1274, 0.2
    %v1403 = vmul.f32 %v1275, 0.2
    %v1404 = vmul.f32 %v1276, 0.2
    %v1405 = vmul.f32 %v1277, 0.2
    %v1406 = vmul.f32 %v1278, 0.2
    %v1407 = vmul.f32 %v1279, 0.2
    %v1408 = vmul.f32 %v1280, 0.2
    %v1409 = vmul.f32 %v1281, 0.2
    %v1410 = vmul.f32 %v1282, 0.2
    %v1411 = vmul.f32 %v1283, 0.2
    %v1412 = vmul.f32 %v1284, 0.2
    %v1413 = vmul.f32 %v1285, 0.2
    %v1414 = vmul.f32 %v1286, 0.2
    %v1415 = vmul.f32 %v1287, 0.2
    %v1416 = vmul.f32 %v1288, 0.2
    %v1417 = vmul.f32 %v1289, 0.2
    %v1418 = vmul.f32 %v1290, 0.2
    %v1419 = vmul.f32 %v1291, 0.2
    %v1420 = vmul.f32 %v1292, 0.2
    %v1421 = vmul.f32 %v1293, 0.2
    %v1422 = vmul.f32 %v1294, 0.2
    %v1423 = vmul.f32 %v1295, 0.2
    %v1424 = vmul.f32 %v1296, 0.2
    %v1425 = vmul.f32 %v1297, 0.2
    %v1426 = vmul.f32 %v1298, 0.2
    %v1427 = vmul.f32 %v1299, 0.2
    %v1428 = vmul.f32 %v1300, 0.2
    %v1429 = vmul.f32 %v1301, 0.2
    %v1430 = vmul.f32 %v1302, 0.2
    %v1431 = vmul.f32 %v1303, 0.2
    %v1432 = vmul.f32 %v1304, 0.2
    %v1433 = vmul.f32 %v1305, 0.2
    %v1434 = vmul.f32 %v1306, 0.2
    %v1435 = vmul.f32 %v1307, 0.2
    %v1436 = vmul.f32 %v1308, 0.2
    %v1437 = vmul.f32 %v1309, 0.2
    %v1438 = vmul.f32 %v1310, 0.2
    %v1439 = vmul.f32 %v1311, 0.2
    %v1440 = vmul.f32 %v1312, 0.2
    %v1441 = vmul.f32 %v1313, 0.2
    %v1442 = vmul.f32 %v1314, 0.2
    %v1443 = vmul.f32 %v1315, 0.2
    %v1444 = vmul.f32 %v1316, 0.2
    %v1445 = vmul.f32 %v1317, 0.2
    %v1446 = vmul.f32 %v1318, 0.2
    %v1447 = vmul.f32 %v1319, 0.2
    %v1448 = vsel %vm1320, %v1256, %v1384
    %v1449 = vsel %vm1321, %v1257, %v1385
    %v1450 = vsel %vm1322, %v1258, %v1386
    %v1451 = vsel %vm1323, %v1259, %v1387
    %v1452 = vsel %vm1324, %v1260, %v1388
    %v1453 = vsel %vm1325, %v1261, %v1389
    %v1454 = vsel %vm1326, %v1262, %v1390
    %v1455 = vsel %vm1327, %v1263, %v1391
    %v1456 = vsel %vm1328, %v1264, %v1392
    %v1457 = vsel %vm1329, %v1265, %v1393
    %v1458 = vsel %vm1330, %v1266, %v1394
    %v1459 = vsel %vm1331, %v1267, %v1395
    %v1460 = vsel %vm1332, %v1268, %v1396
    %v1461 = vsel %vm1333, %v1269, %v1397
    %v1462 = vsel %vm1334, %v1270, %v1398
    %v1463 = vsel %vm1335, %v1271, %v1399
    %v1464 = vsel %vm1336, %v1272, %v1400
    %v1465 = vsel %vm1337, %v1273, %v1401
    %v1466 = vsel %vm1338, %v1274, %v1402
    %v1467 = vsel %vm1339, %v1275, %v1403
    %v1468 = vsel %vm1340, %v1276, %v1404
    %v1469 = vsel %vm1341, %v1277, %v1405
    %v1470 = vsel %vm1342, %v1278, %v1406
    %v1471 = vsel %vm1343, %v1279, %v1407
    %v1472 = vsel %vm1344, %v1280, %v1408
    %v1473 = vsel %vm1345, %v1281, %v1409
    %v1474 = vsel %vm1346, %v1282, %v1410
    %v1475 = vsel %vm1347, %v1283, %v1411
    %v1476 = vsel %vm1348, %v1284, %v1412
    %v1477 = vsel %vm1349, %v1285, %v1413
    %v1478 = vsel %vm1350, %v1286, %v1414
    %v1479 = vsel %vm1351, %v1287, %v1415
    %v1480 = vsel %vm1352, %v1288, %v1416
    %v1481 = vsel %vm1353, %v1289, %v1417
    %v1482 = vsel %vm1354, %v1290, %v1418
    %v1483 = vsel %vm1355, %v1291, %v1419
    %v1484 = vsel %vm1356, %v1292, %v1420
    %v1485 = vsel %vm1357, %v1293, %v1421
    %v1486 = vsel %vm1358, %v1294, %v1422
    %v1487 = vsel %vm1359, %v1295, %v1423
    %v1488 = vsel %vm1360, %v1296, %v1424
    %v1489 = vsel %vm1361, %v1297, %v1425
    %v1490 = vsel %vm1362, %v1298, %v1426
    %v1491 = vsel %vm1363, %v1299, %v1427
    %v1492 = vsel %vm1364, %v1300, %v1428
    %v1493 = vsel %vm1365, %v1301, %v1429
    %v1494 = vsel %vm1366, %v1302, %v1430
    %v1495 = vsel %vm1367, %v1303, %v1431
    %v1496 = vsel %vm1368, %v1304, %v1432
    %v1497 = vsel %vm1369, %v1305, %v1433
    %v1498 = vsel %vm1370, %v1306, %v1434
    %v1499 = vsel %vm1371, %v1307, %v1435
    %v1500 = vsel %vm1372, %v1308, %v1436
    %v1501 = vsel %vm1373, %v1309, %v1437
    %v1502 = vsel %vm1374, %v1310, %v1438
    %v1503 = vsel %vm1375, %v1311, %v1439
    %v1504 = vsel %vm1376, %v1312, %v1440
    %v1505 = vsel %vm1377, %v1313, %v1441
    %v1506 = vsel %vm1378, %v1314, %v1442
    %v1507 = vsel %vm1379, %v1315, %v1443
    %v1508 = vsel %vm1380, %v1316, %v1444
    %v1509 = vsel %vm1381, %v1317, %v1445
    %v1510 = vsel %vm1382, %v1318, %v1446
    %v1511 = vsel %vm1383, %v1319, %v1447
    %v1512 = vpack.c.bf16 %v1449, %v1448
    %v1513 = vpack.c.bf16 %v1451, %v1450
    %v1514 = vpack.c.bf16 %v1453, %v1452
    %v1515 = vpack.c.bf16 %v1455, %v1454
    %v1516 = vpack.c.bf16 %v1457, %v1456
    %v1517 = vpack.c.bf16 %v1459, %v1458
    %v1518 = vpack.c.bf16 %v1461, %v1460
    %v1519 = vpack.c.bf16 %v1463, %v1462
    %v1520 = vpack.c.bf16 %v1465, %v1464
    %v1521 = vpack.c.bf16 %v1467, %v1466
    %v1522 = vpack.c.bf16 %v1469, %v1468
    %v1523 = vpack.c.bf16 %v1471, %v1470
    %v1524 = vpack.c.bf16 %v1473, %v1472
    %v1525 = vpack.c.bf16 %v1475, %v1474
    %v1526 = vpack.c.bf16 %v1477, %v1476
    %v1527 = vpack.c.bf16 %v1479, %v1478
    %v1528 = vpack.c.bf16 %v1481, %v1480
    %v1529 = vpack.c.bf16 %v1483, %v1482
    %v1530 = vpack.c.bf16 %v1485, %v1484
    %v1531 = vpack.c.bf16 %v1487, %v1486
    %v1532 = vpack.c.bf16 %v1489, %v1488
    %v1533 = vpack.c.bf16 %v1491, %v1490
    %v1534 = vpack.c.bf16 %v1493, %v1492
    %v1535 = vpack.c.bf16 %v1495, %v1494
    %v1536 = vpack.c.bf16 %v1497, %v1496
    %v1537 = vpack.c.bf16 %v1499, %v1498
    %v1538 = vpack.c.bf16 %v1501, %v1500
    %v1539 = vpack.c.bf16 %v1503, %v1502
    %v1540 = vpack.c.bf16 %v1505, %v1504
    %v1541 = vpack.c.bf16 %v1507, %v1506
    %v1542 = vpack.c.bf16 %v1509, %v1508
    %v1543 = vpack.c.bf16 %v1511, %v1510
    %v1576 = vunpack.c.l.b16 %v1512
    %v1577 = vunpack.c.h.b16 %v1512
    %v1578 = vunpack.c.l.b16 %v1513
    %v1579 = vunpack.c.h.b16 %v1513
    %v1580 = vunpack.c.l.b16 %v1514
    %v1581 = vunpack.c.h.b16 %v1514
    %v1582 = vunpack.c.l.b16 %v1515
    %v1583 = vunpack.c.h.b16 %v1515
    %v1584 = vunpack.c.l.b16 %v1516
    %v1585 = vunpack.c.h.b16 %v1516
    %v1586 = vunpack.c.l.b16 %v1517
    %v1587 = vunpack.c.h.b16 %v1517
    %v1588 = vunpack.c.l.b16 %v1518
    %v1589 = vunpack.c.h.b16 %v1518
    %v1590 = vunpack.c.l.b16 %v1519
    %v1591 = vunpack.c.h.b16 %v1519
    %v1592 = vunpack.c.l.b16 %v1520
    %v1593 = vunpack.c.h.b16 %v1520
    %v1594 = vunpack.c.l.b16 %v1521
    %v1595 = vunpack.c.h.b16 %v1521
    %v1596 = vunpack.c.l.b16 %v1522
    %v1597 = vunpack.c.h.b16 %v1522
    %v1598 = vunpack.c.l.b16 %v1523
    %v1599 = vunpack.c.h.b16 %v1523
    %v1600 = vunpack.c.l.b16 %v1524
    %v1601 = vunpack.c.h.b16 %v1524
    %v1602 = vunpack.c.l.b16 %v1525
    %v1603 = vunpack.c.h.b16 %v1525
    %v1604 = vunpack.c.l.b16 %v1526
    %v1605 = vunpack.c.h.b16 %v1526
    %v1606 = vunpack.c.l.b16 %v1527
    %v1607 = vunpack.c.h.b16 %v1527
    %v1608 = vunpack.c.l.b16 %v1528
    %v1609 = vunpack.c.h.b16 %v1528
    %v1610 = vunpack.c.l.b16 %v1529
    %v1611 = vunpack.c.h.b16 %v1529
    %v1612 = vunpack.c.l.b16 %v1530
    %v1613 = vunpack.c.h.b16 %v1530
    %v1614 = vunpack.c.l.b16 %v1531
    %v1615 = vunpack.c.h.b16 %v1531
    %v1616 = vunpack.c.l.b16 %v1532
    %v1617 = vunpack.c.h.b16 %v1532
    %v1618 = vunpack.c.l.b16 %v1533
    %v1619 = vunpack.c.h.b16 %v1533
    %v1620 = vunpack.c.l.b16 %v1534
    %v1621 = vunpack.c.h.b16 %v1534
    %v1622 = vunpack.c.l.b16 %v1535
    %v1623 = vunpack.c.h.b16 %v1535
    %v1624 = vunpack.c.l.b16 %v1536
    %v1625 = vunpack.c.h.b16 %v1536
    %v1626 = vunpack.c.l.b16 %v1537
    %v1627 = vunpack.c.h.b16 %v1537
    %v1628 = vunpack.c.l.b16 %v1538
    %v1629 = vunpack.c.h.b16 %v1538
    %v1630 = vunpack.c.l.b16 %v1539
    %v1631 = vunpack.c.h.b16 %v1539
    %v1632 = vunpack.c.l.b16 %v1540
    %v1633 = vunpack.c.h.b16 %v1540
    %v1634 = vunpack.c.l.b16 %v1541
    %v1635 = vunpack.c.h.b16 %v1541
    %v1636 = vunpack.c.l.b16 %v1542
    %v1637 = vunpack.c.h.b16 %v1542
    %v1638 = vunpack.c.l.b16 %v1543
    %v1639 = vunpack.c.h.b16 %v1543
    %v1640 = vpack.c.b16 %v1576, %v1576
    %v1641 = vpack.c.b16 %v1577, %v1577
    %v1642 = vpack.c.b16 %v1578, %v1578
    %v1643 = vpack.c.b16 %v1579, %v1579
    %v1644 = vpack.c.b16 %v1580, %v1580
    %v1645 = vpack.c.b16 %v1581, %v1581
    %v1646 = vpack.c.b16 %v1582, %v1582
    %v1647 = vpack.c.b16 %v1583, %v1583
    %v1648 = vpack.c.b16 %v1584, %v1584
    %v1649 = vpack.c.b16 %v1585, %v1585
    %v1650 = vpack.c.b16 %v1586, %v1586
    %v1651 = vpack.c.b16 %v1587, %v1587
    %v1652 = vpack.c.b16 %v1588, %v1588
    %v1653 = vpack.c.b16 %v1589, %v1589
    %v1654 = vpack.c.b16 %v1590, %v1590
    %v1655 = vpack.c.b16 %v1591, %v1591
    %v1656 = vpack.c.b16 %v1592, %v1592
    %v1657 = vpack.c.b16 %v1593, %v1593
    %v1658 = vpack.c.b16 %v1594, %v1594
    %v1659 = vpack.c.b16 %v1595, %v1595
    %v1660 = vpack.c.b16 %v1596, %v1596
    %v1661 = vpack.c.b16 %v1597, %v1597
    %v1662 = vpack.c.b16 %v1598, %v1598
    %v1663 = vpack.c.b16 %v1599, %v1599
    %v1664 = vpack.c.b16 %v1600, %v1600
    %v1665 = vpack.c.b16 %v1601, %v1601
    %v1666 = vpack.c.b16 %v1602, %v1602
    %v1667 = vpack.c.b16 %v1603, %v1603
    %v1668 = vpack.c.b16 %v1604, %v1604
    %v1669 = vpack.c.b16 %v1605, %v1605
    %v1670 = vpack.c.b16 %v1606, %v1606
    %v1671 = vpack.c.b16 %v1607, %v1607
    %v1672 = vpack.c.b16 %v1608, %v1608
    %v1673 = vpack.c.b16 %v1609, %v1609
    %v1674 = vpack.c.b16 %v1610, %v1610
    %v1675 = vpack.c.b16 %v1611, %v1611
    %v1676 = vpack.c.b16 %v1612, %v1612
    %v1677 = vpack.c.b16 %v1613, %v1613
    %v1678 = vpack.c.b16 %v1614, %v1614
    %v1679 = vpack.c.b16 %v1615, %v1615
    %v1680 = vpack.c.b16 %v1616, %v1616
    %v1681 = vpack.c.b16 %v1617, %v1617
    %v1682 = vpack.c.b16 %v1618, %v1618
    %v1683 = vpack.c.b16 %v1619, %v1619
    %v1684 = vpack.c.b16 %v1620, %v1620
    %v1685 = vpack.c.b16 %v1621, %v1621
    %v1686 = vpack.c.b16 %v1622, %v1622
    %v1687 = vpack.c.b16 %v1623, %v1623
    %v1688 = vpack.c.b16 %v1624, %v1624
    %v1689 = vpack.c.b16 %v1625, %v1625
    %v1690 = vpack.c.b16 %v1626, %v1626
    %v1691 = vpack.c.b16 %v1627, %v1627
    %v1692 = vpack.c.b16 %v1628, %v1628
    %v1693 = vpack.c.b16 %v1629, %v1629
    %v1694 = vpack.c.b16 %v1630, %v1630
    %v1695 = vpack.c.b16 %v1631, %v1631
    %v1696 = vpack.c.b16 %v1632, %v1632
    %v1697 = vpack.c.b16 %v1633, %v1633
    %v1698 = vpack.c.b16 %v1634, %v1634
    %v1699 = vpack.c.b16 %v1635, %v1635
    %v1700 = vpack.c.b16 %v1636, %v1636
    %v1701 = vpack.c.b16 %v1637, %v1637
    %v1702 = vpack.c.b16 %v1638, %v1638
    %v1703 = vpack.c.b16 %v1639, %v1639
    %1768 = vst [vmem:[%s4] sm:$0xf] %v1640
    %1769 = vst [vmem:[%s4 + $0x4] sm:$0xf] %v1641
    %1770 = vst [vmem:[%s4 + $0x8] sm:$0xf] %v1642
    %1771 = vst [vmem:[%s4 + $0xc] sm:$0xf] %v1643
    %1772 = vst [vmem:[%s4 + $0x10] sm:$0xf] %v1644
    %1773 = vst [vmem:[%s4 + $0x14] sm:$0xf] %v1645
    %1774 = vst [vmem:[%s4 + $0x18] sm:$0xf] %v1646
    %1775 = vst [vmem:[%s4 + $0x1c] sm:$0xf] %v1647
    %1776 = vst [vmem:[%s4 + $0x20] sm:$0xf] %v1648
    %1777 = vst [vmem:[%s4 + $0x24] sm:$0xf] %v1649
    %1778 = vst [vmem:[%s4 + $0x28] sm:$0xf] %v1650
    %1779 = vst [vmem:[%s4 + $0x2c] sm:$0xf] %v1651
    %1780 = vst [vmem:[%s4 + $0x30] sm:$0xf] %v1652
    %1781 = vst [vmem:[%s4 + $0x34] sm:$0xf] %v1653
    %1782 = vst [vmem:[%s4 + $0x38] sm:$0xf] %v1654
    %1783 = vst [vmem:[%s4 + $0x3c] sm:$0xf] %v1655
    %1784 = vst [vmem:[%s4 + $0x40] sm:$0xf] %v1656
    %1785 = vst [vmem:[%s4 + $0x44] sm:$0xf] %v1657
    %1786 = vst [vmem:[%s4 + $0x48] sm:$0xf] %v1658
    %1787 = vst [vmem:[%s4 + $0x4c] sm:$0xf] %v1659
    %1788 = vst [vmem:[%s4 + $0x50] sm:$0xf] %v1660
    %1789 = vst [vmem:[%s4 + $0x54] sm:$0xf] %v1661
    %1790 = vst [vmem:[%s4 + $0x58] sm:$0xf] %v1662
    %1791 = vst [vmem:[%s4 + $0x5c] sm:$0xf] %v1663
    %1792 = vst [vmem:[%s4 + $0x60] sm:$0xf] %v1664
    %1793 = vst [vmem:[%s4 + $0x64] sm:$0xf] %v1665
    %1794 = vst [vmem:[%s4 + $0x68] sm:$0xf] %v1666
    %1795 = vst [vmem:[%s4 + $0x6c] sm:$0xf] %v1667
    %1796 = vst [vmem:[%s4 + $0x70] sm:$0xf] %v1668
    %1797 = vst [vmem:[%s4 + $0x74] sm:$0xf] %v1669
    %1798 = vst [vmem:[%s4 + $0x78] sm:$0xf] %v1670
    %1799 = vst [vmem:[%s4 + $0x7c] sm:$0xf] %v1671
    %1800 = vst [vmem:[%s4 + $0x80] sm:$0xf] %v1672
    %1801 = vst [vmem:[%s4 + $0x84] sm:$0xf] %v1673
    %1802 = vst [vmem:[%s4 + $0x88] sm:$0xf] %v1674
    %1803 = vst [vmem:[%s4 + $0x8c] sm:$0xf] %v1675
    %1804 = vst [vmem:[%s4 + $0x90] sm:$0xf] %v1676
    %1805 = vst [vmem:[%s4 + $0x94] sm:$0xf] %v1677
    %1806 = vst [vmem:[%s4 + $0x98] sm:$0xf] %v1678
    %1807 = vst [vmem:[%s4 + $0x9c] sm:$0xf] %v1679
    %1808 = vst [vmem:[%s4 + $0xa0] sm:$0xf] %v1680
    %1809 = vst [vmem:[%s4 + $0xa4] sm:$0xf] %v1681
    %1810 = vst [vmem:[%s4 + $0xa8] sm:$0xf] %v1682
    %1811 = vst [vmem:[%s4 + $0xac] sm:$0xf] %v1683
    %1812 = vst [vmem:[%s4 + $0xb0] sm:$0xf] %v1684
    %1813 = vst [vmem:[%s4 + $0xb4] sm:$0xf] %v1685
    %1814 = vst [vmem:[%s4 + $0xb8] sm:$0xf] %v1686
    %1815 = vst [vmem:[%s4 + $0xbc] sm:$0xf] %v1687
    %1816 = vst [vmem:[%s4 + $0xc0] sm:$0xf] %v1688
    %1817 = vst [vmem:[%s4 + $0xc4] sm:$0xf] %v1689
    %1818 = vst [vmem:[%s4 + $0xc8] sm:$0xf] %v1690
    %1819 = vst [vmem:[%s4 + $0xcc] sm:$0xf] %v1691
    %1820 = vst [vmem:[%s4 + $0xd0] sm:$0xf] %v1692
    %1821 = vst [vmem:[%s4 + $0xd4] sm:$0xf] %v1693
    %1822 = vst [vmem:[%s4 + $0xd8] sm:$0xf] %v1694
    %1823 = vst [vmem:[%s4 + $0xdc] sm:$0xf] %v1695
    %1824 = vst [vmem:[%s4 + $0xe0] sm:$0xf] %v1696
    %1825 = vst [vmem:[%s4 + $0xe4] sm:$0xf] %v1697
    %1826 = vst [vmem:[%s4 + $0xe8] sm:$0xf] %v1698
    %1827 = vst [vmem:[%s4 + $0xec] sm:$0xf] %v1699
    %1828 = vst [vmem:[%s4 + $0xf0] sm:$0xf] %v1700
    %1829 = vst [vmem:[%s4 + $0xf4] sm:$0xf] %v1701
    %1830 = vst [vmem:[%s4 + $0xf8] sm:$0xf] %v1702
    %1831 = vst [vmem:[%s4 + $0xfc] sm:$0xf] %v1703
  $region25: #{_lambda_.5} parent=0 // pred_fallthru
    _
  // Predicated region
  $region26: #{_lambda_.5} parent=0 // pred_check
    _
  $region27: #{_lambda_.5} parent=0 // pred_check_branch
    %1833 = sbr.rel (0) target = $region29
  $region28: #{_lambda_.5} parent=0 // pred_region
    _
  $region29: #{_lambda_.5} parent=0 // pred_fallthru
    _
  // Predicated region
  $region30: #{_lambda_.5} parent=0 // pred_check
    _
  $region31: #{_lambda_.5} parent=0 // pred_check_branch
    %1835 = sbr.rel (0) target = $region33
  $region32: #{_lambda_.5} parent=0 // pred_region
    _
  $region33: #{_lambda_.5} parent=0 // pred_fallthru
    _

// kernel: _lambda_.6
$region0: #{_lambda_.6}
  #allocation0 [shape = 'u32[]', space=smem, size = 0x4, offset = 0x4, fixed_abs, tag = 'smem constant byte address 0x4 - core index']
  #allocation1 [shape = 'u32[144,128]{1,0:T(1,128)}', space=vmem, size = 0x12000, scoped, tag = 'internal scratch']
  #allocation2 [shape = 'f32[128,128]{1,0:T(8,128)}', space=vmem, size = 0x10000, scoped, tag = 'scratch operand']
  #allocation3 [shape = 'f32[1,128]{1,0:T(1,128)}', space=vmem, size = 0x200, scoped, tag = 'scratch operand']
  #allocation4 [shape = 'f32[1,128]{1,0:T(1,128)}', space=vmem, size = 0x200, scoped, tag = 'scratch operand']
  %s0 = inlined_call_operand.vmem [shape: bf16[128,512], index: 0, kind: input, shape index: {}]
  %s1 = inlined_call_operand.vmem [shape: bf16[512,128], index: 1, kind: input, shape index: {}]
  %s2 = inlined_call_operand.vmem [shape: f32[1,128], index: 2, kind: input, shape index: {}]
  %s3 = inlined_call_operand.vmem [shape: f32[1,128], index: 3, kind: input, shape index: {}]
  %s4 = inlined_call_operand.vmem [shape: bf16[128,128], index: 4, kind: output, shape index: {}]
  %s5 = sld [smem:[#allocation0]]
  $region34: #{_lambda_.6} parent=0
    _
  %s7 = ssub.s32 1, %s5
  %s8 = scalar_select 0, %s7, %s5
  // Predicated region
  $region2: #{_lambda_.6} parent=0 // pred_check
    _
  $region3: #{_lambda_.6} parent=0 // pred_check_branch
    %10 = sbr.rel (0) target = $region5
  $region4: #{_lambda_.6} parent=0 // pred_region
    _
  $region5: #{_lambda_.6} parent=0 // pred_fallthru
    _
  // Predicated region
  $region6: #{_lambda_.6} parent=0 // pred_check
    _
  $region7: #{_lambda_.6} parent=0 // pred_check_branch
    %12 = sbr.rel (0) target = $region9
  $region8: #{_lambda_.6} parent=0 // pred_region
    _
  $region9: #{_lambda_.6} parent=0 // pred_fallthru
    _
  // Predicated region
  $region10: #{_lambda_.6} parent=0 // pred_check
    _
  $region11: #{_lambda_.6} parent=0 // pred_check_branch
    %14 = sbr.rel (0) target = $region13
  $region12: #{_lambda_.6} parent=0 // pred_region
    _
  $region13: #{_lambda_.6} parent=0 // pred_fallthru
    _
  // Predicated region
  $region14: #{_lambda_.6} parent=0 // pred_check
    _
  $region15: #{_lambda_.6} parent=0 // pred_check_branch
    %16 = sbr.rel (0) target = $region17
  $region16: #{_lambda_.6} parent=0 // pred_region
    _
  $region17: #{_lambda_.6} parent=0 // pred_fallthru
    _
  %p18 = scmp.eq.s32.totalorder 0, 0
  // Predicated region
  $region18: #{_lambda_.6} parent=0 // pred_check
    %p19 = pneg %p18
  $region19: #{_lambda_.6} parent=0 // pred_check_branch
    %21 = sbr.rel (%p19) target = $region21
  $region20: #{_lambda_.6} parent=0 // pred_region
    %22 = vst [vmem:[#allocation3] sm:$0x1] 0.0
    %23 = vst [vmem:[#allocation4] sm:$0x1] 0.0
  $region21: #{_lambda_.6} parent=0 // pred_fallthru
    _
  %v24 = vld [vmem:[%s0] sm:$0xff]
  %v25 = vld [vmem:[%s0 + $0x8] sm:$0xff]
  %v26 = vld [vmem:[%s0 + $0x10] sm:$0xff]
  %v27 = vld [vmem:[%s0 + $0x18] sm:$0xff]
  %v28 = vld [vmem:[%s0 + $0x20] sm:$0xff]
  %v29 = vld [vmem:[%s0 + $0x28] sm:$0xff]
  %v30 = vld [vmem:[%s0 + $0x30] sm:$0xff]
  %v31 = vld [vmem:[%s0 + $0x38] sm:$0xff]
  %v32 = vld [vmem:[%s0 + $0x40] sm:$0xff]
  %v33 = vld [vmem:[%s0 + $0x48] sm:$0xff]
  %v34 = vld [vmem:[%s0 + $0x50] sm:$0xff]
  %v35 = vld [vmem:[%s0 + $0x58] sm:$0xff]
  %v36 = vld [vmem:[%s0 + $0x60] sm:$0xff]
  %v37 = vld [vmem:[%s0 + $0x68] sm:$0xff]
  %v38 = vld [vmem:[%s0 + $0x70] sm:$0xff]
  %v39 = vld [vmem:[%s0 + $0x78] sm:$0xff]
  %v40 = vld [vmem:[%s0 + $0x80] sm:$0xff]
  %v41 = vld [vmem:[%s0 + $0x88] sm:$0xff]
  %v42 = vld [vmem:[%s0 + $0x90] sm:$0xff]
  %v43 = vld [vmem:[%s0 + $0x98] sm:$0xff]
  %v44 = vld [vmem:[%s0 + $0xa0] sm:$0xff]
  %v45 = vld [vmem:[%s0 + $0xa8] sm:$0xff]
  %v46 = vld [vmem:[%s0 + $0xb0] sm:$0xff]
  %v47 = vld [vmem:[%s0 + $0xb8] sm:$0xff]
  %v48 = vld [vmem:[%s0 + $0xc0] sm:$0xff]
  %v49 = vld [vmem:[%s0 + $0xc8] sm:$0xff]
  %v50 = vld [vmem:[%s0 + $0xd0] sm:$0xff]
  %v51 = vld [vmem:[%s0 + $0xd8] sm:$0xff]
  %v52 = vld [vmem:[%s0 + $0xe0] sm:$0xff]
  %v53 = vld [vmem:[%s0 + $0xe8] sm:$0xff]
  %v54 = vld [vmem:[%s0 + $0xf0] sm:$0xff]
  %v55 = vld [vmem:[%s0 + $0xf8] sm:$0xff]
  %v56 = vld [vmem:[%s1] sm:$0xf]
  %v57 = vld [vmem:[%s1 + $0x4] sm:$0xf]
  %v58 = vld [vmem:[%s1 + $0x8] sm:$0xf]
  %v59 = vld [vmem:[%s1 + $0xc] sm:$0xf]
  %v60 = vld [vmem:[%s1 + $0x10] sm:$0xf]
  %v61 = vld [vmem:[%s1 + $0x14] sm:$0xf]
  %v62 = vld [vmem:[%s1 + $0x18] sm:$0xf]
  %v63 = vld [vmem:[%s1 + $0x1c] sm:$0xf]
  %v64 = vld [vmem:[%s1 + $0x20] sm:$0xf]
  %v65 = vld [vmem:[%s1 + $0x24] sm:$0xf]
  %v66 = vld [vmem:[%s1 + $0x28] sm:$0xf]
  %v67 = vld [vmem:[%s1 + $0x2c] sm:$0xf]
  %v68 = vld [vmem:[%s1 + $0x30] sm:$0xf]
  %v69 = vld [vmem:[%s1 + $0x34] sm:$0xf]
  %v70 = vld [vmem:[%s1 + $0x38] sm:$0xf]
  %v71 = vld [vmem:[%s1 + $0x3c] sm:$0xf]
  %v72 = vld [vmem:[%s1 + $0x40] sm:$0xf]
  %v73 = vld [vmem:[%s1 + $0x44] sm:$0xf]
  %v74 = vld [vmem:[%s1 + $0x48] sm:$0xf]
  %v75 = vld [vmem:[%s1 + $0x4c] sm:$0xf]
  %v76 = vld [vmem:[%s1 + $0x50] sm:$0xf]
  %v77 = vld [vmem:[%s1 + $0x54] sm:$0xf]
  %v78 = vld [vmem:[%s1 + $0x58] sm:$0xf]
  %v79 = vld [vmem:[%s1 + $0x5c] sm:$0xf]
  %v80 = vld [vmem:[%s1 + $0x60] sm:$0xf]
  %v81 = vld [vmem:[%s1 + $0x64] sm:$0xf]
  %v82 = vld [vmem:[%s1 + $0x68] sm:$0xf]
  %v83 = vld [vmem:[%s1 + $0x6c] sm:$0xf]
  %v84 = vld [vmem:[%s1 + $0x70] sm:$0xf]
  %v85 = vld [vmem:[%s1 + $0x74] sm:$0xf]
  %v86 = vld [vmem:[%s1 + $0x78] sm:$0xf]
  %v87 = vld [vmem:[%s1 + $0x7c] sm:$0xf]
  %v88 = vld [vmem:[%s1 + $0x80] sm:$0xf]
  %v89 = vld [vmem:[%s1 + $0x84] sm:$0xf]
  %v90 = vld [vmem:[%s1 + $0x88] sm:$0xf]
  %v91 = vld [vmem:[%s1 + $0x8c] sm:$0xf]
  %v92 = vld [vmem:[%s1 + $0x90] sm:$0xf]
  %v93 = vld [vmem:[%s1 + $0x94] sm:$0xf]
  %v94 = vld [vmem:[%s1 + $0x98] sm:$0xf]
  %v95 = vld [vmem:[%s1 + $0x9c] sm:$0xf]
  %v96 = vld [vmem:[%s1 + $0xa0] sm:$0xf]
  %v97 = vld [vmem:[%s1 + $0xa4] sm:$0xf]
  %v98 = vld [vmem:[%s1 + $0xa8] sm:$0xf]
  %v99 = vld [vmem:[%s1 + $0xac] sm:$0xf]
  %v100 = vld [vmem:[%s1 + $0xb0] sm:$0xf]
  %v101 = vld [vmem:[%s1 + $0xb4] sm:$0xf]
  %v102 = vld [vmem:[%s1 + $0xb8] sm:$0xf]
  %v103 = vld [vmem:[%s1 + $0xbc] sm:$0xf]
  %v104 = vld [vmem:[%s1 + $0xc0] sm:$0xf]
  %v105 = vld [vmem:[%s1 + $0xc4] sm:$0xf]
  %v106 = vld [vmem:[%s1 + $0xc8] sm:$0xf]
  %v107 = vld [vmem:[%s1 + $0xcc] sm:$0xf]
  %v108 = vld [vmem:[%s1 + $0xd0] sm:$0xf]
  %v109 = vld [vmem:[%s1 + $0xd4] sm:$0xf]
  %v110 = vld [vmem:[%s1 + $0xd8] sm:$0xf]
  %v111 = vld [vmem:[%s1 + $0xdc] sm:$0xf]
  %v112 = vld [vmem:[%s1 + $0xe0] sm:$0xf]
  %v113 = vld [vmem:[%s1 + $0xe4] sm:$0xf]
  %v114 = vld [vmem:[%s1 + $0xe8] sm:$0xf]
  %v115 = vld [vmem:[%s1 + $0xec] sm:$0xf]
  %v116 = vld [vmem:[%s1 + $0xf0] sm:$0xf]
  %v117 = vld [vmem:[%s1 + $0xf4] sm:$0xf]
  %v118 = vld [vmem:[%s1 + $0xf8] sm:$0xf]
  %v119 = vld [vmem:[%s1 + $0xfc] sm:$0xf]
  %v152 = vunpack.c.l.b16 %v24
  %v153 = vunpack.c.h.b16 %v24
  %v154 = vunpack.c.l.b16 %v25
  %v155 = vunpack.c.h.b16 %v25
  %v156 = vunpack.c.l.b16 %v26
  %v157 = vunpack.c.h.b16 %v26
  %v158 = vunpack.c.l.b16 %v27
  %v159 = vunpack.c.h.b16 %v27
  %v160 = vunpack.c.l.b16 %v28
  %v161 = vunpack.c.h.b16 %v28
  %v162 = vunpack.c.l.b16 %v29
  %v163 = vunpack.c.h.b16 %v29
  %v164 = vunpack.c.l.b16 %v30
  %v165 = vunpack.c.h.b16 %v30
  %v166 = vunpack.c.l.b16 %v31
  %v167 = vunpack.c.h.b16 %v31
  %v168 = vunpack.c.l.b16 %v32
  %v169 = vunpack.c.h.b16 %v32
  %v170 = vunpack.c.l.b16 %v33
  %v171 = vunpack.c.h.b16 %v33
  %v172 = vunpack.c.l.b16 %v34
  %v173 = vunpack.c.h.b16 %v34
  %v174 = vunpack.c.l.b16 %v35
  %v175 = vunpack.c.h.b16 %v35
  %v176 = vunpack.c.l.b16 %v36
  %v177 = vunpack.c.h.b16 %v36
  %v178 = vunpack.c.l.b16 %v37
  %v179 = vunpack.c.h.b16 %v37
  %v180 = vunpack.c.l.b16 %v38
  %v181 = vunpack.c.h.b16 %v38
  %v182 = vunpack.c.l.b16 %v39
  %v183 = vunpack.c.h.b16 %v39
  %v184 = vunpack.c.l.b16 %v40
  %v185 = vunpack.c.h.b16 %v40
  %v186 = vunpack.c.l.b16 %v41
  %v187 = vunpack.c.h.b16 %v41
  %v188 = vunpack.c.l.b16 %v42
  %v189 = vunpack.c.h.b16 %v42
  %v190 = vunpack.c.l.b16 %v43
  %v191 = vunpack.c.h.b16 %v43
  %v192 = vunpack.c.l.b16 %v44
  %v193 = vunpack.c.h.b16 %v44
  %v194 = vunpack.c.l.b16 %v45
  %v195 = vunpack.c.h.b16 %v45
  %v196 = vunpack.c.l.b16 %v46
  %v197 = vunpack.c.h.b16 %v46
  %v198 = vunpack.c.l.b16 %v47
  %v199 = vunpack.c.h.b16 %v47
  %v200 = vunpack.c.l.b16 %v48
  %v201 = vunpack.c.h.b16 %v48
  %v202 = vunpack.c.l.b16 %v49
  %v203 = vunpack.c.h.b16 %v49
  %v204 = vunpack.c.l.b16 %v50
  %v205 = vunpack.c.h.b16 %v50
  %v206 = vunpack.c.l.b16 %v51
  %v207 = vunpack.c.h.b16 %v51
  %v208 = vunpack.c.l.b16 %v52
  %v209 = vunpack.c.h.b16 %v52
  %v210 = vunpack.c.l.b16 %v53
  %v211 = vunpack.c.h.b16 %v53
  %v212 = vunpack.c.l.b16 %v54
  %v213 = vunpack.c.h.b16 %v54
  %v214 = vunpack.c.l.b16 %v55
  %v215 = vunpack.c.h.b16 %v55
  %v216 = vpack.c.b16 %v156, %v152
  %v217 = vpack.c.b16 %v157, %v153
  %v218 = vpack.c.b16 %v158, %v154
  %v219 = vpack.c.b16 %v159, %v155
  %v220 = vpack.c.b16 %v164, %v160
  %v221 = vpack.c.b16 %v165, %v161
  %v222 = vpack.c.b16 %v166, %v162
  %v223 = vpack.c.b16 %v167, %v163
  %v224 = vpack.c.b16 %v172, %v168
  %v225 = vpack.c.b16 %v173, %v169
  %v226 = vpack.c.b16 %v174, %v170
  %v227 = vpack.c.b16 %v175, %v171
  %v228 = vpack.c.b16 %v180, %v176
  %v229 = vpack.c.b16 %v181, %v177
  %v230 = vpack.c.b16 %v182, %v178
  %v231 = vpack.c.b16 %v183, %v179
  %v232 = vpack.c.b16 %v188, %v184
  %v233 = vpack.c.b16 %v189, %v185
  %v234 = vpack.c.b16 %v190, %v186
  %v235 = vpack.c.b16 %v191, %v187
  %v236 = vpack.c.b16 %v196, %v192
  %v237 = vpack.c.b16 %v197, %v193
  %v238 = vpack.c.b16 %v198, %v194
  %v239 = vpack.c.b16 %v199, %v195
  %v240 = vpack.c.b16 %v204, %v200
  %v241 = vpack.c.b16 %v205, %v201
  %v242 = vpack.c.b16 %v206, %v202
  %v243 = vpack.c.b16 %v207, %v203
  %v244 = vpack.c.b16 %v212, %v208
  %v245 = vpack.c.b16 %v213, %v209
  %v246 = vpack.c.b16 %v214, %v210
  %v247 = vpack.c.b16 %v215, %v211
  %v344 = vunpack.c.l.b16 %v56
  %v345 = vunpack.c.l.b16 %v57
  %v346 = vunpack.c.l.b16 %v58
  %v347 = vunpack.c.l.b16 %v59
  %v348 = vunpack.c.l.b16 %v60
  %v349 = vunpack.c.l.b16 %v61
  %v350 = vunpack.c.l.b16 %v62
  %v351 = vunpack.c.l.b16 %v63
  %v352 = vunpack.c.l.b16 %v64
  %v353 = vunpack.c.l.b16 %v65
  %v354 = vunpack.c.l.b16 %v66
  %v355 = vunpack.c.l.b16 %v67
  %v356 = vunpack.c.l.b16 %v68
  %v357 = vunpack.c.l.b16 %v69
  %v358 = vunpack.c.l.b16 %v70
  %v359 = vunpack.c.l.b16 %v71
  %v360 = vunpack.c.l.b16 %v72
  %v361 = vunpack.c.l.b16 %v73
  %v362 = vunpack.c.l.b16 %v74
  %v363 = vunpack.c.l.b16 %v75
  %v364 = vunpack.c.l.b16 %v76
  %v365 = vunpack.c.l.b16 %v77
  %v366 = vunpack.c.l.b16 %v78
  %v367 = vunpack.c.l.b16 %v79
  %v368 = vunpack.c.l.b16 %v80
  %v369 = vunpack.c.l.b16 %v81
  %v370 = vunpack.c.l.b16 %v82
  %v371 = vunpack.c.l.b16 %v83
  %v372 = vunpack.c.l.b16 %v84
  %v373 = vunpack.c.l.b16 %v85
  %v374 = vunpack.c.l.b16 %v86
  %v375 = vunpack.c.l.b16 %v87
  %v376 = vunpack.c.l.b16 %v88
  %v377 = vunpack.c.l.b16 %v89
  %v378 = vunpack.c.l.b16 %v90
  %v379 = vunpack.c.l.b16 %v91
  %v380 = vunpack.c.l.b16 %v92
  %v381 = vunpack.c.l.b16 %v93
  %v382 = vunpack.c.l.b16 %v94
  %v383 = vunpack.c.l.b16 %v95
  %v384 = vunpack.c.l.b16 %v96
  %v385 = vunpack.c.l.b16 %v97
  %v386 = vunpack.c.l.b16 %v98
  %v387 = vunpack.c.l.b16 %v99
  %v388 = vunpack.c.l.b16 %v100
  %v389 = vunpack.c.l.b16 %v101
  %v390 = vunpack.c.l.b16 %v102
  %v391 = vunpack.c.l.b16 %v103
  %v392 = vunpack.c.l.b16 %v104
  %v393 = vunpack.c.l.b16 %v105
  %v394 = vunpack.c.l.b16 %v106
  %v395 = vunpack.c.l.b16 %v107
  %v396 = vunpack.c.l.b16 %v108
  %v397 = vunpack.c.l.b16 %v109
  %v398 = vunpack.c.l.b16 %v110
  %v399 = vunpack.c.l.b16 %v111
  %v400 = vunpack.c.l.b16 %v112
  %v401 = vunpack.c.l.b16 %v113
  %v402 = vunpack.c.l.b16 %v114
  %v403 = vunpack.c.l.b16 %v115
  %v404 = vunpack.c.l.b16 %v116
  %v405 = vunpack.c.l.b16 %v117
  %v406 = vunpack.c.l.b16 %v118
  %v407 = vunpack.c.l.b16 %v119
  %v408 = vpack.c.b16 %v345, %v344
  %v409 = vpack.c.b16 %v347, %v346
  %v410 = vpack.c.b16 %v349, %v348
  %v411 = vpack.c.b16 %v351, %v350
  %v412 = vpack.c.b16 %v353, %v352
  %v413 = vpack.c.b16 %v355, %v354
  %v414 = vpack.c.b16 %v357, %v356
  %v415 = vpack.c.b16 %v359, %v358
  %v416 = vpack.c.b16 %v361, %v360
  %v417 = vpack.c.b16 %v363, %v362
  %v418 = vpack.c.b16 %v365, %v364
  %v419 = vpack.c.b16 %v367, %v366
  %v420 = vpack.c.b16 %v369, %v368
  %v421 = vpack.c.b16 %v371, %v370
  %v422 = vpack.c.b16 %v373, %v372
  %v423 = vpack.c.b16 %v375, %v374
  %v424 = vpack.c.b16 %v377, %v376
  %v425 = vpack.c.b16 %v379, %v378
  %v426 = vpack.c.b16 %v381, %v380
  %v427 = vpack.c.b16 %v383, %v382
  %v428 = vpack.c.b16 %v385, %v384
  %v429 = vpack.c.b16 %v387, %v386
  %v430 = vpack.c.b16 %v389, %v388
  %v431 = vpack.c.b16 %v391, %v390
  %v432 = vpack.c.b16 %v393, %v392
  %v433 = vpack.c.b16 %v395, %v394
  %v434 = vpack.c.b16 %v397, %v396
  %v435 = vpack.c.b16 %v399, %v398
  %v436 = vpack.c.b16 %v401, %v400
  %v437 = vpack.c.b16 %v403, %v402
  %v438 = vpack.c.b16 %v405, %v404
  %v439 = vpack.c.b16 %v407, %v406
  %472 = vmatprep.subr.bf16.mxu0 0
  %473 = vmatpush1.bf16.msra.mxu0 %v408
  %474 = vmatprep.subr.bf16.mxu0 0
  %475 = vmatpush1.bf16.msra.mxu0 %v409
  %476 = vmatprep.subr.bf16.mxu0 0
  %477 = vmatpush1.bf16.msra.mxu0 %v410
  %478 = vmatprep.subr.bf16.mxu0 0
  %479 = vmatpush1.bf16.msra.mxu0 %v411
  %480 = vmatprep.subr.bf16.mxu0 0
  %481 = vmatpush1.bf16.msra.mxu0 %v412
  %482 = vmatprep.subr.bf16.mxu0 0
  %483 = vmatpush1.bf16.msra.mxu0 %v413
  %484 = vmatprep.subr.bf16.mxu0 0
  %485 = vmatpush1.bf16.msra.mxu0 %v414
  %486 = vmatprep.subr.bf16.mxu0 0
  %487 = vmatpush1.bf16.msra.mxu0 %v415
  %488 = vmatprep.subr.bf16.mxu0 0
  %489 = vmatpush1.bf16.msra.mxu0 %v416
  %490 = vmatprep.subr.bf16.mxu0 0
  %491 = vmatpush1.bf16.msra.mxu0 %v417
  %492 = vmatprep.subr.bf16.mxu0 0
  %493 = vmatpush1.bf16.msra.mxu0 %v418
  %494 = vmatprep.subr.bf16.mxu0 0
  %495 = vmatpush1.bf16.msra.mxu0 %v419
  %496 = vmatprep.subr.bf16.mxu0 0
  %497 = vmatpush1.bf16.msra.mxu0 %v420
  %498 = vmatprep.subr.bf16.mxu0 0
  %499 = vmatpush1.bf16.msra.mxu0 %v421
  %500 = vmatprep.subr.bf16.mxu0 0
  %501 = vmatpush1.bf16.msra.mxu0 %v422
  %502 = vmatprep.subr.bf16.mxu0 0
  %503 = vmatpush1.bf16.msra.mxu0 %v423
  %504 = vmatprep.mubr.bf16.mxu0 %v217
  %505 = vmatmul.mubr.bf16.gmra.mrb[0].mxu0 %v216
  %v506 = vpop.f32.mrb[0].mxu0
  %v507 = vadd.f32 0.0, %v506
  %v508 = vpop.f32.mrb[0].mxu0
  %v509 = vpop.f32.mrb[0].mxu0
  %v510 = vadd.f32 0.0, %v509
  %v511 = vpop.f32.mrb[0].mxu0
  %512 = vmatprep.mubr.bf16.mxu0 %v221
  %513 = vmatmul.mubr.bf16.gmra.mrb[0].mxu0 %v220
  %v514 = vpop.f32.mrb[0].mxu0
  %v515 = vadd.f32 0.0, %v514
  %v516 = vpop.f32.mrb[0].mxu0
  %v517 = vpop.f32.mrb[0].mxu0
  %v518 = vadd.f32 0.0, %v517
  %v519 = vpop.f32.mrb[0].mxu0
  %520 = vmatprep.mubr.bf16.mxu0 %v225
  %521 = vmatmul.mubr.bf16.gmra.mrb[0].mxu0 %v224
  %v522 = vpop.f32.mrb[0].mxu0
  %v523 = vadd.f32 0.0, %v522
  %v524 = vpop.f32.mrb[0].mxu0
  %v525 = vpop.f32.mrb[0].mxu0
  %v526 = vadd.f32 0.0, %v525
  %v527 = vpop.f32.mrb[0].mxu0
  %528 = vmatprep.mubr.bf16.mxu0 %v229
  %529 = vmatmul.mubr.bf16.gmra.mrb[0].mxu0 %v228
  %v530 = vpop.f32.mrb[0].mxu0
  %v531 = vadd.f32 0.0, %v530
  %v532 = vpop.f32.mrb[0].mxu0
  %v533 = vpop.f32.mrb[0].mxu0
  %v534 = vadd.f32 0.0, %v533
  %v535 = vpop.f32.mrb[0].mxu0
  %536 = vmatprep.mubr.bf16.mxu0 %v233
  %537 = vmatmul.mubr.bf16.gmra.mrb[0].mxu0 %v232
  %v538 = vpop.f32.mrb[0].mxu0
  %v539 = vadd.f32 0.0, %v538
  %v540 = vpop.f32.mrb[0].mxu0
  %v541 = vpop.f32.mrb[0].mxu0
  %v542 = vadd.f32 0.0, %v541
  %v543 = vpop.f32.mrb[0].mxu0
  %544 = vmatprep.mubr.bf16.mxu0 %v237
  %545 = vmatmul.mubr.bf16.gmra.mrb[0].mxu0 %v236
  %v546 = vpop.f32.mrb[0].mxu0
  %v547 = vadd.f32 0.0, %v546
  %v548 = vpop.f32.mrb[0].mxu0
  %v549 = vpop.f32.mrb[0].mxu0
  %v550 = vadd.f32 0.0, %v549
  %v551 = vpop.f32.mrb[0].mxu0
  %552 = vmatprep.mubr.bf16.mxu0 %v241
  %553 = vmatmul.mubr.bf16.gmra.mrb[0].mxu0 %v240
  %v554 = vpop.f32.mrb[0].mxu0
  %v555 = vadd.f32 0.0, %v554
  %v556 = vpop.f32.mrb[0].mxu0
  %v557 = vpop.f32.mrb[0].mxu0
  %v558 = vadd.f32 0.0, %v557
  %v559 = vpop.f32.mrb[0].mxu0
  %560 = vmatprep.mubr.bf16.mxu0 %v245
  %561 = vmatmul.mubr.bf16.gmra.mrb[0].mxu0 %v244
  %v562 = vpop.f32.mrb[0].mxu0
  %v563 = vadd.f32 0.0, %v562
  %v564 = vpop.f32.mrb[0].mxu0
  %v565 = vpop.f32.mrb[0].mxu0
  %v566 = vadd.f32 0.0, %v565
  %v567 = vpop.f32.mrb[0].mxu0
  %568 = vdwg.mxu0
  %569 = vmatprep.subr.bf16.mxu0 0
  %570 = vmatpush1.bf16.msra.mxu0 %v424
  %571 = vmatprep.subr.bf16.mxu0 0
  %572 = vmatpush1.bf16.msra.mxu0 %v425
  %573 = vmatprep.subr.bf16.mxu0 0
  %574 = vmatpush1.bf16.msra.mxu0 %v426
  %575 = vmatprep.subr.bf16.mxu0 0
  %576 = vmatpush1.bf16.msra.mxu0 %v427
  %577 = vmatprep.subr.bf16.mxu0 0
  %578 = vmatpush1.bf16.msra.mxu0 %v428
  %579 = vmatprep.subr.bf16.mxu0 0
  %580 = vmatpush1.bf16.msra.mxu0 %v429
  %581 = vmatprep.subr.bf16.mxu0 0
  %582 = vmatpush1.bf16.msra.mxu0 %v430
  %583 = vmatprep.subr.bf16.mxu0 0
  %584 = vmatpush1.bf16.msra.mxu0 %v431
  %585 = vmatprep.subr.bf16.mxu0 0
  %586 = vmatpush1.bf16.msra.mxu0 %v432
  %587 = vmatprep.subr.bf16.mxu0 0
  %588 = vmatpush1.bf16.msra.mxu0 %v433
  %589 = vmatprep.subr.bf16.mxu0 0
  %590 = vmatpush1.bf16.msra.mxu0 %v434
  %591 = vmatprep.subr.bf16.mxu0 0
  %592 = vmatpush1.bf16.msra.mxu0 %v435
  %593 = vmatprep.subr.bf16.mxu0 0
  %594 = vmatpush1.bf16.msra.mxu0 %v436
  %595 = vmatprep.subr.bf16.mxu0 0
  %596 = vmatpush1.bf16.msra.mxu0 %v437
  %597 = vmatprep.subr.bf16.mxu0 0
  %598 = vmatpush1.bf16.msra.mxu0 %v438
  %599 = vmatprep.subr.bf16.mxu0 0
  %600 = vmatpush1.bf16.msra.mxu0 %v439
  %601 = vmatprep.mubr.bf16.mxu0 %v219
  %602 = vmatmul.mubr.bf16.gmra.mrb[0].mxu0 %v218
  %v603 = vpop.f32.mrb[0].mxu0
  %v604 = vadd.f32 %v507, %v603
  %v605 = vpop.f32.mrb[0].mxu0
  %v606 = vpop.f32.mrb[0].mxu0
  %v607 = vadd.f32 %v510, %v606
  %v608 = vpop.f32.mrb[0].mxu0
  %609 = vmatprep.mubr.bf16.mxu0 %v223
  %610 = vmatmul.mubr.bf16.gmra.mrb[0].mxu0 %v222
  %v611 = vpop.f32.mrb[0].mxu0
  %v612 = vadd.f32 %v515, %v611
  %v613 = vpop.f32.mrb[0].mxu0
  %v614 = vpop.f32.mrb[0].mxu0
  %v615 = vadd.f32 %v518, %v614
  %v616 = vpop.f32.mrb[0].mxu0
  %617 = vmatprep.mubr.bf16.mxu0 %v227
  %618 = vmatmul.mubr.bf16.gmra.mrb[0].mxu0 %v226
  %v619 = vpop.f32.mrb[0].mxu0
  %v620 = vadd.f32 %v523, %v619
  %v621 = vpop.f32.mrb[0].mxu0
  %v622 = vpop.f32.mrb[0].mxu0
  %v623 = vadd.f32 %v526, %v622
  %v624 = vpop.f32.mrb[0].mxu0
  %625 = vmatprep.mubr.bf16.mxu0 %v231
  %626 = vmatmul.mubr.bf16.gmra.mrb[0].mxu0 %v230
  %v627 = vpop.f32.mrb[0].mxu0
  %v628 = vadd.f32 %v531, %v627
  %v629 = vpop.f32.mrb[0].mxu0
  %v630 = vpop.f32.mrb[0].mxu0
  %v631 = vadd.f32 %v534, %v630
  %v632 = vpop.f32.mrb[0].mxu0
  %633 = vmatprep.mubr.bf16.mxu0 %v235
  %634 = vmatmul.mubr.bf16.gmra.mrb[0].mxu0 %v234
  %v635 = vpop.f32.mrb[0].mxu0
  %v636 = vadd.f32 %v539, %v635
  %v637 = vpop.f32.mrb[0].mxu0
  %v638 = vpop.f32.mrb[0].mxu0
  %v639 = vadd.f32 %v542, %v638
  %v640 = vpop.f32.mrb[0].mxu0
  %641 = vmatprep.mubr.bf16.mxu0 %v239
  %642 = vmatmul.mubr.bf16.gmra.mrb[0].mxu0 %v238
  %v643 = vpop.f32.mrb[0].mxu0
  %v644 = vadd.f32 %v547, %v643
  %v645 = vpop.f32.mrb[0].mxu0
  %v646 = vpop.f32.mrb[0].mxu0
  %v647 = vadd.f32 %v550, %v646
  %v648 = vpop.f32.mrb[0].mxu0
  %649 = vmatprep.mubr.bf16.mxu0 %v243
  %650 = vmatmul.mubr.bf16.gmra.mrb[0].mxu0 %v242
  %v651 = vpop.f32.mrb[0].mxu0
  %v652 = vadd.f32 %v555, %v651
  %v653 = vpop.f32.mrb[0].mxu0
  %v654 = vpop.f32.mrb[0].mxu0
  %v655 = vadd.f32 %v558, %v654
  %v656 = vpop.f32.mrb[0].mxu0
  %657 = vmatprep.mubr.bf16.mxu0 %v247
  %658 = vmatmul.mubr.bf16.gmra.mrb[0].mxu0 %v246
  %v659 = vpop.f32.mrb[0].mxu0
  %v660 = vadd.f32 %v563, %v659
  %v661 = vpop.f32.mrb[0].mxu0
  %v662 = vpop.f32.mrb[0].mxu0
  %v663 = vadd.f32 %v566, %v662
  %v664 = vpop.f32.mrb[0].mxu0
  %665 = vdwg.mxu0
  %s666 = smul.u32 0, 128
  %s667 = scalar_lea.vmem [#allocation2], %s666
  %668 = vst [vmem:[%s667] sm:$0xff] %v604
  %669 = vst [vmem:[%s667 + $0x8] sm:$0xff] %v607
  %670 = vst [vmem:[%s667 + $0x10] sm:$0xff] %v612
  %671 = vst [vmem:[%s667 + $0x18] sm:$0xff] %v615
  %672 = vst [vmem:[%s667 + $0x20] sm:$0xff] %v620
  %673 = vst [vmem:[%s667 + $0x28] sm:$0xff] %v623
  %674 = vst [vmem:[%s667 + $0x30] sm:$0xff] %v628
  %675 = vst [vmem:[%s667 + $0x38] sm:$0xff] %v631
  %676 = vst [vmem:[%s667 + $0x40] sm:$0xff] %v636
  %677 = vst [vmem:[%s667 + $0x48] sm:$0xff] %v639
  %678 = vst [vmem:[%s667 + $0x50] sm:$0xff] %v644
  %679 = vst [vmem:[%s667 + $0x58] sm:$0xff] %v647
  %680 = vst [vmem:[%s667 + $0x60] sm:$0xff] %v652
  %681 = vst [vmem:[%s667 + $0x68] sm:$0xff] %v655
  %682 = vst [vmem:[%s667 + $0x70] sm:$0xff] %v660
  %683 = vst [vmem:[%s667 + $0x78] sm:$0xff] %v663
  %v684 = vld [vmem:[#allocation3] sm:$0x1]
  %v685 = vadd.f32 %v604, %v607
  %v686 = vadd.f32 %v685, %v612
  %v687 = vadd.f32 %v686, %v615
  %v688 = vadd.f32 %v687, %v620
  %v689 = vadd.f32 %v688, %v623
  %v690 = vadd.f32 %v689, %v628
  %v691 = vadd.f32 %v690, %v631
  %v692 = vadd.f32 %v691, %v636
  %v693 = vadd.f32 %v692, %v639
  %v694 = vadd.f32 %v693, %v644
  %v695 = vadd.f32 %v694, %v647
  %v696 = vadd.f32 %v695, %v652
  %v697 = vadd.f32 %v696, %v655
  %v698 = vadd.f32 %v697, %v660
  %v699 = vadd.f32 %v698, %v663
  %v700 = vrot.slane %v699, 4
  %v701 = vadd.f32 %v699, %v700
  %v702 = vrot.slane %v701, 2
  %v703 = vadd.f32 %v701, %v702
  %v704 = vrot.slane %v703, 1
  %v705 = vadd.f32 %v703, %v704
  %v706 = vadd.f32 %v684, %v705
  %707 = vst [vmem:[#allocation3] sm:$0x1] %v706
  %v708 = vld [vmem:[#allocation4] sm:$0x1]
  %v709 = vmul.f32 %v604, %v604
  %v710 = vmul.f32 %v607, %v607
  %v711 = vmul.f32 %v612, %v612
  %v712 = vmul.f32 %v615, %v615
  %v713 = vmul.f32 %v620, %v620
  %v714 = vmul.f32 %v623, %v623
  %v715 = vmul.f32 %v628, %v628
  %v716 = vmul.f32 %v631, %v631
  %v717 = vmul.f32 %v636, %v636
  %v718 = vmul.f32 %v639, %v639
  %v719 = vmul.f32 %v644, %v644
  %v720 = vmul.f32 %v647, %v647
  %v721 = vmul.f32 %v652, %v652
  %v722 = vmul.f32 %v655, %v655
  %v723 = vmul.f32 %v660, %v660
  %v724 = vmul.f32 %v663, %v663
  %v725 = vadd.f32 %v709, %v710
  %v726 = vadd.f32 %v725, %v711
  %v727 = vadd.f32 %v726, %v712
  %v728 = vadd.f32 %v727, %v713
  %v729 = vadd.f32 %v728, %v714
  %v730 = vadd.f32 %v729, %v715
  %v731 = vadd.f32 %v730, %v716
  %v732 = vadd.f32 %v731, %v717
  %v733 = vadd.f32 %v732, %v718
  %v734 = vadd.f32 %v733, %v719
  %v735 = vadd.f32 %v734, %v720
  %v736 = vadd.f32 %v735, %v721
  %v737 = vadd.f32 %v736, %v722
  %v738 = vadd.f32 %v737, %v723
  %v739 = vadd.f32 %v738, %v724
  %v740 = vrot.slane %v739, 4
  %v741 = vadd.f32 %v739, %v740
  %v742 = vrot.slane %v741, 2
  %v743 = vadd.f32 %v741, %v742
  %v744 = vrot.slane %v743, 1
  %v745 = vadd.f32 %v743, %v744
  %v746 = vadd.f32 %v708, %v745
  %747 = vst [vmem:[#allocation4] sm:$0x1] %v746
  // Predicated region
  $region22: #{_lambda_.6} parent=0 // pred_check
    %p748 = pneg %p18
  $region23: #{_lambda_.6} parent=0 // pred_check_branch
    %750 = sbr.rel (%p748) target = $region25
  $region24: #{_lambda_.6} parent=0 // pred_region
    %v751 = vld [vmem:[#allocation3] sm:$0x1]
    %v752 = vmul.f32 %v751, 0.0078125
    %v753 = vld [vmem:[#allocation4] sm:$0x1]
    %v754 = vmul.f32 %v753, 0.0078125
    %v755 = vmul.f32 %v752, %v752
    %v756 = vsub.f32 %v754, %v755
    %v757 = vmax.f32 %v756, 0.0
    %v758 = vld [vmem:[%s2] sm:$0x1]
    %v759 = vadd.f32 %v757, 1e-05
    %v760 = vrsqrt.pop %v759
    %v761 = vmul.f32 %v758, %v760
    %v762 = vld [vmem:[%s3] sm:$0x1]
    %v763 = vmul.f32 %v752, %v761
    %v764 = vsub.f32 %v762, %v763
    %v765 = vld [vmem:[#allocation2] sm:$0xff]
    %v766 = vld [vmem:[#allocation2 + $0x8] sm:$0xff]
    %v767 = vld [vmem:[#allocation2 + $0x10] sm:$0xff]
    %v768 = vld [vmem:[#allocation2 + $0x18] sm:$0xff]
    %v769 = vld [vmem:[#allocation2 + $0x20] sm:$0xff]
    %v770 = vld [vmem:[#allocation2 + $0x28] sm:$0xff]
    %v771 = vld [vmem:[#allocation2 + $0x30] sm:$0xff]
    %v772 = vld [vmem:[#allocation2 + $0x38] sm:$0xff]
    %v773 = vld [vmem:[#allocation2 + $0x40] sm:$0xff]
    %v774 = vld [vmem:[#allocation2 + $0x48] sm:$0xff]
    %v775 = vld [vmem:[#allocation2 + $0x50] sm:$0xff]
    %v776 = vld [vmem:[#allocation2 + $0x58] sm:$0xff]
    %v777 = vld [vmem:[#allocation2 + $0x60] sm:$0xff]
    %v778 = vld [vmem:[#allocation2 + $0x68] sm:$0xff]
    %v779 = vld [vmem:[#allocation2 + $0x70] sm:$0xff]
    %v780 = vld [vmem:[#allocation2 + $0x78] sm:$0xff]
    %v782 = vlaneseq
    %v783 = vshrl.u32 %v782, 7
    %v784 = vsub.s32 0, %v783
    %v785 = vrot.slane %v761, %v784
    %v787 = vmul.f32 %v765, %v785
    %v788 = vmul.f32 %v766, %v785
    %v789 = vmul.f32 %v767, %v785
    %v790 = vmul.f32 %v768, %v785
    %v791 = vmul.f32 %v769, %v785
    %v792 = vmul.f32 %v770, %v785
    %v793 = vmul.f32 %v771, %v785
    %v794 = vmul.f32 %v772, %v785
    %v795 = vmul.f32 %v773, %v785
    %v796 = vmul.f32 %v774, %v785
    %v797 = vmul.f32 %v775, %v785
    %v798 = vmul.f32 %v776, %v785
    %v799 = vmul.f32 %v777, %v785
    %v800 = vmul.f32 %v778, %v785
    %v801 = vmul.f32 %v779, %v785
    %v802 = vmul.f32 %v780, %v785
    %v804 = vlaneseq
    %v805 = vshrl.u32 %v804, 7
    %v806 = vsub.s32 0, %v805
    %v807 = vrot.slane %v764, %v806
    %v809 = vadd.f32 %v787, %v807
    %v810 = vadd.f32 %v788, %v807
    %v811 = vadd.f32 %v789, %v807
    %v812 = vadd.f32 %v790, %v807
    %v813 = vadd.f32 %v791, %v807
    %v814 = vadd.f32 %v792, %v807
    %v815 = vadd.f32 %v793, %v807
    %v816 = vadd.f32 %v794, %v807
    %v817 = vadd.f32 %v795, %v807
    %v818 = vadd.f32 %v796, %v807
    %v819 = vadd.f32 %v797, %v807
    %v820 = vadd.f32 %v798, %v807
    %v821 = vadd.f32 %v799, %v807
    %v822 = vadd.f32 %v800, %v807
    %v823 = vadd.f32 %v801, %v807
    %v824 = vadd.f32 %v802, %v807
    %vm825 = vcmp.ge.f32.partialorder %v809, 0.0
    %vm826 = vcmp.ge.f32.partialorder %v810, 0.0
    %vm827 = vcmp.ge.f32.partialorder %v811, 0.0
    %vm828 = vcmp.ge.f32.partialorder %v812, 0.0
    %vm829 = vcmp.ge.f32.partialorder %v813, 0.0
    %vm830 = vcmp.ge.f32.partialorder %v814, 0.0
    %vm831 = vcmp.ge.f32.partialorder %v815, 0.0
    %vm832 = vcmp.ge.f32.partialorder %v816, 0.0
    %vm833 = vcmp.ge.f32.partialorder %v817, 0.0
    %vm834 = vcmp.ge.f32.partialorder %v818, 0.0
    %vm835 = vcmp.ge.f32.partialorder %v819, 0.0
    %vm836 = vcmp.ge.f32.partialorder %v820, 0.0
    %vm837 = vcmp.ge.f32.partialorder %v821, 0.0
    %vm838 = vcmp.ge.f32.partialorder %v822, 0.0
    %vm839 = vcmp.ge.f32.partialorder %v823, 0.0
    %vm840 = vcmp.ge.f32.partialorder %v824, 0.0
    %v841 = vmul.f32 %v809, 0.2
    %v842 = vmul.f32 %v810, 0.2
    %v843 = vmul.f32 %v811, 0.2
    %v844 = vmul.f32 %v812, 0.2
    %v845 = vmul.f32 %v813, 0.2
    %v846 = vmul.f32 %v814, 0.2
    %v847 = vmul.f32 %v815, 0.2
    %v848 = vmul.f32 %v816, 0.2
    %v849 = vmul.f32 %v817, 0.2
    %v850 = vmul.f32 %v818, 0.2
    %v851 = vmul.f32 %v819, 0.2
    %v852 = vmul.f32 %v820, 0.2
    %v853 = vmul.f32 %v821, 0.2
    %v854 = vmul.f32 %v822, 0.2
    %v855 = vmul.f32 %v823, 0.2
    %v856 = vmul.f32 %v824, 0.2
    %v857 = vsel %vm825, %v809, %v841
    %v858 = vsel %vm826, %v810, %v842
    %v859 = vsel %vm827, %v811, %v843
    %v860 = vsel %vm828, %v812, %v844
    %v861 = vsel %vm829, %v813, %v845
    %v862 = vsel %vm830, %v814, %v846
    %v863 = vsel %vm831, %v815, %v847
    %v864 = vsel %vm832, %v816, %v848
    %v865 = vsel %vm833, %v817, %v849
    %v866 = vsel %vm834, %v818, %v850
    %v867 = vsel %vm835, %v819, %v851
    %v868 = vsel %vm836, %v820, %v852
    %v869 = vsel %vm837, %v821, %v853
    %v870 = vsel %vm838, %v822, %v854
    %v871 = vsel %vm839, %v823, %v855
    %v872 = vsel %vm840, %v824, %v856
    %v873 = vpack.c.bf16 %v858, %v857
    %v874 = vpack.c.bf16 %v860, %v859
    %v875 = vpack.c.bf16 %v862, %v861
    %v876 = vpack.c.bf16 %v864, %v863
    %v877 = vpack.c.bf16 %v866, %v865
    %v878 = vpack.c.bf16 %v868, %v867
    %v879 = vpack.c.bf16 %v870, %v869
    %v880 = vpack.c.bf16 %v872, %v871
    %v889 = vunpack.c.l.b16 %v873
    %v890 = vunpack.c.h.b16 %v873
    %v891 = vunpack.c.l.b16 %v874
    %v892 = vunpack.c.h.b16 %v874
    %v893 = vunpack.c.l.b16 %v875
    %v894 = vunpack.c.h.b16 %v875
    %v895 = vunpack.c.l.b16 %v876
    %v896 = vunpack.c.h.b16 %v876
    %v897 = vunpack.c.l.b16 %v877
    %v898 = vunpack.c.h.b16 %v877
    %v899 = vunpack.c.l.b16 %v878
    %v900 = vunpack.c.h.b16 %v878
    %v901 = vunpack.c.l.b16 %v879
    %v902 = vunpack.c.h.b16 %v879
    %v903 = vunpack.c.l.b16 %v880
    %v904 = vunpack.c.h.b16 %v880
    %v905 = vpack.c.b16 %v889, %v889
    %v906 = vpack.c.b16 %v890, %v890
    %v907 = vpack.c.b16 %v891, %v891
    %v908 = vpack.c.b16 %v892, %v892
    %v909 = vpack.c.b16 %v893, %v893
    %v910 = vpack.c.b16 %v894, %v894
    %v911 = vpack.c.b16 %v895, %v895
    %v912 = vpack.c.b16 %v896, %v896
    %v913 = vpack.c.b16 %v897, %v897
    %v914 = vpack.c.b16 %v898, %v898
    %v915 = vpack.c.b16 %v899, %v899
    %v916 = vpack.c.b16 %v900, %v900
    %v917 = vpack.c.b16 %v901, %v901
    %v918 = vpack.c.b16 %v902, %v902
    %v919 = vpack.c.b16 %v903, %v903
    %v920 = vpack.c.b16 %v904, %v904
    %937 = vst [vmem:[%s4] sm:$0xf] %v905
    %938 = vst [vmem:[%s4 + $0x4] sm:$0xf] %v906
    %939 = vst [vmem:[%s4 + $0x8] sm:$0xf] %v907
    %940 = vst [vmem:[%s4 + $0xc] sm:$0xf] %v908
    %941 = vst [vmem:[%s4 + $0x10] sm:$0xf] %v909
    %942 = vst [vmem:[%s4 + $0x14] sm:$0xf] %v910
    %943 = vst [vmem:[%s4 + $0x18] sm:$0xf] %v911
    %944 = vst [vmem:[%s4 + $0x1c] sm:$0xf] %v912
    %945 = vst [vmem:[%s4 + $0x20] sm:$0xf] %v913
    %946 = vst [vmem:[%s4 + $0x24] sm:$0xf] %v914
    %947 = vst [vmem:[%s4 + $0x28] sm:$0xf] %v915
    %948 = vst [vmem:[%s4 + $0x2c] sm:$0xf] %v916
    %949 = vst [vmem:[%s4 + $0x30] sm:$0xf] %v917
    %950 = vst [vmem:[%s4 + $0x34] sm:$0xf] %v918
    %951 = vst [vmem:[%s4 + $0x38] sm:$0xf] %v919
    %952 = vst [vmem:[%s4 + $0x3c] sm:$0xf] %v920
  $region25: #{_lambda_.6} parent=0 // pred_fallthru
    _
  // Predicated region
  $region26: #{_lambda_.6} parent=0 // pred_check
    _
  $region27: #{_lambda_.6} parent=0 // pred_check_branch
    %954 = sbr.rel (0) target = $region29
  $region28: #{_lambda_.6} parent=0 // pred_region
    _
  $region29: #{_lambda_.6} parent=0 // pred_fallthru
    _
  // Predicated region
  $region30: #{_lambda_.6} parent=0 // pred_check
    _
  $region31: #{_lambda_.6} parent=0 // pred_check_branch
    %956 = sbr.rel (0) target = $region33
  $region32: #{_lambda_.6} parent=0 // pred_region
    _
  $region33: #{_lambda_.6} parent=0 // pred_fallthru
    _

// kernel: _lambda_.7
$region0: #{_lambda_.7}
  #allocation0 [shape = 'u32[]', space=smem, size = 0x4, offset = 0x4, fixed_abs, tag = 'smem constant byte address 0x4 - core index']
  #allocation1 [shape = 'u32[144,128]{1,0:T(1,128)}', space=vmem, size = 0x12000, scoped, tag = 'internal scratch']
  %s0 = inlined_call_operand.vmem [shape: bf16[64,1024], index: 0, kind: input, shape index: {}]
  %s1 = inlined_call_operand.vmem [shape: bf16[1024,128], index: 1, kind: input, shape index: {}]
  %s2 = inlined_call_operand.vmem [shape: f32[1,128], index: 2, kind: input, shape index: {}]
  %s3 = inlined_call_operand.vmem [shape: f32[64,128], index: 3, kind: output, shape index: {}]
  %s4 = sld [smem:[#allocation0]]
  $region45: #{_lambda_.7} parent=0
    _
  %s6 = ssub.s32 1, %s4
  %s7 = scalar_select 0, %s6, %s4
  loop: start=0, step=1, limit=4
  $region2: #{_lambda_.7} parent=0 // loop_pre_header
    _
  $region3: #{_lambda_.7} parent=0 // loop_header
    %s9 = sphi 0, %s13
    %p10 = scmp.ge.s32.totalorder %s9, 4
    %s19 = sphi 0, %s21
    %s22 = sphi 0, %s19
    %s23 = sphi 0, %s22
    %s39 = sphi 0, %s23
    %s43 = sphi 0, %s43
    %s45 = sphi 0, %s43
    %s46 = sphi 0, %s45
    %s60 = sphi 0, %s46
    %s64 = sphi 0, %s64
    %s66 = sphi 0, %s64
    %s67 = sphi 0, %s66
    %s81 = sphi 0, %s67
    %s87 = sphi 0, %s89
    %s90 = sphi 0, %s87
    %s91 = sphi 0, %s90
    %s107 = sphi 0, %s91
  $region4: #{_lambda_.7} parent=0 // loop_header_branch
    %12 = sbr.rel (%p10) target = $region8
  $region5: #{_lambda_.7} parent=0 // loop_body
    %s14 = ssub.s32 %s9, 1
    %s15 = ssub.s32 %s9, 2
    %s16 = sadd.s32 %s9, 1
    %s17 = ssub.s32 %s9, %s16
    %p18 = scmp.eq.s32.totalorder %s17, 0
    %s20 = sadd.s32 %s19, 1
    %s21 = scalar_select %p18, %s19, %s20
    %p24 = pneg %p18
    %p25 = scmp.eq.s32.totalorder %s9, 1
    %p26 = por %p24, %p25
    %p27 = scmp.ne.s32.totalorder %s19, %s22
    %p28 = scmp.eq.s32.totalorder %s9, 0
    %p29 = por %p27, %p28
    %p30 = scmp.ne.s32.totalorder %s19, %s22
    %p31 = scmp.eq.s32.totalorder %s14, 1
    %p32 = por %p30, %p31
    %p33 = scmp.ne.s32.totalorder %s22, %s23
    %p34 = scmp.eq.s32.totalorder %s14, 0
    %p35 = por %p33, %p34
    %p36 = scmp.ne.s32.totalorder %s22, %s23
    %p37 = scmp.eq.s32.totalorder %s15, 1
    %p38 = por %p36, %p37
    %p40 = scmp.ne.s32.totalorder %s23, %s39
    %p41 = scmp.eq.s32.totalorder %s15, 0
    %p42 = por %p40, %p41
    %s44 = sadd.s32 %s43, 1
    %p47 = scmp.eq.s32.totalorder %s9, 1
    %p48 = scmp.ne.s32.totalorder %s43, %s45
    %p49 = scmp.eq.s32.totalorder %s9, 0
    %p50 = por %p48, %p49
    %p51 = scmp.ne.s32.totalorder %s43, %s45
    %p52 = scmp.eq.s32.totalorder %s14, 1
    %p53 = por %p51, %p52
    %p54 = scmp.ne.s32.totalorder %s45, %s46
    %p55 = scmp.eq.s32.totalorder %s14, 0
    %p56 = por %p54, %p55
    %p57 = scmp.ne.s32.totalorder %s45, %s46
    %p58 = scmp.eq.s32.totalorder %s15, 1
    %p59 = por %p57, %p58
    %p61 = scmp.ne.s32.totalorder %s46, %s60
    %p62 = scmp.eq.s32.totalorder %s15, 0
    %p63 = por %p61, %p62
    %s65 = sadd.s32 %s64, 1
    %p68 = scmp.eq.s32.totalorder %s9, 1
    %p69 = scmp.ne.s32.totalorder %s64, %s66
    %p70 = scmp.eq.s32.totalorder %s9, 0
    %p71 = por %p69, %p70
    %p72 = scmp.ne.s32.totalorder %s64, %s66
    %p73 = scmp.eq.s32.totalorder %s14, 1
    %p74 = por %p72, %p73
    %p75 = scmp.ne.s32.totalorder %s66, %s67
    %p76 = scmp.eq.s32.totalorder %s14, 0
    %p77 = por %p75, %p76
    %p78 = scmp.ne.s32.totalorder %s66, %s67
    %p79 = scmp.eq.s32.totalorder %s15, 1
    %p80 = por %p78, %p79
    %p82 = scmp.ne.s32.totalorder %s67, %s81
    %p83 = scmp.eq.s32.totalorder %s15, 0
    %p84 = por %p82, %p83
    %s85 = ssub.s32 %s9, %s16
    %p86 = scmp.eq.s32.totalorder %s85, 0
    %s88 = sadd.s32 %s87, 1
    %s89 = scalar_select %p86, %s87, %s88
    %p92 = pneg %p86
    %p93 = scmp.eq.s32.totalorder %s9, 1
    %p94 = por %p92, %p93
    %p95 = scmp.ne.s32.totalorder %s87, %s90
    %p96 = scmp.eq.s32.totalorder %s9, 0
    %p97 = por %p95, %p96
    %p98 = scmp.ne.s32.totalorder %s87, %s90
    %p99 = scmp.eq.s32.totalorder %s14, 1
    %p100 = por %p98, %p99
    %p101 = scmp.ne.s32.totalorder %s90, %s91
    %p102 = scmp.eq.s32.totalorder %s14, 0
    %p103 = por %p101, %p102
    %p104 = scmp.ne.s32.totalorder %s90, %s91
    %p105 = scmp.eq.s32.totalorder %s15, 1
    %p106 = por %p104, %p105
    %p108 = scmp.ne.s32.totalorder %s91, %s107
    %p109 = scmp.eq.s32.totalorder %s15, 0
    %p110 = por %p108, %p109
    %p111 = scmp.le.s32.totalorder 1, %s9
    %p112 = scmp.lt.s32.totalorder %s9, 3
    %p113 = pnand %p111, %p112
    %p114 = pneg %p113
    // Predicated region
    $region9: #{_lambda_.7} parent=5 // pred_check
      _
    $region10: #{_lambda_.7} parent=5 // pred_check_branch
      %116 = sbr.rel (%p113) target = $region12
    $region11: #{_lambda_.7} parent=5 // pred_region
      %s117 = ssub.s32 %s9, 1
      // Predicated region
      $region13: #{_lambda_.7} parent=11 // pred_check
        %p118 = pneg %p56
      $region14: #{_lambda_.7} parent=11 // pred_check_branch
        %120 = sbr.rel (%p118) target = $region16
      $region15: #{_lambda_.7} parent=11 // pred_region
        _
      $region16: #{_lambda_.7} parent=11 // pred_fallthru
        _
      // Predicated region
      $region17: #{_lambda_.7} parent=11 // pred_check
        %p121 = pneg %p77
      $region18: #{_lambda_.7} parent=11 // pred_check_branch
        %123 = sbr.rel (%p121) target = $region20
      $region19: #{_lambda_.7} parent=11 // pred_region
        _
      $region20: #{_lambda_.7} parent=11 // pred_fallthru
        _
    $region12: #{_lambda_.7} parent=5 // pred_fallthru
      _
    %p124 = scmp.lt.s32.totalorder %s9, 2
    // Predicated region
    $region21: #{_lambda_.7} parent=5 // pred_check
      %p125 = pneg %p124
    $region22: #{_lambda_.7} parent=5 // pred_check_branch
      %127 = sbr.rel (%p125) target = $region24
    $region23: #{_lambda_.7} parent=5 // pred_region
      // Predicated region
      $region25: #{_lambda_.7} parent=23 // pred_check
        %p128 = pneg %p29
      $region26: #{_lambda_.7} parent=23 // pred_check_branch
        %130 = sbr.rel (%p128) target = $region28
      $region27: #{_lambda_.7} parent=23 // pred_region
        %s131 = smul.u32 4, %s9
        %p132 = scmp.lt.s32.totalorder %s131, 7
        %s133 = scalar_select %p132, %s131, 7
        %s134 = smul.addr %s133, 8
        %s135 = smul.addr %s134, 4
        %s136 = scalar_lea.vmem %s0, %s135
        %s137 = smul.u32 4, %s9
      $region28: #{_lambda_.7} parent=23 // pred_fallthru
        _
    $region24: #{_lambda_.7} parent=5 // pred_fallthru
      _
    %p138 = scmp.le.s32.totalorder 1, %s9
    %p139 = scmp.lt.s32.totalorder %s9, 3
    %p140 = pnand %p138, %p139
    %p141 = pneg %p140
    // Predicated region
    $region29: #{_lambda_.7} parent=5 // pred_check
      _
    $region30: #{_lambda_.7} parent=5 // pred_check_branch
      %143 = sbr.rel (%p140) target = $region32
    $region31: #{_lambda_.7} parent=5 // pred_region
      %s144 = ssub.s32 %s9, 1
      %s145 = smul.u32 4, %s14
      %p146 = scmp.lt.s32.totalorder %s145, 7
      %s147 = scalar_select %p146, %s145, 7
      %s148 = smul.addr %s147, 8
      %s149 = smul.addr %s148, 4
      %s150 = scalar_lea.vmem %s0, %s149
      %p151 = pneg %p35
      %p152 = pneg %p32
      %p153 = pneg %p56
      %p154 = pneg %p53
      %p155 = pneg %p77
      %p156 = pneg %p74
      %p157 = pneg %p103
      %p158 = pneg %p100
      %s159 = smul.u32 4, %s14
      %p160 = scmp.lt.s32.totalorder %s159, 7
      %s161 = scalar_select %p160, %s159, 7
      %s162 = smul.addr %s161, 8
      %s163 = scalar_lea.vmem %s3, %s162
      %s164 = smul.u32 4, %s14
      %p165 = scmp.lt.s32.totalorder %s164, 7
      %s166 = scalar_select %p165, %s164, 7
      %s167 = smul.addr %s166, 8
      %s168 = smul.addr %s167, 4
      %s169 = scalar_lea.vmem %s0, %s168
      %s170 = smul.u32 4, %s14
      %s171 = smul.u32 4, %s14
      %p172 = scmp.lt.s32.totalorder %s171, 7
      %s173 = scalar_select %p172, %s171, 7
      %s174 = smul.addr %s173, 8
      %s175 = scalar_lea.vmem %s3, %s174
      %s176 = smul.u32 4, %s14
      %v178 = vld [vmem:[%s169] sm:$0xff]
      %v179 = vld [vmem:[%s169 + $0x8] sm:$0xff]
      %v180 = vld [vmem:[%s169 + $0x10] sm:$0xff]
      %v181 = vld [vmem:[%s169 + $0x18] sm:$0xff]
      %v182 = vld [vmem:[%s169 + $0x20] sm:$0xff]
      %v183 = vld [vmem:[%s169 + $0x28] sm:$0xff]
      %v184 = vld [vmem:[%s169 + $0x30] sm:$0xff]
      %v185 = vld [vmem:[%s169 + $0x38] sm:$0xff]
      %v186 = vld [vmem:[%s169 + $0x40] sm:$0xff]
      %v187 = vld [vmem:[%s169 + $0x48] sm:$0xff]
      %v188 = vld [vmem:[%s169 + $0x50] sm:$0xff]
      %v189 = vld [vmem:[%s169 + $0x58] sm:$0xff]
      %v190 = vld [vmem:[%s169 + $0x60] sm:$0xff]
      %v191 = vld [vmem:[%s169 + $0x68] sm:$0xff]
      %v192 = vld [vmem:[%s169 + $0x70] sm:$0xff]
      %v193 = vld [vmem:[%s169 + $0x78] sm:$0xff]
      %v194 = vld [vmem:[%s1] sm:$0xf]
      %v195 = vld [vmem:[%s1 + $0x4] sm:$0xf]
      %v196 = vld [vmem:[%s1 + $0x8] sm:$0xf]
      %v197 = vld [vmem:[%s1 + $0xc] sm:$0xf]
      %v198 = vld [vmem:[%s1 + $0x10] sm:$0xf]
      %v199 = vld [vmem:[%s1 + $0x14] sm:$0xf]
      %v200 = vld [vmem:[%s1 + $0x18] sm:$0xf]
      %v201 = vld [vmem:[%s1 + $0x1c] sm:$0xf]
      %v202 = vld [vmem:[%s1 + $0x20] sm:$0xf]
      %v203 = vld [vmem:[%s1 + $0x24] sm:$0xf]
      %v204 = vld [vmem:[%s1 + $0x28] sm:$0xf]
      %v205 = vld [vmem:[%s1 + $0x2c] sm:$0xf]
      %v206 = vld [vmem:[%s1 + $0x30] sm:$0xf]
      %v207 = vld [vmem:[%s1 + $0x34] sm:$0xf]
      %v208 = vld [vmem:[%s1 + $0x38] sm:$0xf]
      %v209 = vld [vmem:[%s1 + $0x3c] sm:$0xf]
      %v210 = vld [vmem:[%s1 + $0x40] sm:$0xf]
      %v211 = vld [vmem:[%s1 + $0x44] sm:$0xf]
      %v212 = vld [vmem:[%s1 + $0x48] sm:$0xf]
      %v213 = vld [vmem:[%s1 + $0x4c] sm:$0xf]
      %v214 = vld [vmem:[%s1 + $0x50] sm:$0xf]
      %v215 = vld [vmem:[%s1 + $0x54] sm:$0xf]
      %v216 = vld [vmem:[%s1 + $0x58] sm:$0xf]
      %v217 = vld [vmem:[%s1 + $0x5c] sm:$0xf]
      %v218 = vld [vmem:[%s1 + $0x60] sm:$0xf]
      %v219 = vld [vmem:[%s1 + $0x64] sm:$0xf]
      %v220 = vld [vmem:[%s1 + $0x68] sm:$0xf]
      %v221 = vld [vmem:[%s1 + $0x6c] sm:$0xf]
      %v222 = vld [vmem:[%s1 + $0x70] sm:$0xf]
      %v223 = vld [vmem:[%s1 + $0x74] sm:$0xf]
      %v224 = vld [vmem:[%s1 + $0x78] sm:$0xf]
      %v225 = vld [vmem:[%s1 + $0x7c] sm:$0xf]
      %v226 = vld [vmem:[%s1 + $0x80] sm:$0xf]
      %v227 = vld [vmem:[%s1 + $0x84] sm:$0xf]
      %v228 = vld [vmem:[%s1 + $0x88] sm:$0xf]
      %v229 = vld [vmem:[%s1 + $0x8c] sm:$0xf]
      %v230 = vld [vmem:[%s1 + $0x90] sm:$0xf]
      %v231 = vld [vmem:[%s1 + $0x94] sm:$0xf]
      %v232 = vld [vmem:[%s1 + $0x98] sm:$0xf]
      %v233 = vld [vmem:[%s1 + $0x9c] sm:$0xf]
      %v234 = vld [vmem:[%s1 + $0xa0] sm:$0xf]
      %v235 = vld [vmem:[%s1 + $0xa4] sm:$0xf]
      %v236 = vld [vmem:[%s1 + $0xa8] sm:$0xf]
      %v237 = vld [vmem:[%s1 + $0xac] sm:$0xf]
      %v238 = vld [vmem:[%s1 + $0xb0] sm:$0xf]
      %v239 = vld [vmem:[%s1 + $0xb4] sm:$0xf]
      %v240 = vld [vmem:[%s1 + $0xb8] sm:$0xf]
      %v241 = vld [vmem:[%s1 + $0xbc] sm:$0xf]
      %v242 = vld [vmem:[%s1 + $0xc0] sm:$0xf]
      %v243 = vld [vmem:[%s1 + $0xc4] sm:$0xf]
      %v244 = vld [vmem:[%s1 + $0xc8] sm:$0xf]
      %v245 = vld [vmem:[%s1 + $0xcc] sm:$0xf]
      %v246 = vld [vmem:[%s1 + $0xd0] sm:$0xf]
      %v247 = vld [vmem:[%s1 + $0xd4] sm:$0xf]
      %v248 = vld [vmem:[%s1 + $0xd8] sm:$0xf]
      %v249 = vld [vmem:[%s1 + $0xdc] sm:$0xf]
      %v250 = vld [vmem:[%s1 + $0xe0] sm:$0xf]
      %v251 = vld [vmem:[%s1 + $0xe4] sm:$0xf]
      %v252 = vld [vmem:[%s1 + $0xe8] sm:$0xf]
      %v253 = vld [vmem:[%s1 + $0xec] sm:$0xf]
      %v254 = vld [vmem:[%s1 + $0xf0] sm:$0xf]
      %v255 = vld [vmem:[%s1 + $0xf4] sm:$0xf]
      %v256 = vld [vmem:[%s1 + $0xf8] sm:$0xf]
      %v257 = vld [vmem:[%s1 + $0xfc] sm:$0xf]
      %v258 = vld [vmem:[%s1 + $0x100] sm:$0xf]
      %v259 = vld [vmem:[%s1 + $0x104] sm:$0xf]
      %v260 = vld [vmem:[%s1 + $0x108] sm:$0xf]
      %v261 = vld [vmem:[%s1 + $0x10c] sm:$0xf]
      %v262 = vld [vmem:[%s1 + $0x110] sm:$0xf]
      %v263 = vld [vmem:[%s1 + $0x114] sm:$0xf]
      %v264 = vld [vmem:[%s1 + $0x118] sm:$0xf]
      %v265 = vld [vmem:[%s1 + $0x11c] sm:$0xf]
      %v266 = vld [vmem:[%s1 + $0x120] sm:$0xf]
      %v267 = vld [vmem:[%s1 + $0x124] sm:$0xf]
      %v268 = vld [vmem:[%s1 + $0x128] sm:$0xf]
      %v269 = vld [vmem:[%s1 + $0x12c] sm:$0xf]
      %v270 = vld [vmem:[%s1 + $0x130] sm:$0xf]
      %v271 = vld [vmem:[%s1 + $0x134] sm:$0xf]
      %v272 = vld [vmem:[%s1 + $0x138] sm:$0xf]
      %v273 = vld [vmem:[%s1 + $0x13c] sm:$0xf]
      %v274 = vld [vmem:[%s1 + $0x140] sm:$0xf]
      %v275 = vld [vmem:[%s1 + $0x144] sm:$0xf]
      %v276 = vld [vmem:[%s1 + $0x148] sm:$0xf]
      %v277 = vld [vmem:[%s1 + $0x14c] sm:$0xf]
      %v278 = vld [vmem:[%s1 + $0x150] sm:$0xf]
      %v279 = vld [vmem:[%s1 + $0x154] sm:$0xf]
      %v280 = vld [vmem:[%s1 + $0x158] sm:$0xf]
      %v281 = vld [vmem:[%s1 + $0x15c] sm:$0xf]
      %v282 = vld [vmem:[%s1 + $0x160] sm:$0xf]
      %v283 = vld [vmem:[%s1 + $0x164] sm:$0xf]
      %v284 = vld [vmem:[%s1 + $0x168] sm:$0xf]
      %v285 = vld [vmem:[%s1 + $0x16c] sm:$0xf]
      %v286 = vld [vmem:[%s1 + $0x170] sm:$0xf]
      %v287 = vld [vmem:[%s1 + $0x174] sm:$0xf]
      %v288 = vld [vmem:[%s1 + $0x178] sm:$0xf]
      %v289 = vld [vmem:[%s1 + $0x17c] sm:$0xf]
      %v290 = vld [vmem:[%s1 + $0x180] sm:$0xf]
      %v291 = vld [vmem:[%s1 + $0x184] sm:$0xf]
      %v292 = vld [vmem:[%s1 + $0x188] sm:$0xf]
      %v293 = vld [vmem:[%s1 + $0x18c] sm:$0xf]
      %v294 = vld [vmem:[%s1 + $0x190] sm:$0xf]
      %v295 = vld [vmem:[%s1 + $0x194] sm:$0xf]
      %v296 = vld [vmem:[%s1 + $0x198] sm:$0xf]
      %v297 = vld [vmem:[%s1 + $0x19c] sm:$0xf]
      %v298 = vld [vmem:[%s1 + $0x1a0] sm:$0xf]
      %v299 = vld [vmem:[%s1 + $0x1a4] sm:$0xf]
      %v300 = vld [vmem:[%s1 + $0x1a8] sm:$0xf]
      %v301 = vld [vmem:[%s1 + $0x1ac] sm:$0xf]
      %v302 = vld [vmem:[%s1 + $0x1b0] sm:$0xf]
      %v303 = vld [vmem:[%s1 + $0x1b4] sm:$0xf]
      %v304 = vld [vmem:[%s1 + $0x1b8] sm:$0xf]
      %v305 = vld [vmem:[%s1 + $0x1bc] sm:$0xf]
      %v306 = vld [vmem:[%s1 + $0x1c0] sm:$0xf]
      %v307 = vld [vmem:[%s1 + $0x1c4] sm:$0xf]
      %v308 = vld [vmem:[%s1 + $0x1c8] sm:$0xf]
      %v309 = vld [vmem:[%s1 + $0x1cc] sm:$0xf]
      %v310 = vld [vmem:[%s1 + $0x1d0] sm:$0xf]
      %v311 = vld [vmem:[%s1 + $0x1d4] sm:$0xf]
      %v312 = vld [vmem:[%s1 + $0x1d8] sm:$0xf]
      %v313 = vld [vmem:[%s1 + $0x1dc] sm:$0xf]
      %v314 = vld [vmem:[%s1 + $0x1e0] sm:$0xf]
      %v315 = vld [vmem:[%s1 + $0x1e4] sm:$0xf]
      %v316 = vld [vmem:[%s1 + $0x1e8] sm:$0xf]
      %v317 = vld [vmem:[%s1 + $0x1ec] sm:$0xf]
      %v318 = vld [vmem:[%s1 + $0x1f0] sm:$0xf]
      %v319 = vld [vmem:[%s1 + $0x1f4] sm:$0xf]
      %v320 = vld [vmem:[%s1 + $0x1f8] sm:$0xf]
      %v321 = vld [vmem:[%s1 + $0x1fc] sm:$0xf]
      %v322 = vld [vmem:[%s2] sm:$0x1]
      %v324 = vlaneseq
      %v325 = vshrl.u32 %v324, 7
      %v326 = vsub.s32 0, %v325
      %v327 = vrot.slane %v322, %v326
      %v345 = vunpack.c.l.b16 %v178
      %v346 = vunpack.c.h.b16 %v178
      %v347 = vunpack.c.l.b16 %v179
      %v348 = vunpack.c.h.b16 %v179
      %v349 = vunpack.c.l.b16 %v180
      %v350 = vunpack.c.h.b16 %v180
      %v351 = vunpack.c.l.b16 %v181
      %v352 = vunpack.c.h.b16 %v181
      %v353 = vunpack.c.l.b16 %v182
      %v354 = vunpack.c.h.b16 %v182
      %v355 = vunpack.c.l.b16 %v183
      %v356 = vunpack.c.h.b16 %v183
      %v357 = vunpack.c.l.b16 %v184
      %v358 = vunpack.c.h.b16 %v184
      %v359 = vunpack.c.l.b16 %v185
      %v360 = vunpack.c.h.b16 %v185
      %v361 = vunpack.c.l.b16 %v186
      %v362 = vunpack.c.h.b16 %v186
      %v363 = vunpack.c.l.b16 %v187
      %v364 = vunpack.c.h.b16 %v187
      %v365 = vunpack.c.l.b16 %v188
      %v366 = vunpack.c.h.b16 %v188
      %v367 = vunpack.c.l.b16 %v189
      %v368 = vunpack.c.h.b16 %v189
      %v369 = vunpack.c.l.b16 %v190
      %v370 = vunpack.c.h.b16 %v190
      %v371 = vunpack.c.l.b16 %v191
      %v372 = vunpack.c.h.b16 %v191
      %v373 = vunpack.c.l.b16 %v192
      %v374 = vunpack.c.h.b16 %v192
      %v375 = vunpack.c.l.b16 %v193
      %v376 = vunpack.c.h.b16 %v193
      %v377 = vpack.c.b16 %v353, %v345
      %v378 = vpack.c.b16 %v354, %v346
      %v379 = vpack.c.b16 %v355, %v347
      %v380 = vpack.c.b16 %v356, %v348
      %v381 = vpack.c.b16 %v357, %v349
      %v382 = vpack.c.b16 %v358, %v350
      %v383 = vpack.c.b16 %v359, %v351
      %v384 = vpack.c.b16 %v360, %v352
      %v385 = vpack.c.b16 %v369, %v361
      %v386 = vpack.c.b16 %v370, %v362
      %v387 = vpack.c.b16 %v371, %v363
      %v388 = vpack.c.b16 %v372, %v364
      %v389 = vpack.c.b16 %v373, %v365
      %v390 = vpack.c.b16 %v374, %v366
      %v391 = vpack.c.b16 %v375, %v367
      %v392 = vpack.c.b16 %v376, %v368
      %v537 = vunpack.c.l.b16 %v194
      %v538 = vunpack.c.l.b16 %v195
      %v539 = vunpack.c.l.b16 %v196
      %v540 = vunpack.c.l.b16 %v197
      %v541 = vunpack.c.l.b16 %v198
      %v542 = vunpack.c.l.b16 %v199
      %v543 = vunpack.c.l.b16 %v200
      %v544 = vunpack.c.l.b16 %v201
      %v545 = vunpack.c.l.b16 %v202
      %v546 = vunpack.c.l.b16 %v203
      %v547 = vunpack.c.l.b16 %v204
      %v548 = vunpack.c.l.b16 %v205
      %v549 = vunpack.c.l.b16 %v206
      %v550 = vunpack.c.l.b16 %v207
      %v551 = vunpack.c.l.b16 %v208
      %v552 = vunpack.c.l.b16 %v209
      %v553 = vunpack.c.l.b16 %v210
      %v554 = vunpack.c.l.b16 %v211
      %v555 = vunpack.c.l.b16 %v212
      %v556 = vunpack.c.l.b16 %v213
      %v557 = vunpack.c.l.b16 %v214
      %v558 = vunpack.c.l.b16 %v215
      %v559 = vunpack.c.l.b16 %v216
      %v560 = vunpack.c.l.b16 %v217
      %v561 = vunpack.c.l.b16 %v218
      %v562 = vunpack.c.l.b16 %v219
      %v563 = vunpack.c.l.b16 %v220
      %v564 = vunpack.c.l.b16 %v221
      %v565 = vunpack.c.l.b16 %v222
      %v566 = vunpack.c.l.b16 %v223
      %v567 = vunpack.c.l.b16 %v224
      %v568 = vunpack.c.l.b16 %v225
      %v569 = vunpack.c.l.b16 %v226
      %v570 = vunpack.c.l.b16 %v227
      %v571 = vunpack.c.l.b16 %v228
      %v572 = vunpack.c.l.b16 %v229
      %v573 = vunpack.c.l.b16 %v230
      %v574 = vunpack.c.l.b16 %v231
      %v575 = vunpack.c.l.b16 %v232
      %v576 = vunpack.c.l.b16 %v233
      %v577 = vunpack.c.l.b16 %v234
      %v578 = vunpack.c.l.b16 %v235
      %v579 = vunpack.c.l.b16 %v236
      %v580 = vunpack.c.l.b16 %v237
      %v581 = vunpack.c.l.b16 %v238
      %v582 = vunpack.c.l.b16 %v239
      %v583 = vunpack.c.l.b16 %v240
      %v584 = vunpack.c.l.b16 %v241
      %v585 = vunpack.c.l.b16 %v242
      %v586 = vunpack.c.l.b16 %v243
      %v587 = vunpack.c.l.b16 %v244
      %v588 = vunpack.c.l.b16 %v245
      %v589 = vunpack.c.l.b16 %v246
      %v590 = vunpack.c.l.b16 %v247
      %v591 = vunpack.c.l.b16 %v248
      %v592 = vunpack.c.l.b16 %v249
      %v593 = vunpack.c.l.b16 %v250
      %v594 = vunpack.c.l.b16 %v251
      %v595 = vunpack.c.l.b16 %v252
      %v596 = vunpack.c.l.b16 %v253
      %v597 = vunpack.c.l.b16 %v254
      %v598 = vunpack.c.l.b16 %v255
      %v599 = vunpack.c.l.b16 %v256
      %v600 = vunpack.c.l.b16 %v257
      %v601 = vunpack.c.l.b16 %v258
      %v602 = vunpack.c.l.b16 %v259
      %v603 = vunpack.c.l.b16 %v260
      %v604 = vunpack.c.l.b16 %v261
      %v605 = vunpack.c.l.b16 %v262
      %v606 = vunpack.c.l.b16 %v263
      %v607 = vunpack.c.l.b16 %v264
      %v608 = vunpack.c.l.b16 %v265
      %v609 = vunpack.c.l.b16 %v266
      %v610 = vunpack.c.l.b16 %v267
      %v611 = vunpack.c.l.b16 %v268
      %v612 = vunpack.c.l.b16 %v269
      %v613 = vunpack.c.l.b16 %v270
      %v614 = vunpack.c.l.b16 %v271
      %v615 = vunpack.c.l.b16 %v272
      %v616 = vunpack.c.l.b16 %v273
      %v617 = vunpack.c.l.b16 %v274
      %v618 = vunpack.c.l.b16 %v275
      %v619 = vunpack.c.l.b16 %v276
      %v620 = vunpack.c.l.b16 %v277
      %v621 = vunpack.c.l.b16 %v278
      %v622 = vunpack.c.l.b16 %v279
      %v623 = vunpack.c.l.b16 %v280
      %v624 = vunpack.c.l.b16 %v281
      %v625 = vunpack.c.l.b16 %v282
      %v626 = vunpack.c.l.b16 %v283
      %v627 = vunpack.c.l.b16 %v284
      %v628 = vunpack.c.l.b16 %v285
      %v629 = vunpack.c.l.b16 %v286
      %v630 = vunpack.c.l.b16 %v287
      %v631 = vunpack.c.l.b16 %v288
      %v632 = vunpack.c.l.b16 %v289
      %v633 = vunpack.c.l.b16 %v290
      %v634 = vunpack.c.l.b16 %v291
      %v635 = vunpack.c.l.b16 %v292
      %v636 = vunpack.c.l.b16 %v293
      %v637 = vunpack.c.l.b16 %v294
      %v638 = vunpack.c.l.b16 %v295
      %v639 = vunpack.c.l.b16 %v296
      %v640 = vunpack.c.l.b16 %v297
      %v641 = vunpack.c.l.b16 %v298
      %v642 = vunpack.c.l.b16 %v299
      %v643 = vunpack.c.l.b16 %v300
      %v644 = vunpack.c.l.b16 %v301
      %v645 = vunpack.c.l.b16 %v302
      %v646 = vunpack.c.l.b16 %v303
      %v647 = vunpack.c.l.b16 %v304
      %v648 = vunpack.c.l.b16 %v305
      %v649 = vunpack.c.l.b16 %v306
      %v650 = vunpack.c.l.b16 %v307
      %v651 = vunpack.c.l.b16 %v308
      %v652 = vunpack.c.l.b16 %v309
      %v653 = vunpack.c.l.b16 %v310
      %v654 = vunpack.c.l.b16 %v311
      %v655 = vunpack.c.l.b16 %v312
      %v656 = vunpack.c.l.b16 %v313
      %v657 = vunpack.c.l.b16 %v314
      %v658 = vunpack.c.l.b16 %v315
      %v659 = vunpack.c.l.b16 %v316
      %v660 = vunpack.c.l.b16 %v317
      %v661 = vunpack.c.l.b16 %v318
      %v662 = vunpack.c.l.b16 %v319
      %v663 = vunpack.c.l.b16 %v320
      %v664 = vunpack.c.l.b16 %v321
      %v665 = vpack.c.b16 %v538, %v537
      %v666 = vpack.c.b16 %v540, %v539
      %v667 = vpack.c.b16 %v542, %v541
      %v668 = vpack.c.b16 %v544, %v543
      %v669 = vpack.c.b16 %v546, %v545
      %v670 = vpack.c.b16 %v548, %v547
      %v671 = vpack.c.b16 %v550, %v549
      %v672 = vpack.c.b16 %v552, %v551
      %v673 = vpack.c.b16 %v554, %v553
      %v674 = vpack.c.b16 %v556, %v555
      %v675 = vpack.c.b16 %v558, %v557
      %v676 = vpack.c.b16 %v560, %v559
      %v677 = vpack.c.b16 %v562, %v561
      %v678 = vpack.c.b16 %v564, %v563
      %v679 = vpack.c.b16 %v566, %v565
      %v680 = vpack.c.b16 %v568, %v567
      %v681 = vpack.c.b16 %v570, %v569
      %v682 = vpack.c.b16 %v572, %v571
      %v683 = vpack.c.b16 %v574, %v573
      %v684 = vpack.c.b16 %v576, %v575
      %v685 = vpack.c.b16 %v578, %v577
      %v686 = vpack.c.b16 %v580, %v579
      %v687 = vpack.c.b16 %v582, %v581
      %v688 = vpack.c.b16 %v584, %v583
      %v689 = vpack.c.b16 %v586, %v585
      %v690 = vpack.c.b16 %v588, %v587
      %v691 = vpack.c.b16 %v590, %v589
      %v692 = vpack.c.b16 %v592, %v591
      %v693 = vpack.c.b16 %v594, %v593
      %v694 = vpack.c.b16 %v596, %v595
      %v695 = vpack.c.b16 %v598, %v597
      %v696 = vpack.c.b16 %v600, %v599
      %v697 = vpack.c.b16 %v602, %v601
      %v698 = vpack.c.b16 %v604, %v603
      %v699 = vpack.c.b16 %v606, %v605
      %v700 = vpack.c.b16 %v608, %v607
      %v701 = vpack.c.b16 %v610, %v609
      %v702 = vpack.c.b16 %v612, %v611
      %v703 = vpack.c.b16 %v614, %v613
      %v704 = vpack.c.b16 %v616, %v615
      %v705 = vpack.c.b16 %v618, %v617
      %v706 = vpack.c.b16 %v620, %v619
      %v707 = vpack.c.b16 %v622, %v621
      %v708 = vpack.c.b16 %v624, %v623
      %v709 = vpack.c.b16 %v626, %v625
      %v710 = vpack.c.b16 %v628, %v627
      %v711 = vpack.c.b16 %v630, %v629
      %v712 = vpack.c.b16 %v632, %v631
      %v713 = vpack.c.b16 %v634, %v633
      %v714 = vpack.c.b16 %v636, %v635
      %v715 = vpack.c.b16 %v638, %v637
      %v716 = vpack.c.b16 %v640, %v639
      %v717 = vpack.c.b16 %v642, %v641
      %v718 = vpack.c.b16 %v644, %v643
      %v719 = vpack.c.b16 %v646, %v645
      %v720 = vpack.c.b16 %v648, %v647
      %v721 = vpack.c.b16 %v650, %v649
      %v722 = vpack.c.b16 %v652, %v651
      %v723 = vpack.c.b16 %v654, %v653
      %v724 = vpack.c.b16 %v656, %v655
      %v725 = vpack.c.b16 %v658, %v657
      %v726 = vpack.c.b16 %v660, %v659
      %v727 = vpack.c.b16 %v662, %v661
      %v728 = vpack.c.b16 %v664, %v663
      %793 = vmatprep.subr.bf16.mxu0 0
      %794 = vmatpush1.bf16.msra.mxu0 %v665
      %795 = vmatprep.subr.bf16.mxu0 0
      %796 = vmatpush1.bf16.msra.mxu0 %v666
      %797 = vmatprep.subr.bf16.mxu0 0
      %798 = vmatpush1.bf16.msra.mxu0 %v667
      %799 = vmatprep.subr.bf16.mxu0 0
      %800 = vmatpush1.bf16.msra.mxu0 %v668
      %801 = vmatprep.subr.bf16.mxu0 0
      %802 = vmatpush1.bf16.msra.mxu0 %v669
      %803 = vmatprep.subr.bf16.mxu0 0
      %804 = vmatpush1.bf16.msra.mxu0 %v670
      %805 = vmatprep.subr.bf16.mxu0 0
      %806 = vmatpush1.bf16.msra.mxu0 %v671
      %807 = vmatprep.subr.bf16.mxu0 0
      %808 = vmatpush1.bf16.msra.mxu0 %v672
      %809 = vmatprep.subr.bf16.mxu0 0
      %810 = vmatpush1.bf16.msra.mxu0 %v673
      %811 = vmatprep.subr.bf16.mxu0 0
      %812 = vmatpush1.bf16.msra.mxu0 %v674
      %813 = vmatprep.subr.bf16.mxu0 0
      %814 = vmatpush1.bf16.msra.mxu0 %v675
      %815 = vmatprep.subr.bf16.mxu0 0
      %816 = vmatpush1.bf16.msra.mxu0 %v676
      %817 = vmatprep.subr.bf16.mxu0 0
      %818 = vmatpush1.bf16.msra.mxu0 %v677
      %819 = vmatprep.subr.bf16.mxu0 0
      %820 = vmatpush1.bf16.msra.mxu0 %v678
      %821 = vmatprep.subr.bf16.mxu0 0
      %822 = vmatpush1.bf16.msra.mxu0 %v679
      %823 = vmatprep.subr.bf16.mxu0 0
      %824 = vmatpush1.bf16.msra.mxu0 %v680
      %825 = vmatprep.mubr.bf16.mxu0 %v378
      %826 = vmatmul.mubr.bf16.gmra.mrb[0].mxu0 %v377
      %v827 = vpop.f32.mrb[0].mxu0
      %v828 = vadd.f32 %v327, %v827
      %v829 = vpop.f32.mrb[0].mxu0
      %v830 = vpop.f32.mrb[0].mxu0
      %v831 = vadd.f32 %v327, %v830
      %v832 = vpop.f32.mrb[0].mxu0
      %833 = vmatprep.mubr.bf16.mxu0 %v386
      %834 = vmatmul.mubr.bf16.gmra.mrb[0].mxu0 %v385
      %v835 = vpop.f32.mrb[0].mxu0
      %v836 = vadd.f32 %v327, %v835
      %v837 = vpop.f32.mrb[0].mxu0
      %v838 = vpop.f32.mrb[0].mxu0
      %v839 = vadd.f32 %v327, %v838
      %v840 = vpop.f32.mrb[0].mxu0
      %841 = vdwg.mxu0
      %842 = vmatprep.subr.bf16.mxu0 0
      %843 = vmatpush1.bf16.msra.mxu0 %v681
      %844 = vmatprep.subr.bf16.mxu0 0
      %845 = vmatpush1.bf16.msra.mxu0 %v682
      %846 = vmatprep.subr.bf16.mxu0 0
      %847 = vmatpush1.bf16.msra.mxu0 %v683
      %848 = vmatprep.subr.bf16.mxu0 0
      %849 = vmatpush1.bf16.msra.mxu0 %v684
      %850 = vmatprep.subr.bf16.mxu0 0
      %851 = vmatpush1.bf16.msra.mxu0 %v685
      %852 = vmatprep.subr.bf16.mxu0 0
      %853 = vmatpush1.bf16.msra.mxu0 %v686
      %854 = vmatprep.subr.bf16.mxu0 0
      %855 = vmatpush1.bf16.msra.mxu0 %v687
      %856 = vmatprep.subr.bf16.mxu0 0
      %857 = vmatpush1.bf16.msra.mxu0 %v688
      %858 = vmatprep.subr.bf16.mxu0 0
      %859 = vmatpush1.bf16.msra.mxu0 %v689
      %860 = vmatprep.subr.bf16.mxu0 0
      %861 = vmatpush1.bf16.msra.mxu0 %v690
      %862 = vmatprep.subr.bf16.mxu0 0
      %863 = vmatpush1.bf16.msra.mxu0 %v691
      %864 = vmatprep.subr.bf16.mxu0 0
      %865 = vmatpush1.bf16.msra.mxu0 %v692
      %866 = vmatprep.subr.bf16.mxu0 0
      %867 = vmatpush1.bf16.msra.mxu0 %v693
      %868 = vmatprep.subr.bf16.mxu0 0
      %869 = vmatpush1.bf16.msra.mxu0 %v694
      %870 = vmatprep.subr.bf16.mxu0 0
      %871 = vmatpush1.bf16.msra.mxu0 %v695
      %872 = vmatprep.subr.bf16.mxu0 0
      %873 = vmatpush1.bf16.msra.mxu0 %v696
      %874 = vmatprep.mubr.bf16.mxu0 %v380
      %875 = vmatmul.mubr.bf16.gmra.mrb[0].mxu0 %v379
      %v876 = vpop.f32.mrb[0].mxu0
      %v877 = vadd.f32 %v828, %v876
      %v878 = vpop.f32.mrb[0].mxu0
      %v879 = vpop.f32.mrb[0].mxu0
      %v880 = vadd.f32 %v831, %v879
      %v881 = vpop.f32.mrb[0].mxu0
      %882 = vmatprep.mubr.bf16.mxu0 %v388
      %883 = vmatmul.mubr.bf16.gmra.mrb[0].mxu0 %v387
      %v884 = vpop.f32.mrb[0].mxu0
      %v885 = vadd.f32 %v836, %v884
      %v886 = vpop.f32.mrb[0].mxu0
      %v887 = vpop.f32.mrb[0].mxu0
      %v888 = vadd.f32 %v839, %v887
      %v889 = vpop.f32.mrb[0].mxu0
      %890 = vdwg.mxu0
      %891 = vmatprep.subr.bf16.mxu0 0
      %892 = vmatpush1.bf16.msra.mxu0 %v697
      %893 = vmatprep.subr.bf16.mxu0 0
      %894 = vmatpush1.bf16.msra.mxu0 %v698
      %895 = vmatprep.subr.bf16.mxu0 0
      %896 = vmatpush1.bf16.msra.mxu0 %v699
      %897 = vmatprep.subr.bf16.mxu0 0
      %898 = vmatpush1.bf16.msra.mxu0 %v700
      %899 = vmatprep.subr.bf16.mxu0 0
      %900 = vmatpush1.bf16.msra.mxu0 %v701
      %901 = vmatprep.subr.bf16.mxu0 0
      %902 = vmatpush1.bf16.msra.mxu0 %v702
      %903 = vmatprep.subr.bf16.mxu0 0
      %904 = vmatpush1.bf16.msra.mxu0 %v703
      %905 = vmatprep.subr.bf16.mxu0 0
      %906 = vmatpush1.bf16.msra.mxu0 %v704
      %907 = vmatprep.subr.bf16.mxu0 0
      %908 = vmatpush1.bf16.msra.mxu0 %v705
      %909 = vmatprep.subr.bf16.mxu0 0
      %910 = vmatpush1.bf16.msra.mxu0 %v706
      %911 = vmatprep.subr.bf16.mxu0 0
      %912 = vmatpush1.bf16.msra.mxu0 %v707
      %913 = vmatprep.subr.bf16.mxu0 0
      %914 = vmatpush1.bf16.msra.mxu0 %v708
      %915 = vmatprep.subr.bf16.mxu0 0
      %916 = vmatpush1.bf16.msra.mxu0 %v709
      %917 = vmatprep.subr.bf16.mxu0 0
      %918 = vmatpush1.bf16.msra.mxu0 %v710
      %919 = vmatprep.subr.bf16.mxu0 0
      %920 = vmatpush1.bf16.msra.mxu0 %v711
      %921 = vmatprep.subr.bf16.mxu0 0
      %922 = vmatpush1.bf16.msra.mxu0 %v712
      %923 = vmatprep.mubr.bf16.mxu0 %v382
      %924 = vmatmul.mubr.bf16.gmra.mrb[0].mxu0 %v381
      %v925 = vpop.f32.mrb[0].mxu0
      %v926 = vadd.f32 %v877, %v925
      %v927 = vpop.f32.mrb[0].mxu0
      %v928 = vpop.f32.mrb[0].mxu0
      %v929 = vadd.f32 %v880, %v928
      %v930 = vpop.f32.mrb[0].mxu0
      %931 = vmatprep.mubr.bf16.mxu0 %v390
      %932 = vmatmul.mubr.bf16.gmra.mrb[0].mxu0 %v389
      %v933 = vpop.f32.mrb[0].mxu0
      %v934 = vadd.f32 %v885, %v933
      %v935 = vpop.f32.mrb[0].mxu0
      %v936 = vpop.f32.mrb[0].mxu0
      %v937 = vadd.f32 %v888, %v936
      %v938 = vpop.f32.mrb[0].mxu0
      %939 = vdwg.mxu0
      %940 = vmatprep.subr.bf16.mxu0 0
      %941 = vmatpush1.bf16.msra.mxu0 %v713
      %942 = vmatprep.subr.bf16.mxu0 0
      %943 = vmatpush1.bf16.msra.mxu0 %v714
      %944 = vmatprep.subr.bf16.mxu0 0
      %945 = vmatpush1.bf16.msra.mxu0 %v715
      %946 = vmatprep.subr.bf16.mxu0 0
      %947 = vmatpush1.bf16.msra.mxu0 %v716
      %948 = vmatprep.subr.bf16.mxu0 0
      %949 = vmatpush1.bf16.msra.mxu0 %v717
      %950 = vmatprep.subr.bf16.mxu0 0
      %951 = vmatpush1.bf16.msra.mxu0 %v718
      %952 = vmatprep.subr.bf16.mxu0 0
      %953 = vmatpush1.bf16.msra.mxu0 %v719
      %954 = vmatprep.subr.bf16.mxu0 0
      %955 = vmatpush1.bf16.msra.mxu0 %v720
      %956 = vmatprep.subr.bf16.mxu0 0
      %957 = vmatpush1.bf16.msra.mxu0 %v721
      %958 = vmatprep.subr.bf16.mxu0 0
      %959 = vmatpush1.bf16.msra.mxu0 %v722
      %960 = vmatprep.subr.bf16.mxu0 0
      %961 = vmatpush1.bf16.msra.mxu0 %v723
      %962 = vmatprep.subr.bf16.mxu0 0
      %963 = vmatpush1.bf16.msra.mxu0 %v724
      %964 = vmatprep.subr.bf16.mxu0 0
      %965 = vmatpush1.bf16.msra.mxu0 %v725
      %966 = vmatprep.subr.bf16.mxu0 0
      %967 = vmatpush1.bf16.msra.mxu0 %v726
      %968 = vmatprep.subr.bf16.mxu0 0
      %969 = vmatpush1.bf16.msra.mxu0 %v727
      %970 = vmatprep.subr.bf16.mxu0 0
      %971 = vmatpush1.bf16.msra.mxu0 %v728
      %972 = vmatprep.mubr.bf16.mxu0 %v384
      %973 = vmatmul.mubr.bf16.gmra.mrb[0].mxu0 %v383
      %v974 = vpop.f32.mrb[0].mxu0
      %v975 = vadd.f32 %v926, %v974
      %v976 = vpop.f32.mrb[0].mxu0
      %v977 = vpop.f32.mrb[0].mxu0
      %v978 = vadd.f32 %v929, %v977
      %v979 = vpop.f32.mrb[0].mxu0
      %980 = vmatprep.mubr.bf16.mxu0 %v392
      %981 = vmatmul.mubr.bf16.gmra.mrb[0].mxu0 %v391
      %v982 = vpop.f32.mrb[0].mxu0
      %v983 = vadd.f32 %v934, %v982
      %v984 = vpop.f32.mrb[0].mxu0
      %v985 = vpop.f32.mrb[0].mxu0
      %v986 = vadd.f32 %v937, %v985
      %v987 = vpop.f32.mrb[0].mxu0
      %988 = vdwg.mxu0
      %989 = vst [vmem:[%s175] sm:$0xff] %v975
      %990 = vst [vmem:[%s175 + $0x8] sm:$0xff] %v978
      %991 = vst [vmem:[%s175 + $0x10] sm:$0xff] %v983
      %992 = vst [vmem:[%s175 + $0x18] sm:$0xff] %v986
      %s993 = smul.u32 4, %s14
      %p994 = scmp.lt.s32.totalorder %s993, 7
      %s995 = scalar_select %p994, %s993, 7
      %s996 = smul.addr %s995, 8
      %s997 = scalar_lea.vmem %s3, %s996
      // Predicated region
      $region33: #{_lambda_.7} parent=31 // pred_check
        %p998 = pneg %p100
      $region34: #{_lambda_.7} parent=31 // pred_check_branch
        %1000 = sbr.rel (%p998) target = $region36
      $region35: #{_lambda_.7} parent=31 // pred_region
        %s1001 = smul.u32 4, %s14
      $region36: #{_lambda_.7} parent=31 // pred_fallthru
        _
    $region32: #{_lambda_.7} parent=5 // pred_fallthru
      _
    %p1002 = scmp.le.s32.totalorder 2, %s9
    // Predicated region
    $region37: #{_lambda_.7} parent=5 // pred_check
      %p1003 = pneg %p1002
    $region38: #{_lambda_.7} parent=5 // pred_check_branch
      %1005 = sbr.rel (%p1003) target = $region40
    $region39: #{_lambda_.7} parent=5 // pred_region
      %s1006 = ssub.s32 %s9, 2
      // Predicated region
      $region41: #{_lambda_.7} parent=39 // pred_check
        %p1007 = pneg %p106
      $region42: #{_lambda_.7} parent=39 // pred_check_branch
        %1009 = sbr.rel (%p1007) target = $region44
      $region43: #{_lambda_.7} parent=39 // pred_region
        %s1010 = smul.u32 4, %s15
        %p1011 = scmp.lt.s32.totalorder %s1010, 7
        %s1012 = scalar_select %p1011, %s1010, 7
        %s1013 = smul.addr %s1012, 8
        %s1014 = scalar_lea.vmem %s3, %s1013
      $region44: #{_lambda_.7} parent=39 // pred_fallthru
        _
    $region40: #{_lambda_.7} parent=5 // pred_fallthru
      _
  $region6: #{_lambda_.7} parent=0 // loop_footer
    %s13 = sadd.s32 1, %s9
  $region7: #{_lambda_.7} parent=0 // loop_footer_branch
    %8 = sbr.rel target = $region3
  $region8: #{_lambda_.7} parent=0 // loop_exit
    _

</llo_original>
